<compile_context>
chip_gen: v7x
topology: tpu7x:2x2x1
jax: 0.10.0
libtpu: 0.0.40
codegen_flags: <defaults>
</compile_context>

<pallas_src>
import functools

import jax
import jax.numpy as jnp
from jax.experimental import pallas as pl
from jax.experimental.pallas import tpu as pltpu


def _round_up(v, m):
    return (v + m - 1) // m * m


def _cdiv(a, b):
    return -(-a // b)


def _tpu_config():
    """Best-effort generation / VMEM detection (never raises)."""
    kind = ""
    try:
        kind = jax.devices()[0].device_kind.lower()
    except Exception:
        pass
    is_v7 = ("v7" in kind) or ("7x" in kind)
    is_v6 = "v6" in kind
    is_v5e = ("v5 lite" in kind) or ("v5e" in kind) or ("v5litepod" in kind)
    vmem_cap = None
    try:
        vmem_cap = int(pltpu.get_tpu_info().vmem_capacity_bytes)
    except Exception:
        vmem_cap = None
    if not vmem_cap or vmem_cap <= 0:
        vmem_cap = (64 if is_v7 else 128) * (1 << 20)
    return kind, vmem_cap, is_v5e, is_v6, is_v7


def _choose_tc(T, tc_budget):
    """Prefer an exact divisor of T (mask-free static loop); otherwise use the
    budgeted chunk with tail masking (still a static trip count)."""
    tc_budget = max(1, min(T, int(tc_budget)))
    best = 1
    for d in range(1, tc_budget + 1):
        if T % d == 0:
            best = d
    if best * 2 >= tc_budget:
        return best, False
    return tc_budget, True


def _lstm_recurrence_kernel(xp_ref, whh_ref, bias_ref, wfc_ref, bfc_ref,
                            out_ref, h_ref, c_ref, *,
                            hp, t_total, t_chunk, mask_tail, gate_dtype,
                            unroll):
    """Grid = (batch_blocks, time_chunks); time chunks run sequentially."""
    c_idx = pl.program_id(1)
    n_chunks = pl.num_programs(1)

    # init_hidden(): zero h/c at the first time chunk of each batch block.
    @pl.when(c_idx == 0)
    def _():
        h_ref[...] = jnp.zeros_like(h_ref)
        c_ref[...] = jnp.zeros_like(c_ref)

    bias = bias_ref[...]          # (1, 4Hp) f32, hoisted out of the loop
    w_hh = whh_ref[...]           # (Hp, 4Hp), resident in VMEM

    def step(t, carry):
        h, c = carry
        # x_proj holds x_t @ W_ih^T (bf16); bias added here in f32.
        gates = (xp_ref[t].astype(jnp.float32) + bias
                 + jnp.dot(h.astype(w_hh.dtype), w_hh,
                           preferred_element_type=jnp.float32))
        g = gates.astype(gate_dtype)
        # PyTorch LSTMCell gate order: i, f, g, o (each a full 128*k lane tile).
        i_g = jax.nn.sigmoid(g[:, 0 * hp:1 * hp])
        f_g = jax.nn.sigmoid(g[:, 1 * hp:2 * hp])
        g_g = jnp.tanh(g[:, 2 * hp:3 * hp])
        o_g = jax.nn.sigmoid(g[:, 3 * hp:4 * hp])
        # c stays f32 (carried state); transcendentals run in gate_dtype.
        c_new = (f_g * c + i_g * g_g).astype(jnp.float32)
        h_new = (o_g * jnp.tanh(c_new.astype(gate_dtype))).astype(jnp.float32)
        if mask_tail:
            valid = (c_idx * t_chunk + t) < t_total
            h_new = jnp.where(valid, h_new, h)
            c_new = jnp.where(valid, c_new, c)
        return h_new, c_new

    h_fin, c_fin = jax.lax.fori_loop(0, t_chunk, step,
                                     (h_ref[...], c_ref[...]), unroll=unroll)
    h_ref[...] = h_fin
    c_ref[...] = c_fin

    # After the last time chunk: dropout (eval -> identity), fc1, sigmoid.
    @pl.when(c_idx == n_chunks - 1)
    def _():
        # N=1 output -> VPU multiply + lane reduction (skip an MXU pass).
        logit = jnp.sum(h_fin * wfc_ref[...], axis=-1, keepdims=True)
        logit = logit + bfc_ref[0, 0]
        out_ref[...] = jax.nn.sigmoid(logit).astype(out_ref.dtype)


def _pack_params(params, hp, matmul_dtype):
    """Gate-major, H-padded weight packing. Padding is zero so the padded
    hidden/cell lanes stay exactly 0 through the recurrence."""
    w_ih, w_hh = params["w_ih"], params["w_hh"]            # (4H, D), (4H, H)
    b = params["b_ih"] + params["b_hh"]                    # (4H,)
    w_fc, b_fc = params["w_fc"], params["b_fc"]            # (1, H), (1,)
    H = w_hh.shape[1]
    pad_h = hp - H

    def gate_pad_t(w):  # (4H, K) -> (K, 4*hp): each gate owns a full hp lanes
        k = w.shape[1]
        w4 = w.reshape(4, H, k)
        w4 = jnp.pad(w4, ((0, 0), (0, pad_h), (0, 0)))
        return jnp.transpose(w4, (2, 0, 1)).reshape(k, 4 * hp)

    w_ih_t = gate_pad_t(w_ih).astype(matmul_dtype)                       # (D, 4Hp)
    w_hh_t = gate_pad_t(w_hh)                                            # (H, 4Hp)
    w_hh_t = jnp.pad(w_hh_t, ((0, pad_h), (0, 0))).astype(matmul_dtype)  # (Hp, 4Hp)
    bias = jnp.pad(b.reshape(4, H), ((0, 0), (0, pad_h)))
    bias = bias.reshape(1, 4 * hp).astype(jnp.float32)                   # (1, 4Hp)
    w_fc_row = jnp.pad(w_fc, ((0, 0), (0, pad_h))).astype(jnp.float32)   # (1, Hp)
    b_fc = b_fc.reshape(1, 1).astype(jnp.float32)                        # (1, 1)
    return w_ih_t, w_hh_t, bias, w_fc_row, b_fc


def lstm_classifier_forward(x, params, *, matmul_dtype=None, gate_dtype=None,
                            time_chunk=None, batch_block=None):
    """x: (B, T, D) float32.  Returns (B, 1) float32 = sigmoid(fc1(h_T))."""
    B, T, D = x.shape
    H = params["w_hh"].shape[1]
    Hp = _round_up(H, 128)          # lane-pad hidden dim -> full-tile gates
    G = 4 * Hp

    _, vmem_cap, _is_v5e, is_v6, is_v7 = _tpu_config()

    # dtype policy per generation (review items 1, 6..9).
    if matmul_dtype is None:
        matmul_dtype = jnp.bfloat16                  # MXU operands (all gens)
    if gate_dtype is None:
        gate_dtype = jnp.bfloat16 if (is_v6 or is_v7) else jnp.float32
    xp_dtype = (jnp.bfloat16
                if jnp.dtype(matmul_dtype) == jnp.dtype(jnp.bfloat16)
                else jnp.float32)

    # Batch tiling (review: nb>=2 on v7x, Bb=256 on v6e for big B).
    Bp8 = _round_up(B, 8)
    if batch_block is not None:
        Bb = int(batch_block)
    elif is_v7:
        half = _round_up(_cdiv(Bp8, 2), 8)
        Bb = max(8, min(half, 256 if B >= 512 else 128))
    elif is_v6 and B >= 256:
        Bb = 256
    else:
        Bb = min(128, Bp8)
    assert Bb % 8 == 0
    nb = _cdiv(Bp8, Bb)
    Bp = nb * Bb

    # Generation-aware VMEM budget for the x_proj time chunk.
    xp_item = jnp.dtype(xp_dtype).itemsize
    w_item = jnp.dtype(matmul_dtype).itemsize
    usable = max(8 << 20, vmem_cap - (8 << 20))          # leave headroom
    fixed = (2 * Hp * G * w_item                         # W_hh (worst: 2 bufs)
             + 2 * (G + Hp) * 4                          # bias + fc row
             + 2 * Bb * Hp * 4                           # h/c scratch
             + 2 * Bb * 4                                # output block
             + (1 << 20))                                # compiler temporaries
    per_block = min(8 << 20, max(0, usable - fixed) // 2)
    step_bytes = Bb * G * xp_item
    if time_chunk is None:
        tc_budget = per_block // step_bytes if step_bytes else T
        tc_budget = max(tc_budget, min(T, 4))            # degenerate-Tc guard
        Tc, mask_tail = _choose_tc(T, tc_budget)
    else:
        Tc = max(1, min(T, int(time_chunk)))
        mask_tail = (T % Tc) != 0
    nc = _cdiv(T, Tc)
    Tp = nc * Tc

    need = fixed + 2 * Tc * step_bytes
    vmem_limit = max(need + (4 << 20), 32 << 20)
    vmem_limit = int(min(vmem_limit, vmem_cap - (2 << 20)))
    vmem_limit = max(vmem_limit, 16 << 20)

    # Unroll: cap at 2 for wide batch tiles (vreg pressure), deeper otherwise.
    if Tc <= 4:
        unroll = True
    elif Bb >= 64:
        unroll = 2
    else:
        unroll = min(8, Tc)

    w_ih_t, w_hh_t, bias, w_fc_row, b_fc = _pack_params(params, Hp, matmul_dtype)

    # Hoisted input projection, built directly time-major: tiny (B,T,D)
    # transpose + flat matmul; result stored in bf16 (no f32 bias fold).
    x_t = jnp.transpose(x, (1, 0, 2))
    x_t = jnp.pad(x_t, ((0, Tp - T), (0, Bp - B), (0, 0))).astype(matmul_dtype)
    x_proj = jnp.dot(x_t.reshape(Tp * Bp, D), w_ih_t,
                     preferred_element_type=jnp.float32)
    x_proj = x_proj.reshape(Tp, Bp, G).astype(xp_dtype)

    kernel = functools.partial(_lstm_recurrence_kernel, hp=Hp, t_total=T,
                               t_chunk=Tc, mask_tail=mask_tail,
                               gate_dtype=gate_dtype, unroll=unroll)

    def _call(single_buffer_consts):
        const_kw = ({"pipeline_mode": pl.Buffered(1)}
                    if single_buffer_consts else {})
        grid_spec = pltpu.PrefetchScalarGridSpec(
            num_scalar_prefetch=0,
            grid=(nb, nc),
            in_specs=[
                pl.BlockSpec((Tc, Bb, G), lambda b, c: (c, b, 0)),   # x_proj
                pl.BlockSpec((Hp, G), lambda b, c: (0, 0), **const_kw),   # W_hh^T
                pl.BlockSpec((1, G), lambda b, c: (0, 0), **const_kw),    # gate bias
                pl.BlockSpec((1, Hp), lambda b, c: (0, 0), **const_kw),   # fc row
                pl.BlockSpec(memory_space=pltpu.MemorySpace.SMEM),        # fc bias
            ],
            out_specs=pl.BlockSpec((Bb, 1), lambda b, c: (b, 0)),
            scratch_shapes=[
                pltpu.VMEM((Bb, Hp), jnp.float32),   # hidden state
                pltpu.VMEM((Bb, Hp), jnp.float32),   # cell state
            ],
        )
        return pl.pallas_call(
            kernel,
            out_shape=jax.ShapeDtypeStruct((Bp, 1), jnp.float32),
            grid_spec=grid_spec,
            compiler_params=pltpu.CompilerParams(
                dimension_semantics=("parallel", "arbitrary"),
                vmem_limit_bytes=vmem_limit,
            ),
        )(x_proj, w_hh_t, bias, w_fc_row, b_fc)

    try:
        out = _call(True)
    except Exception:
        # pipeline_mode=Buffered(1) not supported on this jax build; fall back
        # to default double-buffered constant blocks.
        out = _call(False)
    return out[:B]


def init_params(key, input_dim, hidden_dim):
    """Deterministic init mirroring PyTorch's LSTMCell/Linear uniform init."""
    ks = jax.random.split(key, 6)
    k_lstm = 1.0 / jnp.sqrt(hidden_dim)
    w_ih = jax.random.uniform(ks[0], (4 * hidden_dim, input_dim),
                              minval=-k_lstm, maxval=k_lstm, dtype=jnp.float32)
    w_hh = jax.random.uniform(ks[1], (4 * hidden_dim, hidden_dim),
                              minval=-k_lstm, maxval=k_lstm, dtype=jnp.float32)
    b_ih = jax.random.uniform(ks[2], (4 * hidden_dim,),
                              minval=-k_lstm, maxval=k_lstm, dtype=jnp.float32)
    b_hh = jax.random.uniform(ks[3], (4 * hidden_dim,),
                              minval=-k_lstm, maxval=k_lstm, dtype=jnp.float32)
    w_fc = jax.random.uniform(ks[4], (1, hidden_dim),
                              minval=-k_lstm, maxval=k_lstm, dtype=jnp.float32)
    b_fc = jax.random.uniform(ks[5], (1,),
                              minval=-k_lstm, maxval=k_lstm, dtype=jnp.float32)
    return {"w_ih": w_ih, "w_hh": w_hh, "b_ih": b_ih, "b_hh": b_hh,
            "w_fc": w_fc, "b_fc": b_fc}


def reference_forward(x, params):
    """Pure-JAX reference matching the PyTorch forward (f32)."""
    w_ih, w_hh = params["w_ih"], params["w_hh"]
    b = params["b_ih"] + params["b_hh"]
    H = w_hh.shape[1]
    B = x.shape[0]

    def step(carry, x_t):
        h, c = carry
        gates = x_t @ w_ih.T + h @ w_hh.T + b
        i = jax.nn.sigmoid(gates[:, 0 * H:1 * H])
        f = jax.nn.sigmoid(gates[:, 1 * H:2 * H])
        g = jnp.tanh(gates[:, 2 * H:3 * H])
        o = jax.nn.sigmoid(gates[:, 3 * H:4 * H])
        c = f * c + i * g
        h = o * jnp.tanh(c)
        return (h, c), None

    h0 = jnp.zeros((B, H), jnp.float32)
    (h, _), _ = jax.lax.scan(step, (h0, h0), jnp.transpose(x, (1, 0, 2)))
    return jax.nn.sigmoid(h @ params["w_fc"].T + params["b_fc"])


if __name__ == "__main__":
    B, T, D, H = 4, 8, 16, 32
    key = jax.random.PRNGKey(0)
    kx, kp = jax.random.split(key)
    x = jax.random.normal(kx, (B, T, D), dtype=jnp.float32)
    params = init_params(kp, D, H)

    ref = jax.block_until_ready(reference_forward(x, params))

    # Numerically faithful f32 path.
    out_f32 = jax.block_until_ready(
        lstm_classifier_forward(x, params, matmul_dtype=jnp.float32,
                                gate_dtype=jnp.float32))
    assert out_f32.shape == (B, 1) and out_f32.dtype == jnp.float32
    assert jnp.allclose(out_f32, ref, atol=2e-2), (out_f32, ref)

    # Ragged-T path (Tc does not divide T -> static loop + tail masking).
    out_rag = jax.block_until_ready(
        lstm_classifier_forward(x, params, matmul_dtype=jnp.float32,
                                gate_dtype=jnp.float32, time_chunk=3))
    assert jnp.allclose(out_rag, ref, atol=2e-2), (out_rag, ref)

    # Auto path: bf16 x_proj / MXU operands; bf16 gate math on v6e/v7x.
    out_auto = jax.block_until_ready(lstm_classifier_forward(x, params))
    assert out_auto.shape == (B, 1)
    assert bool(jnp.all(jnp.isfinite(out_auto)))
    assert jnp.allclose(out_auto, ref, atol=5e-2), (out_auto, ref)

    print("KERNEL_OK")
</pallas_src>

<mosaic_0001>
module attributes {stable_mosaic.version = 11 : i64} {
  func.func @_lstm_recurrence_kernel(%arg0: i32, %arg1: i32, %arg2: memref<8x8x512xf32, #tpu.memory_space<vmem>>, %arg3: memref<128x512xf32, #tpu.memory_space<vmem>>, %arg4: memref<1x512xf32, #tpu.memory_space<vmem>>, %arg5: memref<1x128xf32, #tpu.memory_space<vmem>>, %arg6: memref<1x1xf32, #tpu.memory_space<smem>>, %arg7: memref<8x1xf32, #tpu.memory_space<vmem>>, %arg8: memref<8x128xf32, #tpu.memory_space<vmem>>, %arg9: memref<8x128xf32, #tpu.memory_space<vmem>>) attributes {dimension_semantics = [#tpu.dimension_semantics<parallel>, #tpu.dimension_semantics<arbitrary>], iteration_bounds = array<i64: 1, 1>, scalar_prefetch = 0 : i64, scratch_operands = 2 : i64, tpu.core_type = #tpu.core_type<tc>, window_params = [{transform_indices = @transform_0, window_bounds = array<i64: 8, 8, 512>}, {pipeline_mode = #tpu.pipeline_mode<synchronous>, transform_indices = @transform_1, window_bounds = array<i64: 128, 512>}, {pipeline_mode = #tpu.pipeline_mode<synchronous>, transform_indices = @transform_2, window_bounds = array<i64: 1, 512>}, {pipeline_mode = #tpu.pipeline_mode<synchronous>, transform_indices = @transform_3, window_bounds = array<i64: 1, 128>}, {transform_indices = @transform_4, window_bounds = array<i64: 1, 1>}, {transform_indices = @transform_5, window_bounds = array<i64: 8, 1>}]} {
    %c0_i32 = arith.constant 0 : i32
    %0 = arith.cmpi eq, %arg1, %c0_i32 : i32
    %1 = arith.extui %0 : i1 to i32
    %c0_i32_0 = arith.constant 0 : i32
    %2 = arith.cmpi ne, %1, %c0_i32_0 : i32
    scf.if %2 {
      %cst_62 = arith.constant 0.000000e+00 : f32
      %268 = vector.broadcast %cst_62 : f32 to vector<8x128xf32>
      %c0_63 = arith.constant 0 : index
      %c0_64 = arith.constant 0 : index
      %269 = vector.load %arg8[%c0_63, %c0_64] : memref<8x128xf32, #tpu.memory_space<vmem>>, vector<8x128xf32>
      tpu.vector_store %arg8[%c0_63, %c0_64], %268 {strides = array<i32>} : memref<8x128xf32, #tpu.memory_space<vmem>>, vector<8x128xf32>,
      %cst_65 = arith.constant 0.000000e+00 : f32
      %270 = vector.broadcast %cst_65 : f32 to vector<8x128xf32>
      %c0_66 = arith.constant 0 : index
      %c0_67 = arith.constant 0 : index
      %271 = vector.load %arg9[%c0_66, %c0_67] : memref<8x128xf32, #tpu.memory_space<vmem>>, vector<8x128xf32>
      tpu.vector_store %arg9[%c0_66, %c0_67], %270 {strides = array<i32>} : memref<8x128xf32, #tpu.memory_space<vmem>>, vector<8x128xf32>,
    } else {
    }
    %c0 = arith.constant 0 : index
    %c0_1 = arith.constant 0 : index
    %3 = vector.load %arg4[%c0, %c0_1] : memref<1x512xf32, #tpu.memory_space<vmem>>, vector<1x512xf32>
    %c0_2 = arith.constant 0 : index
    %c0_3 = arith.constant 0 : index
    %4 = vector.load %arg3[%c0_2, %c0_3] : memref<128x512xf32, #tpu.memory_space<vmem>>, vector<128x512xf32>
    %c0_4 = arith.constant 0 : index
    %c0_5 = arith.constant 0 : index
    %5 = vector.load %arg8[%c0_4, %c0_5] : memref<8x128xf32, #tpu.memory_space<vmem>>, vector<8x128xf32>
    %c0_6 = arith.constant 0 : index
    %c0_7 = arith.constant 0 : index
    %6 = vector.load %arg9[%c0_6, %c0_7] : memref<8x128xf32, #tpu.memory_space<vmem>>, vector<8x128xf32>
    %c0_i32_8 = arith.constant 0 : i32
    %7 = arith.index_cast %c0_i32_8 : i32 to index
    %c0_9 = arith.constant 0 : index
    %c0_10 = arith.constant 0 : index
    %8 = vector.load %arg2[%7, %c0_9, %c0_10] : memref<8x8x512xf32, #tpu.memory_space<vmem>>, vector<1x8x512xf32>
    %9 = vector.shape_cast %8 : vector<1x8x512xf32> to vector<8x512xf32>
    %10 = vector.broadcast %3 : vector<1x512xf32> to vector<8x512xf32>
    %11 = arith.addf %9, %10 : vector<8x512xf32>
    %cst = arith.constant dense<0.000000e+00> : vector<8x512xf32>
    %12 = tpu.matmul %5, %4, %cst {dimension_numbers = #tpu.dot_dimension_numbers<[1], [0], [0], [1], [0, 0, 1, 1], [], []>} : vector<8x128xf32>, vector<128x512xf32>, vector<8x512xf32> -> vector<8x512xf32>
    %13 = arith.addf %11, %12 : vector<8x512xf32>
    %14 = vector.extract_strided_slice %13 {offsets = [0, 0], sizes = [8, 128], strides = [1, 1]} : vector<8x512xf32> to vector<8x128xf32>
    %15 = arith.negf %14 : vector<8x128xf32>
    %16 = math.exp %15 : vector<8x128xf32>
    %cst_11 = arith.constant 1.000000e+00 : f32
    %17 = vector.broadcast %cst_11 : f32 to vector<8x128xf32>
    %18 = arith.addf %17, %16 : vector<8x128xf32>
    %19 = arith.divf %17, %18 : vector<8x128xf32>
    %20 = vector.extract_strided_slice %13 {offsets = [0, 128], sizes = [8, 128], strides = [1, 1]} : vector<8x512xf32> to vector<8x128xf32>
    %21 = arith.negf %20 : vector<8x128xf32>
    %22 = math.exp %21 : vector<8x128xf32>
    %cst_12 = arith.constant 1.000000e+00 : f32
    %23 = vector.broadcast %cst_12 : f32 to vector<8x128xf32>
    %24 = arith.addf %23, %22 : vector<8x128xf32>
    %25 = arith.divf %23, %24 : vector<8x128xf32>
    %26 = vector.extract_strided_slice %13 {offsets = [0, 256], sizes = [8, 128], strides = [1, 1]} : vector<8x512xf32> to vector<8x128xf32>
    %27 = math.tanh %26 : vector<8x128xf32>
    %28 = vector.extract_strided_slice %13 {offsets = [0, 384], sizes = [8, 128], strides = [1, 1]} : vector<8x512xf32> to vector<8x128xf32>
    %29 = arith.negf %28 : vector<8x128xf32>
    %30 = math.exp %29 : vector<8x128xf32>
    %cst_13 = arith.constant 1.000000e+00 : f32
    %31 = vector.broadcast %cst_13 : f32 to vector<8x128xf32>
    %32 = arith.addf %31, %30 : vector<8x128xf32>
    %33 = arith.divf %31, %32 : vector<8x128xf32>
    %34 = arith.mulf %25, %6 : vector<8x128xf32>
    %35 = arith.mulf %19, %27 : vector<8x128xf32>
    %36 = arith.addf %34, %35 : vector<8x128xf32>
    %37 = math.tanh %36 : vector<8x128xf32>
    %38 = arith.mulf %33, %37 : vector<8x128xf32>
    %c1_i32 = arith.constant 1 : i32
    %39 = arith.index_cast %c1_i32 : i32 to index
    %c0_14 = arith.constant 0 : index
    %c0_15 = arith.constant 0 : index
    %40 = vector.load %arg2[%39, %c0_14, %c0_15] : memref<8x8x512xf32, #tpu.memory_space<vmem>>, vector<1x8x512xf32>
    %41 = vector.shape_cast %40 : vector<1x8x512xf32> to vector<8x512xf32>
    %42 = vector.broadcast %3 : vector<1x512xf32> to vector<8x512xf32>
    %43 = arith.addf %41, %42 : vector<8x512xf32>
    %cst_16 = arith.constant dense<0.000000e+00> : vector<8x512xf32>
    %44 = tpu.matmul %38, %4, %cst_16 {dimension_numbers = #tpu.dot_dimension_numbers<[1], [0], [0], [1], [0, 0, 1, 1], [], []>} : vector<8x128xf32>, vector<128x512xf32>, vector<8x512xf32> -> vector<8x512xf32>
    %45 = arith.addf %43, %44 : vector<8x512xf32>
    %46 = vector.extract_strided_slice %45 {offsets = [0, 0], sizes = [8, 128], strides = [1, 1]} : vector<8x512xf32> to vector<8x128xf32>
    %47 = arith.negf %46 : vector<8x128xf32>
    %48 = math.exp %47 : vector<8x128xf32>
    %cst_17 = arith.constant 1.000000e+00 : f32
    %49 = vector.broadcast %cst_17 : f32 to vector<8x128xf32>
    %50 = arith.addf %49, %48 : vector<8x128xf32>
    %51 = arith.divf %49, %50 : vector<8x128xf32>
    %52 = vector.extract_strided_slice %45 {offsets = [0, 128], sizes = [8, 128], strides = [1, 1]} : vector<8x512xf32> to vector<8x128xf32>
    %53 = arith.negf %52 : vector<8x128xf32>
    %54 = math.exp %53 : vector<8x128xf32>
    %cst_18 = arith.constant 1.000000e+00 : f32
    %55 = vector.broadcast %cst_18 : f32 to vector<8x128xf32>
    %56 = arith.addf %55, %54 : vector<8x128xf32>
    %57 = arith.divf %55, %56 : vector<8x128xf32>
    %58 = vector.extract_strided_slice %45 {offsets = [0, 256], sizes = [8, 128], strides = [1, 1]} : vector<8x512xf32> to vector<8x128xf32>
    %59 = math.tanh %58 : vector<8x128xf32>
    %60 = vector.extract_strided_slice %45 {offsets = [0, 384], sizes = [8, 128], strides = [1, 1]} : vector<8x512xf32> to vector<8x128xf32>
    %61 = arith.negf %60 : vector<8x128xf32>
    %62 = math.exp %61 : vector<8x128xf32>
    %cst_19 = arith.constant 1.000000e+00 : f32
    %63 = vector.broadcast %cst_19 : f32 to vector<8x128xf32>
    %64 = arith.addf %63, %62 : vector<8x128xf32>
    %65 = arith.divf %63, %64 : vector<8x128xf32>
    %66 = arith.mulf %57, %36 : vector<8x128xf32>
    %67 = arith.mulf %51, %59 : vector<8x128xf32>
    %68 = arith.addf %66, %67 : vector<8x128xf32>
    %69 = math.tanh %68 : vector<8x128xf32>
    %70 = arith.mulf %65, %69 : vector<8x128xf32>
    %c2_i32 = arith.constant 2 : i32
    %71 = arith.index_cast %c2_i32 : i32 to index
    %c0_20 = arith.constant 0 : index
    %c0_21 = arith.constant 0 : index
    %72 = vector.load %arg2[%71, %c0_20, %c0_21] : memref<8x8x512xf32, #tpu.memory_space<vmem>>, vector<1x8x512xf32>
    %73 = vector.shape_cast %72 : vector<1x8x512xf32> to vector<8x512xf32>
    %74 = vector.broadcast %3 : vector<1x512xf32> to vector<8x512xf32>
    %75 = arith.addf %73, %74 : vector<8x512xf32>
    %cst_22 = arith.constant dense<0.000000e+00> : vector<8x512xf32>
    %76 = tpu.matmul %70, %4, %cst_22 {dimension_numbers = #tpu.dot_dimension_numbers<[1], [0], [0], [1], [0, 0, 1, 1], [], []>} : vector<8x128xf32>, vector<128x512xf32>, vector<8x512xf32> -> vector<8x512xf32>
    %77 = arith.addf %75, %76 : vector<8x512xf32>
    %78 = vector.extract_strided_slice %77 {offsets = [0, 0], sizes = [8, 128], strides = [1, 1]} : vector<8x512xf32> to vector<8x128xf32>
    %79 = arith.negf %78 : vector<8x128xf32>
    %80 = math.exp %79 : vector<8x128xf32>
    %cst_23 = arith.constant 1.000000e+00 : f32
    %81 = vector.broadcast %cst_23 : f32 to vector<8x128xf32>
    %82 = arith.addf %81, %80 : vector<8x128xf32>
    %83 = arith.divf %81, %82 : vector<8x128xf32>
    %84 = vector.extract_strided_slice %77 {offsets = [0, 128], sizes = [8, 128], strides = [1, 1]} : vector<8x512xf32> to vector<8x128xf32>
    %85 = arith.negf %84 : vector<8x128xf32>
    %86 = math.exp %85 : vector<8x128xf32>
    %cst_24 = arith.constant 1.000000e+00 : f32
    %87 = vector.broadcast %cst_24 : f32 to vector<8x128xf32>
    %88 = arith.addf %87, %86 : vector<8x128xf32>
    %89 = arith.divf %87, %88 : vector<8x128xf32>
    %90 = vector.extract_strided_slice %77 {offsets = [0, 256], sizes = [8, 128], strides = [1, 1]} : vector<8x512xf32> to vector<8x128xf32>
    %91 = math.tanh %90 : vector<8x128xf32>
    %92 = vector.extract_strided_slice %77 {offsets = [0, 384], sizes = [8, 128], strides = [1, 1]} : vector<8x512xf32> to vector<8x128xf32>
    %93 = arith.negf %92 : vector<8x128xf32>
    %94 = math.exp %93 : vector<8x128xf32>
    %cst_25 = arith.constant 1.000000e+00 : f32
    %95 = vector.broadcast %cst_25 : f32 to vector<8x128xf32>
    %96 = arith.addf %95, %94 : vector<8x128xf32>
    %97 = arith.divf %95, %96 : vector<8x128xf32>
    %98 = arith.mulf %89, %68 : vector<8x128xf32>
    %99 = arith.mulf %83, %91 : vector<8x128xf32>
    %100 = arith.addf %98, %99 : vector<8x128xf32>
    %101 = math.tanh %100 : vector<8x128xf32>
    %102 = arith.mulf %97, %101 : vector<8x128xf32>
    %c3_i32 = arith.constant 3 : i32
    %103 = arith.index_cast %c3_i32 : i32 to index
    %c0_26 = arith.constant 0 : index
    %c0_27 = arith.constant 0 : index
    %104 = vector.load %arg2[%103, %c0_26, %c0_27] : memref<8x8x512xf32, #tpu.memory_space<vmem>>, vector<1x8x512xf32>
    %105 = vector.shape_cast %104 : vector<1x8x512xf32> to vector<8x512xf32>
    %106 = vector.broadcast %3 : vector<1x512xf32> to vector<8x512xf32>
    %107 = arith.addf %105, %106 : vector<8x512xf32>
    %cst_28 = arith.constant dense<0.000000e+00> : vector<8x512xf32>
    %108 = tpu.matmul %102, %4, %cst_28 {dimension_numbers = #tpu.dot_dimension_numbers<[1], [0], [0], [1], [0, 0, 1, 1], [], []>} : vector<8x128xf32>, vector<128x512xf32>, vector<8x512xf32> -> vector<8x512xf32>
    %109 = arith.addf %107, %108 : vector<8x512xf32>
    %110 = vector.extract_strided_slice %109 {offsets = [0, 0], sizes = [8, 128], strides = [1, 1]} : vector<8x512xf32> to vector<8x128xf32>
    %111 = arith.negf %110 : vector<8x128xf32>
    %112 = math.exp %111 : vector<8x128xf32>
    %cst_29 = arith.constant 1.000000e+00 : f32
    %113 = vector.broadcast %cst_29 : f32 to vector<8x128xf32>
    %114 = arith.addf %113, %112 : vector<8x128xf32>
    %115 = arith.divf %113, %114 : vector<8x128xf32>
    %116 = vector.extract_strided_slice %109 {offsets = [0, 128], sizes = [8, 128], strides = [1, 1]} : vector<8x512xf32> to vector<8x128xf32>
    %117 = arith.negf %116 : vector<8x128xf32>
    %118 = math.exp %117 : vector<8x128xf32>
    %cst_30 = arith.constant 1.000000e+00 : f32
    %119 = vector.broadcast %cst_30 : f32 to vector<8x128xf32>
    %120 = arith.addf %119, %118 : vector<8x128xf32>
    %121 = arith.divf %119, %120 : vector<8x128xf32>
    %122 = vector.extract_strided_slice %109 {offsets = [0, 256], sizes = [8, 128], strides = [1, 1]} : vector<8x512xf32> to vector<8x128xf32>
    %123 = math.tanh %122 : vector<8x128xf32>
    %124 = vector.extract_strided_slice %109 {offsets = [0, 384], sizes = [8, 128], strides = [1, 1]} : vector<8x512xf32> to vector<8x128xf32>
    %125 = arith.negf %124 : vector<8x128xf32>
    %126 = math.exp %125 : vector<8x128xf32>
    %cst_31 = arith.constant 1.000000e+00 : f32
    %127 = vector.broadcast %cst_31 : f32 to vector<8x128xf32>
    %128 = arith.addf %127, %126 : vector<8x128xf32>
    %129 = arith.divf %127, %128 : vector<8x128xf32>
    %130 = arith.mulf %121, %100 : vector<8x128xf32>
    %131 = arith.mulf %115, %123 : vector<8x128xf32>
    %132 = arith.addf %130, %131 : vector<8x128xf32>
    %133 = math.tanh %132 : vector<8x128xf32>
    %134 = arith.mulf %129, %133 : vector<8x128xf32>
    %c4_i32 = arith.constant 4 : i32
    %135 = arith.index_cast %c4_i32 : i32 to index
    %c0_32 = arith.constant 0 : index
    %c0_33 = arith.constant 0 : index
    %136 = vector.load %arg2[%135, %c0_32, %c0_33] : memref<8x8x512xf32, #tpu.memory_space<vmem>>, vector<1x8x512xf32>
    %137 = vector.shape_cast %136 : vector<1x8x512xf32> to vector<8x512xf32>
    %138 = vector.broadcast %3 : vector<1x512xf32> to vector<8x512xf32>
    %139 = arith.addf %137, %138 : vector<8x512xf32>
    %cst_34 = arith.constant dense<0.000000e+00> : vector<8x512xf32>
    %140 = tpu.matmul %134, %4, %cst_34 {dimension_numbers = #tpu.dot_dimension_numbers<[1], [0], [0], [1], [0, 0, 1, 1], [], []>} : vector<8x128xf32>, vector<128x512xf32>, vector<8x512xf32> -> vector<8x512xf32>
    %141 = arith.addf %139, %140 : vector<8x512xf32>
    %142 = vector.extract_strided_slice %141 {offsets = [0, 0], sizes = [8, 128], strides = [1, 1]} : vector<8x512xf32> to vector<8x128xf32>
    %143 = arith.negf %142 : vector<8x128xf32>
    %144 = math.exp %143 : vector<8x128xf32>
    %cst_35 = arith.constant 1.000000e+00 : f32
    %145 = vector.broadcast %cst_35 : f32 to vector<8x128xf32>
    %146 = arith.addf %145, %144 : vector<8x128xf32>
    %147 = arith.divf %145, %146 : vector<8x128xf32>
    %148 = vector.extract_strided_slice %141 {offsets = [0, 128], sizes = [8, 128], strides = [1, 1]} : vector<8x512xf32> to vector<8x128xf32>
    %149 = arith.negf %148 : vector<8x128xf32>
    %150 = math.exp %149 : vector<8x128xf32>
    %cst_36 = arith.constant 1.000000e+00 : f32
    %151 = vector.broadcast %cst_36 : f32 to vector<8x128xf32>
    %152 = arith.addf %151, %150 : vector<8x128xf32>
    %153 = arith.divf %151, %152 : vector<8x128xf32>
    %154 = vector.extract_strided_slice %141 {offsets = [0, 256], sizes = [8, 128], strides = [1, 1]} : vector<8x512xf32> to vector<8x128xf32>
    %155 = math.tanh %154 : vector<8x128xf32>
    %156 = vector.extract_strided_slice %141 {offsets = [0, 384], sizes = [8, 128], strides = [1, 1]} : vector<8x512xf32> to vector<8x128xf32>
    %157 = arith.negf %156 : vector<8x128xf32>
    %158 = math.exp %157 : vector<8x128xf32>
    %cst_37 = arith.constant 1.000000e+00 : f32
    %159 = vector.broadcast %cst_37 : f32 to vector<8x128xf32>
    %160 = arith.addf %159, %158 : vector<8x128xf32>
    %161 = arith.divf %159, %160 : vector<8x128xf32>
    %162 = arith.mulf %153, %132 : vector<8x128xf32>
    %163 = arith.mulf %147, %155 : vector<8x128xf32>
    %164 = arith.addf %162, %163 : vector<8x128xf32>
    %165 = math.tanh %164 : vector<8x128xf32>
    %166 = arith.mulf %161, %165 : vector<8x128xf32>
    %c5_i32 = arith.constant 5 : i32
    %167 = arith.index_cast %c5_i32 : i32 to index
    %c0_38 = arith.constant 0 : index
    %c0_39 = arith.constant 0 : index
    %168 = vector.load %arg2[%167, %c0_38, %c0_39] : memref<8x8x512xf32, #tpu.memory_space<vmem>>, vector<1x8x512xf32>
    %169 = vector.shape_cast %168 : vector<1x8x512xf32> to vector<8x512xf32>
    %170 = vector.broadcast %3 : vector<1x512xf32> to vector<8x512xf32>
    %171 = arith.addf %169, %170 : vector<8x512xf32>
    %cst_40 = arith.constant dense<0.000000e+00> : vector<8x512xf32>
    %172 = tpu.matmul %166, %4, %cst_40 {dimension_numbers = #tpu.dot_dimension_numbers<[1], [0], [0], [1], [0, 0, 1, 1], [], []>} : vector<8x128xf32>, vector<128x512xf32>, vector<8x512xf32> -> vector<8x512xf32>
    %173 = arith.addf %171, %172 : vector<8x512xf32>
    %174 = vector.extract_strided_slice %173 {offsets = [0, 0], sizes = [8, 128], strides = [1, 1]} : vector<8x512xf32> to vector<8x128xf32>
    %175 = arith.negf %174 : vector<8x128xf32>
    %176 = math.exp %175 : vector<8x128xf32>
    %cst_41 = arith.constant 1.000000e+00 : f32
    %177 = vector.broadcast %cst_41 : f32 to vector<8x128xf32>
    %178 = arith.addf %177, %176 : vector<8x128xf32>
    %179 = arith.divf %177, %178 : vector<8x128xf32>
    %180 = vector.extract_strided_slice %173 {offsets = [0, 128], sizes = [8, 128], strides = [1, 1]} : vector<8x512xf32> to vector<8x128xf32>
    %181 = arith.negf %180 : vector<8x128xf32>
    %182 = math.exp %181 : vector<8x128xf32>
    %cst_42 = arith.constant 1.000000e+00 : f32
    %183 = vector.broadcast %cst_42 : f32 to vector<8x128xf32>
    %184 = arith.addf %183, %182 : vector<8x128xf32>
    %185 = arith.divf %183, %184 : vector<8x128xf32>
    %186 = vector.extract_strided_slice %173 {offsets = [0, 256], sizes = [8, 128], strides = [1, 1]} : vector<8x512xf32> to vector<8x128xf32>
    %187 = math.tanh %186 : vector<8x128xf32>
    %188 = vector.extract_strided_slice %173 {offsets = [0, 384], sizes = [8, 128], strides = [1, 1]} : vector<8x512xf32> to vector<8x128xf32>
    %189 = arith.negf %188 : vector<8x128xf32>
    %190 = math.exp %189 : vector<8x128xf32>
    %cst_43 = arith.constant 1.000000e+00 : f32
    %191 = vector.broadcast %cst_43 : f32 to vector<8x128xf32>
    %192 = arith.addf %191, %190 : vector<8x128xf32>
    %193 = arith.divf %191, %192 : vector<8x128xf32>
    %194 = arith.mulf %185, %164 : vector<8x128xf32>
    %195 = arith.mulf %179, %187 : vector<8x128xf32>
    %196 = arith.addf %194, %195 : vector<8x128xf32>
    %197 = math.tanh %196 : vector<8x128xf32>
    %198 = arith.mulf %193, %197 : vector<8x128xf32>
    %c6_i32 = arith.constant 6 : i32
    %199 = arith.index_cast %c6_i32 : i32 to index
    %c0_44 = arith.constant 0 : index
    %c0_45 = arith.constant 0 : index
    %200 = vector.load %arg2[%199, %c0_44, %c0_45] : memref<8x8x512xf32, #tpu.memory_space<vmem>>, vector<1x8x512xf32>
    %201 = vector.shape_cast %200 : vector<1x8x512xf32> to vector<8x512xf32>
    %202 = vector.broadcast %3 : vector<1x512xf32> to vector<8x512xf32>
    %203 = arith.addf %201, %202 : vector<8x512xf32>
    %cst_46 = arith.constant dense<0.000000e+00> : vector<8x512xf32>
    %204 = tpu.matmul %198, %4, %cst_46 {dimension_numbers = #tpu.dot_dimension_numbers<[1], [0], [0], [1], [0, 0, 1, 1], [], []>} : vector<8x128xf32>, vector<128x512xf32>, vector<8x512xf32> -> vector<8x512xf32>
    %205 = arith.addf %203, %204 : vector<8x512xf32>
    %206 = vector.extract_strided_slice %205 {offsets = [0, 0], sizes = [8, 128], strides = [1, 1]} : vector<8x512xf32> to vector<8x128xf32>
    %207 = arith.negf %206 : vector<8x128xf32>
    %208 = math.exp %207 : vector<8x128xf32>
    %cst_47 = arith.constant 1.000000e+00 : f32
    %209 = vector.broadcast %cst_47 : f32 to vector<8x128xf32>
    %210 = arith.addf %209, %208 : vector<8x128xf32>
    %211 = arith.divf %209, %210 : vector<8x128xf32>
    %212 = vector.extract_strided_slice %205 {offsets = [0, 128], sizes = [8, 128], strides = [1, 1]} : vector<8x512xf32> to vector<8x128xf32>
    %213 = arith.negf %212 : vector<8x128xf32>
    %214 = math.exp %213 : vector<8x128xf32>
    %cst_48 = arith.constant 1.000000e+00 : f32
    %215 = vector.broadcast %cst_48 : f32 to vector<8x128xf32>
    %216 = arith.addf %215, %214 : vector<8x128xf32>
    %217 = arith.divf %215, %216 : vector<8x128xf32>
    %218 = vector.extract_strided_slice %205 {offsets = [0, 256], sizes = [8, 128], strides = [1, 1]} : vector<8x512xf32> to vector<8x128xf32>
    %219 = math.tanh %218 : vector<8x128xf32>
    %220 = vector.extract_strided_slice %205 {offsets = [0, 384], sizes = [8, 128], strides = [1, 1]} : vector<8x512xf32> to vector<8x128xf32>
    %221 = arith.negf %220 : vector<8x128xf32>
    %222 = math.exp %221 : vector<8x128xf32>
    %cst_49 = arith.constant 1.000000e+00 : f32
    %223 = vector.broadcast %cst_49 : f32 to vector<8x128xf32>
    %224 = arith.addf %223, %222 : vector<8x128xf32>
    %225 = arith.divf %223, %224 : vector<8x128xf32>
    %226 = arith.mulf %217, %196 : vector<8x128xf32>
    %227 = arith.mulf %211, %219 : vector<8x128xf32>
    %228 = arith.addf %226, %227 : vector<8x128xf32>
    %229 = math.tanh %228 : vector<8x128xf32>
    %230 = arith.mulf %225, %229 : vector<8x128xf32>
    %c7_i32 = arith.constant 7 : i32
    %231 = arith.index_cast %c7_i32 : i32 to index
    %c0_50 = arith.constant 0 : index
    %c0_51 = arith.constant 0 : index
    %232 = vector.load %arg2[%231, %c0_50, %c0_51] : memref<8x8x512xf32, #tpu.memory_space<vmem>>, vector<1x8x512xf32>
    %233 = vector.shape_cast %232 : vector<1x8x512xf32> to vector<8x512xf32>
    %234 = vector.broadcast %3 : vector<1x512xf32> to vector<8x512xf32>
    %235 = arith.addf %233, %234 : vector<8x512xf32>
    %cst_52 = arith.constant dense<0.000000e+00> : vector<8x512xf32>
    %236 = tpu.matmul %230, %4, %cst_52 {dimension_numbers = #tpu.dot_dimension_numbers<[1], [0], [0], [1], [0, 0, 1, 1], [], []>} : vector<8x128xf32>, vector<128x512xf32>, vector<8x512xf32> -> vector<8x512xf32>
    %237 = arith.addf %235, %236 : vector<8x512xf32>
    %238 = vector.extract_strided_slice %237 {offsets = [0, 0], sizes = [8, 128], strides = [1, 1]} : vector<8x512xf32> to vector<8x128xf32>
    %239 = arith.negf %238 : vector<8x128xf32>
    %240 = math.exp %239 : vector<8x128xf32>
    %cst_53 = arith.constant 1.000000e+00 : f32
    %241 = vector.broadcast %cst_53 : f32 to vector<8x128xf32>
    %242 = arith.addf %241, %240 : vector<8x128xf32>
    %243 = arith.divf %241, %242 : vector<8x128xf32>
    %244 = vector.extract_strided_slice %237 {offsets = [0, 128], sizes = [8, 128], strides = [1, 1]} : vector<8x512xf32> to vector<8x128xf32>
    %245 = arith.negf %244 : vector<8x128xf32>
    %246 = math.exp %245 : vector<8x128xf32>
    %cst_54 = arith.constant 1.000000e+00 : f32
    %247 = vector.broadcast %cst_54 : f32 to vector<8x128xf32>
    %248 = arith.addf %247, %246 : vector<8x128xf32>
    %249 = arith.divf %247, %248 : vector<8x128xf32>
    %250 = vector.extract_strided_slice %237 {offsets = [0, 256], sizes = [8, 128], strides = [1, 1]} : vector<8x512xf32> to vector<8x128xf32>
    %251 = math.tanh %250 : vector<8x128xf32>
    %252 = vector.extract_strided_slice %237 {offsets = [0, 384], sizes = [8, 128], strides = [1, 1]} : vector<8x512xf32> to vector<8x128xf32>
    %253 = arith.negf %252 : vector<8x128xf32>
    %254 = math.exp %253 : vector<8x128xf32>
    %cst_55 = arith.constant 1.000000e+00 : f32
    %255 = vector.broadcast %cst_55 : f32 to vector<8x128xf32>
    %256 = arith.addf %255, %254 : vector<8x128xf32>
    %257 = arith.divf %255, %256 : vector<8x128xf32>
    %258 = arith.mulf %249, %228 : vector<8x128xf32>
    %259 = arith.mulf %243, %251 : vector<8x128xf32>
    %260 = arith.addf %258, %259 : vector<8x128xf32>
    %261 = math.tanh %260 : vector<8x128xf32>
    %262 = arith.mulf %257, %261 : vector<8x128xf32>
    %c8_i32 = arith.constant 8 : i32
    %c0_56 = arith.constant 0 : index
    %c0_57 = arith.constant 0 : index
    %263 = vector.load %arg8[%c0_56, %c0_57] : memref<8x128xf32, #tpu.memory_space<vmem>>, vector<8x128xf32>
    tpu.vector_store %arg8[%c0_56, %c0_57], %262 {strides = array<i32>} : memref<8x128xf32, #tpu.memory_space<vmem>>, vector<8x128xf32>,
    %c0_58 = arith.constant 0 : index
    %c0_59 = arith.constant 0 : index
    %264 = vector.load %arg9[%c0_58, %c0_59] : memref<8x128xf32, #tpu.memory_space<vmem>>, vector<8x128xf32>
    tpu.vector_store %arg9[%c0_58, %c0_59], %260 {strides = array<i32>} : memref<8x128xf32, #tpu.memory_space<vmem>>, vector<8x128xf32>,
    %c0_i32_60 = arith.constant 0 : i32
    %265 = arith.cmpi eq, %arg1, %c0_i32_60 : i32
    %266 = arith.extui %265 : i1 to i32
    %c0_i32_61 = arith.constant 0 : i32
    %267 = arith.cmpi ne, %266, %c0_i32_61 : i32
    scf.if %267 {
      %c0_62 = arith.constant 0 : index
      %c0_63 = arith.constant 0 : index
      %268 = vector.load %arg5[%c0_62, %c0_63] : memref<1x128xf32, #tpu.memory_space<vmem>>, vector<1x128xf32>
      %269 = vector.broadcast %268 : vector<1x128xf32> to vector<8x128xf32>
      %270 = arith.mulf %262, %269 : vector<8x128xf32>
      %cst_64 = arith.constant dense<0.000000e+00> : vector<8xf32>
      %271 = vector.multi_reduction <add>, %270, %cst_64 [1] : vector<8x128xf32> to vector<8xf32>
      %272 = vector.shape_cast %271 : vector<8xf32> to vector<8x1xf32>
      %c0_65 = arith.constant 0 : index
      %c0_66 = arith.constant 0 : index
      %273 = memref.load %arg6[%c0_65, %c0_66] : memref<1x1xf32, #tpu.memory_space<smem>>
      %274 = vector.broadcast %273 : f32 to vector<8x1xf32>
      %275 = arith.addf %272, %274 : vector<8x1xf32>
      %276 = arith.negf %275 : vector<8x1xf32>
      %277 = math.exp %276 : vector<8x1xf32>
      %cst_67 = arith.constant 1.000000e+00 : f32
      %278 = vector.broadcast %cst_67 : f32 to vector<8x1xf32>
      %279 = arith.addf %278, %277 : vector<8x1xf32>
      %280 = arith.divf %278, %279 : vector<8x1xf32>
      %c0_68 = arith.constant 0 : index
      %c0_69 = arith.constant 0 : index
      %281 = vector.load %arg7[%c0_68, %c0_69] : memref<8x1xf32, #tpu.memory_space<vmem>>, vector<8x1xf32>
      tpu.vector_store %arg7[%c0_68, %c0_69], %280 {strides = array<i32>} : memref<8x1xf32, #tpu.memory_space<vmem>>, vector<8x1xf32>,
    } else {
    }
    return
  }
  func.func @transform_0(%arg0: i32, %arg1: i32) -> (i32, i32, i32) {
    %c0_i32 = arith.constant 0 : i32
    %c0_i32_0 = arith.constant 0 : i32
    return %arg1, %arg0, %c0_i32 : i32, i32, i32
  }
  func.func @transform_1(%arg0: i32, %arg1: i32) -> (i32, i32) {
    %c0_i32 = arith.constant 0 : i32
    %c0_i32_0 = arith.constant 0 : i32
    %c0_i32_1 = arith.constant 0 : i32
    return %c0_i32, %c0_i32_0 : i32, i32
  }
  func.func @transform_2(%arg0: i32, %arg1: i32) -> (i32, i32) {
    %c0_i32 = arith.constant 0 : i32
    %c0_i32_0 = arith.constant 0 : i32
    %c0_i32_1 = arith.constant 0 : i32
    return %c0_i32, %c0_i32_0 : i32, i32
  }
  func.func @transform_3(%arg0: i32, %arg1: i32) -> (i32, i32) {
    %c0_i32 = arith.constant 0 : i32
    %c0_i32_0 = arith.constant 0 : i32
    %c0_i32_1 = arith.constant 0 : i32
    return %c0_i32, %c0_i32_0 : i32, i32
  }
  func.func @transform_4(%arg0: i32, %arg1: i32) -> (i32, i32) {
    %c0_i32 = arith.constant 0 : i32
    %c0_i32_0 = arith.constant 0 : i32
    %c0_i32_1 = arith.constant 0 : i32
    return %c0_i32, %c0_i32_0 : i32, i32
  }
  func.func @transform_5(%arg0: i32, %arg1: i32) -> (i32, i32) {
    %c0_i32 = arith.constant 0 : i32
    %c0_i32_0 = arith.constant 0 : i32
    return %arg0, %c0_i32 : i32, i32
  }
}

module attributes {stable_mosaic.version = 11 : i64} {
  func.func @_lstm_recurrence_kernel(%arg0: i32, %arg1: i32, %arg2: memref<8x8x512xf32, #tpu.memory_space<vmem>>, %arg3: memref<128x512xf32, #tpu.memory_space<vmem>>, %arg4: memref<1x512xf32, #tpu.memory_space<vmem>>, %arg5: memref<1x128xf32, #tpu.memory_space<vmem>>, %arg6: memref<1x1xf32, #tpu.memory_space<smem>>, %arg7: memref<8x1xf32, #tpu.memory_space<vmem>>, %arg8: memref<8x128xf32, #tpu.memory_space<vmem>>, %arg9: memref<8x128xf32, #tpu.memory_space<vmem>>) attributes {dimension_semantics = [#tpu.dimension_semantics<parallel>, #tpu.dimension_semantics<arbitrary>], iteration_bounds = array<i64: 1, 1>, scalar_prefetch = 0 : i64, scratch_operands = 2 : i64, tpu.core_type = #tpu.core_type<tc>, window_params = [{transform_indices = @transform_0, window_bounds = array<i64: 8, 8, 512>}, {pipeline_mode = #tpu.pipeline_mode<synchronous>, transform_indices = @transform_1, window_bounds = array<i64: 128, 512>}, {pipeline_mode = #tpu.pipeline_mode<synchronous>, transform_indices = @transform_2, window_bounds = array<i64: 1, 512>}, {pipeline_mode = #tpu.pipeline_mode<synchronous>, transform_indices = @transform_3, window_bounds = array<i64: 1, 128>}, {transform_indices = @transform_4, window_bounds = array<i64: 1, 1>}, {transform_indices = @transform_5, window_bounds = array<i64: 8, 1>}]} {
    %c0_i32 = arith.constant 0 : i32
    %0 = arith.cmpi eq, %arg1, %c0_i32 : i32
    %1 = arith.extui %0 : i1 to i32
    %c0_i32_0 = arith.constant 0 : i32
    %2 = arith.cmpi ne, %1, %c0_i32_0 : i32
    scf.if %2 {
      %cst_62 = arith.constant 0.000000e+00 : f32
      %268 = vector.broadcast %cst_62 : f32 to vector<8x128xf32>
      %c0_63 = arith.constant 0 : index
      %c0_64 = arith.constant 0 : index
      %269 = vector.load %arg8[%c0_63, %c0_64] : memref<8x128xf32, #tpu.memory_space<vmem>>, vector<8x128xf32>
      tpu.vector_store %arg8[%c0_63, %c0_64], %268 {strides = array<i32>} : memref<8x128xf32, #tpu.memory_space<vmem>>, vector<8x128xf32>,
      %cst_65 = arith.constant 0.000000e+00 : f32
      %270 = vector.broadcast %cst_65 : f32 to vector<8x128xf32>
      %c0_66 = arith.constant 0 : index
      %c0_67 = arith.constant 0 : index
      %271 = vector.load %arg9[%c0_66, %c0_67] : memref<8x128xf32, #tpu.memory_space<vmem>>, vector<8x128xf32>
      tpu.vector_store %arg9[%c0_66, %c0_67], %270 {strides = array<i32>} : memref<8x128xf32, #tpu.memory_space<vmem>>, vector<8x128xf32>,
    } else {
    }
    %c0 = arith.constant 0 : index
    %c0_1 = arith.constant 0 : index
    %3 = vector.load %arg4[%c0, %c0_1] : memref<1x512xf32, #tpu.memory_space<vmem>>, vector<1x512xf32>
    %c0_2 = arith.constant 0 : index
    %c0_3 = arith.constant 0 : index
    %4 = vector.load %arg3[%c0_2, %c0_3] : memref<128x512xf32, #tpu.memory_space<vmem>>, vector<128x512xf32>
    %c0_4 = arith.constant 0 : index
    %c0_5 = arith.constant 0 : index
    %5 = vector.load %arg8[%c0_4, %c0_5] : memref<8x128xf32, #tpu.memory_space<vmem>>, vector<8x128xf32>
    %c0_6 = arith.constant 0 : index
    %c0_7 = arith.constant 0 : index
    %6 = vector.load %arg9[%c0_6, %c0_7] : memref<8x128xf32, #tpu.memory_space<vmem>>, vector<8x128xf32>
    %c0_i32_8 = arith.constant 0 : i32
    %7 = arith.index_cast %c0_i32_8 : i32 to index
    %c0_9 = arith.constant 0 : index
    %c0_10 = arith.constant 0 : index
    %8 = vector.load %arg2[%7, %c0_9, %c0_10] : memref<8x8x512xf32, #tpu.memory_space<vmem>>, vector<1x8x512xf32>
    %9 = vector.shape_cast %8 : vector<1x8x512xf32> to vector<8x512xf32>
    %10 = vector.broadcast %3 : vector<1x512xf32> to vector<8x512xf32>
    %11 = arith.addf %9, %10 : vector<8x512xf32>
    %cst = arith.constant dense<0.000000e+00> : vector<8x512xf32>
    %12 = tpu.matmul %5, %4, %cst {dimension_numbers = #tpu.dot_dimension_numbers<[1], [0], [0], [1], [0, 0, 1, 1], [], []>} : vector<8x128xf32>, vector<128x512xf32>, vector<8x512xf32> -> vector<8x512xf32>
    %13 = arith.addf %11, %12 : vector<8x512xf32>
    %14 = vector.extract_strided_slice %13 {offsets = [0, 0], sizes = [8, 128], strides = [1, 1]} : vector<8x512xf32> to vector<8x128xf32>
    %15 = arith.negf %14 : vector<8x128xf32>
    %16 = math.exp %15 : vector<8x128xf32>
    %cst_11 = arith.constant 1.000000e+00 : f32
    %17 = vector.broadcast %cst_11 : f32 to vector<8x128xf32>
    %18 = arith.addf %17, %16 : vector<8x128xf32>
    %19 = arith.divf %17, %18 : vector<8x128xf32>
    %20 = vector.extract_strided_slice %13 {offsets = [0, 128], sizes = [8, 128], strides = [1, 1]} : vector<8x512xf32> to vector<8x128xf32>
    %21 = arith.negf %20 : vector<8x128xf32>
    %22 = math.exp %21 : vector<8x128xf32>
    %cst_12 = arith.constant 1.000000e+00 : f32
    %23 = vector.broadcast %cst_12 : f32 to vector<8x128xf32>
    %24 = arith.addf %23, %22 : vector<8x128xf32>
    %25 = arith.divf %23, %24 : vector<8x128xf32>
    %26 = vector.extract_strided_slice %13 {offsets = [0, 256], sizes = [8, 128], strides = [1, 1]} : vector<8x512xf32> to vector<8x128xf32>
    %27 = math.tanh %26 : vector<8x128xf32>
    %28 = vector.extract_strided_slice %13 {offsets = [0, 384], sizes = [8, 128], strides = [1, 1]} : vector<8x512xf32> to vector<8x128xf32>
    %29 = arith.negf %28 : vector<8x128xf32>
    %30 = math.exp %29 : vector<8x128xf32>
    %cst_13 = arith.constant 1.000000e+00 : f32
    %31 = vector.broadcast %cst_13 : f32 to vector<8x128xf32>
    %32 = arith.addf %31, %30 : vector<8x128xf32>
    %33 = arith.divf %31, %32 : vector<8x128xf32>
    %34 = arith.mulf %25, %6 : vector<8x128xf32>
    %35 = arith.mulf %19, %27 : vector<8x128xf32>
    %36 = arith.addf %34, %35 : vector<8x128xf32>
    %37 = math.tanh %36 : vector<8x128xf32>
    %38 = arith.mulf %33, %37 : vector<8x128xf32>
    %c1_i32 = arith.constant 1 : i32
    %39 = arith.index_cast %c1_i32 : i32 to index
    %c0_14 = arith.constant 0 : index
    %c0_15 = arith.constant 0 : index
    %40 = vector.load %arg2[%39, %c0_14, %c0_15] : memref<8x8x512xf32, #tpu.memory_space<vmem>>, vector<1x8x512xf32>
    %41 = vector.shape_cast %40 : vector<1x8x512xf32> to vector<8x512xf32>
    %42 = vector.broadcast %3 : vector<1x512xf32> to vector<8x512xf32>
    %43 = arith.addf %41, %42 : vector<8x512xf32>
    %cst_16 = arith.constant dense<0.000000e+00> : vector<8x512xf32>
    %44 = tpu.matmul %38, %4, %cst_16 {dimension_numbers = #tpu.dot_dimension_numbers<[1], [0], [0], [1], [0, 0, 1, 1], [], []>} : vector<8x128xf32>, vector<128x512xf32>, vector<8x512xf32> -> vector<8x512xf32>
    %45 = arith.addf %43, %44 : vector<8x512xf32>
    %46 = vector.extract_strided_slice %45 {offsets = [0, 0], sizes = [8, 128], strides = [1, 1]} : vector<8x512xf32> to vector<8x128xf32>
    %47 = arith.negf %46 : vector<8x128xf32>
    %48 = math.exp %47 : vector<8x128xf32>
    %cst_17 = arith.constant 1.000000e+00 : f32
    %49 = vector.broadcast %cst_17 : f32 to vector<8x128xf32>
    %50 = arith.addf %49, %48 : vector<8x128xf32>
    %51 = arith.divf %49, %50 : vector<8x128xf32>
    %52 = vector.extract_strided_slice %45 {offsets = [0, 128], sizes = [8, 128], strides = [1, 1]} : vector<8x512xf32> to vector<8x128xf32>
    %53 = arith.negf %52 : vector<8x128xf32>
    %54 = math.exp %53 : vector<8x128xf32>
    %cst_18 = arith.constant 1.000000e+00 : f32
    %55 = vector.broadcast %cst_18 : f32 to vector<8x128xf32>
    %56 = arith.addf %55, %54 : vector<8x128xf32>
    %57 = arith.divf %55, %56 : vector<8x128xf32>
    %58 = vector.extract_strided_slice %45 {offsets = [0, 256], sizes = [8, 128], strides = [1, 1]} : vector<8x512xf32> to vector<8x128xf32>
    %59 = math.tanh %58 : vector<8x128xf32>
    %60 = vector.extract_strided_slice %45 {offsets = [0, 384], sizes = [8, 128], strides = [1, 1]} : vector<8x512xf32> to vector<8x128xf32>
    %61 = arith.negf %60 : vector<8x128xf32>
    %62 = math.exp %61 : vector<8x128xf32>
    %cst_19 = arith.constant 1.000000e+00 : f32
    %63 = vector.broadcast %cst_19 : f32 to vector<8x128xf32>
    %64 = arith.addf %63, %62 : vector<8x128xf32>
    %65 = arith.divf %63, %64 : vector<8x128xf32>
    %66 = arith.mulf %57, %36 : vector<8x128xf32>
    %67 = arith.mulf %51, %59 : vector<8x128xf32>
    %68 = arith.addf %66, %67 : vector<8x128xf32>
    %69 = math.tanh %68 : vector<8x128xf32>
    %70 = arith.mulf %65, %69 : vector<8x128xf32>
    %c2_i32 = arith.constant 2 : i32
    %71 = arith.index_cast %c2_i32 : i32 to index
    %c0_20 = arith.constant 0 : index
    %c0_21 = arith.constant 0 : index
    %72 = vector.load %arg2[%71, %c0_20, %c0_21] : memref<8x8x512xf32, #tpu.memory_space<vmem>>, vector<1x8x512xf32>
    %73 = vector.shape_cast %72 : vector<1x8x512xf32> to vector<8x512xf32>
    %74 = vector.broadcast %3 : vector<1x512xf32> to vector<8x512xf32>
    %75 = arith.addf %73, %74 : vector<8x512xf32>
    %cst_22 = arith.constant dense<0.000000e+00> : vector<8x512xf32>
    %76 = tpu.matmul %70, %4, %cst_22 {dimension_numbers = #tpu.dot_dimension_numbers<[1], [0], [0], [1], [0, 0, 1, 1], [], []>} : vector<8x128xf32>, vector<128x512xf32>, vector<8x512xf32> -> vector<8x512xf32>
    %77 = arith.addf %75, %76 : vector<8x512xf32>
    %78 = vector.extract_strided_slice %77 {offsets = [0, 0], sizes = [8, 128], strides = [1, 1]} : vector<8x512xf32> to vector<8x128xf32>
    %79 = arith.negf %78 : vector<8x128xf32>
    %80 = math.exp %79 : vector<8x128xf32>
    %cst_23 = arith.constant 1.000000e+00 : f32
    %81 = vector.broadcast %cst_23 : f32 to vector<8x128xf32>
    %82 = arith.addf %81, %80 : vector<8x128xf32>
    %83 = arith.divf %81, %82 : vector<8x128xf32>
    %84 = vector.extract_strided_slice %77 {offsets = [0, 128], sizes = [8, 128], strides = [1, 1]} : vector<8x512xf32> to vector<8x128xf32>
    %85 = arith.negf %84 : vector<8x128xf32>
    %86 = math.exp %85 : vector<8x128xf32>
    %cst_24 = arith.constant 1.000000e+00 : f32
    %87 = vector.broadcast %cst_24 : f32 to vector<8x128xf32>
    %88 = arith.addf %87, %86 : vector<8x128xf32>
    %89 = arith.divf %87, %88 : vector<8x128xf32>
    %90 = vector.extract_strided_slice %77 {offsets = [0, 256], sizes = [8, 128], strides = [1, 1]} : vector<8x512xf32> to vector<8x128xf32>
    %91 = math.tanh %90 : vector<8x128xf32>
    %92 = vector.extract_strided_slice %77 {offsets = [0, 384], sizes = [8, 128], strides = [1, 1]} : vector<8x512xf32> to vector<8x128xf32>
    %93 = arith.negf %92 : vector<8x128xf32>
    %94 = math.exp %93 : vector<8x128xf32>
    %cst_25 = arith.constant 1.000000e+00 : f32
    %95 = vector.broadcast %cst_25 : f32 to vector<8x128xf32>
    %96 = arith.addf %95, %94 : vector<8x128xf32>
    %97 = arith.divf %95, %96 : vector<8x128xf32>
    %98 = arith.mulf %89, %68 : vector<8x128xf32>
    %99 = arith.mulf %83, %91 : vector<8x128xf32>
    %100 = arith.addf %98, %99 : vector<8x128xf32>
    %101 = math.tanh %100 : vector<8x128xf32>
    %102 = arith.mulf %97, %101 : vector<8x128xf32>
    %c3_i32 = arith.constant 3 : i32
    %103 = arith.index_cast %c3_i32 : i32 to index
    %c0_26 = arith.constant 0 : index
    %c0_27 = arith.constant 0 : index
    %104 = vector.load %arg2[%103, %c0_26, %c0_27] : memref<8x8x512xf32, #tpu.memory_space<vmem>>, vector<1x8x512xf32>
    %105 = vector.shape_cast %104 : vector<1x8x512xf32> to vector<8x512xf32>
    %106 = vector.broadcast %3 : vector<1x512xf32> to vector<8x512xf32>
    %107 = arith.addf %105, %106 : vector<8x512xf32>
    %cst_28 = arith.constant dense<0.000000e+00> : vector<8x512xf32>
    %108 = tpu.matmul %102, %4, %cst_28 {dimension_numbers = #tpu.dot_dimension_numbers<[1], [0], [0], [1], [0, 0, 1, 1], [], []>} : vector<8x128xf32>, vector<128x512xf32>, vector<8x512xf32> -> vector<8x512xf32>
    %109 = arith.addf %107, %108 : vector<8x512xf32>
    %110 = vector.extract_strided_slice %109 {offsets = [0, 0], sizes = [8, 128], strides = [1, 1]} : vector<8x512xf32> to vector<8x128xf32>
    %111 = arith.negf %110 : vector<8x128xf32>
    %112 = math.exp %111 : vector<8x128xf32>
    %cst_29 = arith.constant 1.000000e+00 : f32
    %113 = vector.broadcast %cst_29 : f32 to vector<8x128xf32>
    %114 = arith.addf %113, %112 : vector<8x128xf32>
    %115 = arith.divf %113, %114 : vector<8x128xf32>
    %116 = vector.extract_strided_slice %109 {offsets = [0, 128], sizes = [8, 128], strides = [1, 1]} : vector<8x512xf32> to vector<8x128xf32>
    %117 = arith.negf %116 : vector<8x128xf32>
    %118 = math.exp %117 : vector<8x128xf32>
    %cst_30 = arith.constant 1.000000e+00 : f32
    %119 = vector.broadcast %cst_30 : f32 to vector<8x128xf32>
    %120 = arith.addf %119, %118 : vector<8x128xf32>
    %121 = arith.divf %119, %120 : vector<8x128xf32>
    %122 = vector.extract_strided_slice %109 {offsets = [0, 256], sizes = [8, 128], strides = [1, 1]} : vector<8x512xf32> to vector<8x128xf32>
    %123 = math.tanh %122 : vector<8x128xf32>
    %124 = vector.extract_strided_slice %109 {offsets = [0, 384], sizes = [8, 128], strides = [1, 1]} : vector<8x512xf32> to vector<8x128xf32>
    %125 = arith.negf %124 : vector<8x128xf32>
    %126 = math.exp %125 : vector<8x128xf32>
    %cst_31 = arith.constant 1.000000e+00 : f32
    %127 = vector.broadcast %cst_31 : f32 to vector<8x128xf32>
    %128 = arith.addf %127, %126 : vector<8x128xf32>
    %129 = arith.divf %127, %128 : vector<8x128xf32>
    %130 = arith.mulf %121, %100 : vector<8x128xf32>
    %131 = arith.mulf %115, %123 : vector<8x128xf32>
    %132 = arith.addf %130, %131 : vector<8x128xf32>
    %133 = math.tanh %132 : vector<8x128xf32>
    %134 = arith.mulf %129, %133 : vector<8x128xf32>
    %c4_i32 = arith.constant 4 : i32
    %135 = arith.index_cast %c4_i32 : i32 to index
    %c0_32 = arith.constant 0 : index
    %c0_33 = arith.constant 0 : index
    %136 = vector.load %arg2[%135, %c0_32, %c0_33] : memref<8x8x512xf32, #tpu.memory_space<vmem>>, vector<1x8x512xf32>
    %137 = vector.shape_cast %136 : vector<1x8x512xf32> to vector<8x512xf32>
    %138 = vector.broadcast %3 : vector<1x512xf32> to vector<8x512xf32>
    %139 = arith.addf %137, %138 : vector<8x512xf32>
    %cst_34 = arith.constant dense<0.000000e+00> : vector<8x512xf32>
    %140 = tpu.matmul %134, %4, %cst_34 {dimension_numbers = #tpu.dot_dimension_numbers<[1], [0], [0], [1], [0, 0, 1, 1], [], []>} : vector<8x128xf32>, vector<128x512xf32>, vector<8x512xf32> -> vector<8x512xf32>
    %141 = arith.addf %139, %140 : vector<8x512xf32>
    %142 = vector.extract_strided_slice %141 {offsets = [0, 0], sizes = [8, 128], strides = [1, 1]} : vector<8x512xf32> to vector<8x128xf32>
    %143 = arith.negf %142 : vector<8x128xf32>
    %144 = math.exp %143 : vector<8x128xf32>
    %cst_35 = arith.constant 1.000000e+00 : f32
    %145 = vector.broadcast %cst_35 : f32 to vector<8x128xf32>
    %146 = arith.addf %145, %144 : vector<8x128xf32>
    %147 = arith.divf %145, %146 : vector<8x128xf32>
    %148 = vector.extract_strided_slice %141 {offsets = [0, 128], sizes = [8, 128], strides = [1, 1]} : vector<8x512xf32> to vector<8x128xf32>
    %149 = arith.negf %148 : vector<8x128xf32>
    %150 = math.exp %149 : vector<8x128xf32>
    %cst_36 = arith.constant 1.000000e+00 : f32
    %151 = vector.broadcast %cst_36 : f32 to vector<8x128xf32>
    %152 = arith.addf %151, %150 : vector<8x128xf32>
    %153 = arith.divf %151, %152 : vector<8x128xf32>
    %154 = vector.extract_strided_slice %141 {offsets = [0, 256], sizes = [8, 128], strides = [1, 1]} : vector<8x512xf32> to vector<8x128xf32>
    %155 = math.tanh %154 : vector<8x128xf32>
    %156 = vector.extract_strided_slice %141 {offsets = [0, 384], sizes = [8, 128], strides = [1, 1]} : vector<8x512xf32> to vector<8x128xf32>
    %157 = arith.negf %156 : vector<8x128xf32>
    %158 = math.exp %157 : vector<8x128xf32>
    %cst_37 = arith.constant 1.000000e+00 : f32
    %159 = vector.broadcast %cst_37 : f32 to vector<8x128xf32>
    %160 = arith.addf %159, %158 : vector<8x128xf32>
    %161 = arith.divf %159, %160 : vector<8x128xf32>
    %162 = arith.mulf %153, %132 : vector<8x128xf32>
    %163 = arith.mulf %147, %155 : vector<8x128xf32>
    %164 = arith.addf %162, %163 : vector<8x128xf32>
    %165 = math.tanh %164 : vector<8x128xf32>
    %166 = arith.mulf %161, %165 : vector<8x128xf32>
    %c5_i32 = arith.constant 5 : i32
    %167 = arith.index_cast %c5_i32 : i32 to index
    %c0_38 = arith.constant 0 : index
    %c0_39 = arith.constant 0 : index
    %168 = vector.load %arg2[%167, %c0_38, %c0_39] : memref<8x8x512xf32, #tpu.memory_space<vmem>>, vector<1x8x512xf32>
    %169 = vector.shape_cast %168 : vector<1x8x512xf32> to vector<8x512xf32>
    %170 = vector.broadcast %3 : vector<1x512xf32> to vector<8x512xf32>
    %171 = arith.addf %169, %170 : vector<8x512xf32>
    %cst_40 = arith.constant dense<0.000000e+00> : vector<8x512xf32>
    %172 = tpu.matmul %166, %4, %cst_40 {dimension_numbers = #tpu.dot_dimension_numbers<[1], [0], [0], [1], [0, 0, 1, 1], [], []>} : vector<8x128xf32>, vector<128x512xf32>, vector<8x512xf32> -> vector<8x512xf32>
    %173 = arith.addf %171, %172 : vector<8x512xf32>
    %174 = vector.extract_strided_slice %173 {offsets = [0, 0], sizes = [8, 128], strides = [1, 1]} : vector<8x512xf32> to vector<8x128xf32>
    %175 = arith.negf %174 : vector<8x128xf32>
    %176 = math.exp %175 : vector<8x128xf32>
    %cst_41 = arith.constant 1.000000e+00 : f32
    %177 = vector.broadcast %cst_41 : f32 to vector<8x128xf32>
    %178 = arith.addf %177, %176 : vector<8x128xf32>
    %179 = arith.divf %177, %178 : vector<8x128xf32>
    %180 = vector.extract_strided_slice %173 {offsets = [0, 128], sizes = [8, 128], strides = [1, 1]} : vector<8x512xf32> to vector<8x128xf32>
    %181 = arith.negf %180 : vector<8x128xf32>
    %182 = math.exp %181 : vector<8x128xf32>
    %cst_42 = arith.constant 1.000000e+00 : f32
    %183 = vector.broadcast %cst_42 : f32 to vector<8x128xf32>
    %184 = arith.addf %183, %182 : vector<8x128xf32>
    %185 = arith.divf %183, %184 : vector<8x128xf32>
    %186 = vector.extract_strided_slice %173 {offsets = [0, 256], sizes = [8, 128], strides = [1, 1]} : vector<8x512xf32> to vector<8x128xf32>
    %187 = math.tanh %186 : vector<8x128xf32>
    %188 = vector.extract_strided_slice %173 {offsets = [0, 384], sizes = [8, 128], strides = [1, 1]} : vector<8x512xf32> to vector<8x128xf32>
    %189 = arith.negf %188 : vector<8x128xf32>
    %190 = math.exp %189 : vector<8x128xf32>
    %cst_43 = arith.constant 1.000000e+00 : f32
    %191 = vector.broadcast %cst_43 : f32 to vector<8x128xf32>
    %192 = arith.addf %191, %190 : vector<8x128xf32>
    %193 = arith.divf %191, %192 : vector<8x128xf32>
    %194 = arith.mulf %185, %164 : vector<8x128xf32>
    %195 = arith.mulf %179, %187 : vector<8x128xf32>
    %196 = arith.addf %194, %195 : vector<8x128xf32>
    %197 = math.tanh %196 : vector<8x128xf32>
    %198 = arith.mulf %193, %197 : vector<8x128xf32>
    %c6_i32 = arith.constant 6 : i32
    %199 = arith.index_cast %c6_i32 : i32 to index
    %c0_44 = arith.constant 0 : index
    %c0_45 = arith.constant 0 : index
    %200 = vector.load %arg2[%199, %c0_44, %c0_45] : memref<8x8x512xf32, #tpu.memory_space<vmem>>, vector<1x8x512xf32>
    %201 = vector.shape_cast %200 : vector<1x8x512xf32> to vector<8x512xf32>
    %202 = vector.broadcast %3 : vector<1x512xf32> to vector<8x512xf32>
    %203 = arith.addf %201, %202 : vector<8x512xf32>
    %cst_46 = arith.constant dense<0.000000e+00> : vector<8x512xf32>
    %204 = tpu.matmul %198, %4, %cst_46 {dimension_numbers = #tpu.dot_dimension_numbers<[1], [0], [0], [1], [0, 0, 1, 1], [], []>} : vector<8x128xf32>, vector<128x512xf32>, vector<8x512xf32> -> vector<8x512xf32>
    %205 = arith.addf %203, %204 : vector<8x512xf32>
    %206 = vector.extract_strided_slice %205 {offsets = [0, 0], sizes = [8, 128], strides = [1, 1]} : vector<8x512xf32> to vector<8x128xf32>
    %207 = arith.negf %206 : vector<8x128xf32>
    %208 = math.exp %207 : vector<8x128xf32>
    %cst_47 = arith.constant 1.000000e+00 : f32
    %209 = vector.broadcast %cst_47 : f32 to vector<8x128xf32>
    %210 = arith.addf %209, %208 : vector<8x128xf32>
    %211 = arith.divf %209, %210 : vector<8x128xf32>
    %212 = vector.extract_strided_slice %205 {offsets = [0, 128], sizes = [8, 128], strides = [1, 1]} : vector<8x512xf32> to vector<8x128xf32>
    %213 = arith.negf %212 : vector<8x128xf32>
    %214 = math.exp %213 : vector<8x128xf32>
    %cst_48 = arith.constant 1.000000e+00 : f32
    %215 = vector.broadcast %cst_48 : f32 to vector<8x128xf32>
    %216 = arith.addf %215, %214 : vector<8x128xf32>
    %217 = arith.divf %215, %216 : vector<8x128xf32>
    %218 = vector.extract_strided_slice %205 {offsets = [0, 256], sizes = [8, 128], strides = [1, 1]} : vector<8x512xf32> to vector<8x128xf32>
    %219 = math.tanh %218 : vector<8x128xf32>
    %220 = vector.extract_strided_slice %205 {offsets = [0, 384], sizes = [8, 128], strides = [1, 1]} : vector<8x512xf32> to vector<8x128xf32>
    %221 = arith.negf %220 : vector<8x128xf32>
    %222 = math.exp %221 : vector<8x128xf32>
    %cst_49 = arith.constant 1.000000e+00 : f32
    %223 = vector.broadcast %cst_49 : f32 to vector<8x128xf32>
    %224 = arith.addf %223, %222 : vector<8x128xf32>
    %225 = arith.divf %223, %224 : vector<8x128xf32>
    %226 = arith.mulf %217, %196 : vector<8x128xf32>
    %227 = arith.mulf %211, %219 : vector<8x128xf32>
    %228 = arith.addf %226, %227 : vector<8x128xf32>
    %229 = math.tanh %228 : vector<8x128xf32>
    %230 = arith.mulf %225, %229 : vector<8x128xf32>
    %c7_i32 = arith.constant 7 : i32
    %231 = arith.index_cast %c7_i32 : i32 to index
    %c0_50 = arith.constant 0 : index
    %c0_51 = arith.constant 0 : index
    %232 = vector.load %arg2[%231, %c0_50, %c0_51] : memref<8x8x512xf32, #tpu.memory_space<vmem>>, vector<1x8x512xf32>
    %233 = vector.shape_cast %232 : vector<1x8x512xf32> to vector<8x512xf32>
    %234 = vector.broadcast %3 : vector<1x512xf32> to vector<8x512xf32>
    %235 = arith.addf %233, %234 : vector<8x512xf32>
    %cst_52 = arith.constant dense<0.000000e+00> : vector<8x512xf32>
    %236 = tpu.matmul %230, %4, %cst_52 {dimension_numbers = #tpu.dot_dimension_numbers<[1], [0], [0], [1], [0, 0, 1, 1], [], []>} : vector<8x128xf32>, vector<128x512xf32>, vector<8x512xf32> -> vector<8x512xf32>
    %237 = arith.addf %235, %236 : vector<8x512xf32>
    %238 = vector.extract_strided_slice %237 {offsets = [0, 0], sizes = [8, 128], strides = [1, 1]} : vector<8x512xf32> to vector<8x128xf32>
    %239 = arith.negf %238 : vector<8x128xf32>
    %240 = math.exp %239 : vector<8x128xf32>
    %cst_53 = arith.constant 1.000000e+00 : f32
    %241 = vector.broadcast %cst_53 : f32 to vector<8x128xf32>
    %242 = arith.addf %241, %240 : vector<8x128xf32>
    %243 = arith.divf %241, %242 : vector<8x128xf32>
    %244 = vector.extract_strided_slice %237 {offsets = [0, 128], sizes = [8, 128], strides = [1, 1]} : vector<8x512xf32> to vector<8x128xf32>
    %245 = arith.negf %244 : vector<8x128xf32>
    %246 = math.exp %245 : vector<8x128xf32>
    %cst_54 = arith.constant 1.000000e+00 : f32
    %247 = vector.broadcast %cst_54 : f32 to vector<8x128xf32>
    %248 = arith.addf %247, %246 : vector<8x128xf32>
    %249 = arith.divf %247, %248 : vector<8x128xf32>
    %250 = vector.extract_strided_slice %237 {offsets = [0, 256], sizes = [8, 128], strides = [1, 1]} : vector<8x512xf32> to vector<8x128xf32>
    %251 = math.tanh %250 : vector<8x128xf32>
    %252 = vector.extract_strided_slice %237 {offsets = [0, 384], sizes = [8, 128], strides = [1, 1]} : vector<8x512xf32> to vector<8x128xf32>
    %253 = arith.negf %252 : vector<8x128xf32>
    %254 = math.exp %253 : vector<8x128xf32>
    %cst_55 = arith.constant 1.000000e+00 : f32
    %255 = vector.broadcast %cst_55 : f32 to vector<8x128xf32>
    %256 = arith.addf %255, %254 : vector<8x128xf32>
    %257 = arith.divf %255, %256 : vector<8x128xf32>
    %258 = arith.mulf %249, %228 : vector<8x128xf32>
    %259 = arith.mulf %243, %251 : vector<8x128xf32>
    %260 = arith.addf %258, %259 : vector<8x128xf32>
    %261 = math.tanh %260 : vector<8x128xf32>
    %262 = arith.mulf %257, %261 : vector<8x128xf32>
    %c8_i32 = arith.constant 8 : i32
    %c0_56 = arith.constant 0 : index
    %c0_57 = arith.constant 0 : index
    %263 = vector.load %arg8[%c0_56, %c0_57] : memref<8x128xf32, #tpu.memory_space<vmem>>, vector<8x128xf32>
    tpu.vector_store %arg8[%c0_56, %c0_57], %262 {strides = array<i32>} : memref<8x128xf32, #tpu.memory_space<vmem>>, vector<8x128xf32>,
    %c0_58 = arith.constant 0 : index
    %c0_59 = arith.constant 0 : index
    %264 = vector.load %arg9[%c0_58, %c0_59] : memref<8x128xf32, #tpu.memory_space<vmem>>, vector<8x128xf32>
    tpu.vector_store %arg9[%c0_58, %c0_59], %260 {strides = array<i32>} : memref<8x128xf32, #tpu.memory_space<vmem>>, vector<8x128xf32>,
    %c0_i32_60 = arith.constant 0 : i32
    %265 = arith.cmpi eq, %arg1, %c0_i32_60 : i32
    %266 = arith.extui %265 : i1 to i32
    %c0_i32_61 = arith.constant 0 : i32
    %267 = arith.cmpi ne, %266, %c0_i32_61 : i32
    scf.if %267 {
      %c0_62 = arith.constant 0 : index
      %c0_63 = arith.constant 0 : index
      %268 = vector.load %arg5[%c0_62, %c0_63] : memref<1x128xf32, #tpu.memory_space<vmem>>, vector<1x128xf32>
      %269 = vector.broadcast %268 : vector<1x128xf32> to vector<8x128xf32>
      %270 = arith.mulf %262, %269 : vector<8x128xf32>
      %cst_64 = arith.constant dense<0.000000e+00> : vector<8xf32>
      %271 = vector.multi_reduction <add>, %270, %cst_64 [1] : vector<8x128xf32> to vector<8xf32>
      %272 = vector.shape_cast %271 : vector<8xf32> to vector<8x1xf32>
      %c0_65 = arith.constant 0 : index
      %c0_66 = arith.constant 0 : index
      %273 = memref.load %arg6[%c0_65, %c0_66] : memref<1x1xf32, #tpu.memory_space<smem>>
      %274 = vector.broadcast %273 : f32 to vector<8x1xf32>
      %275 = arith.addf %272, %274 : vector<8x1xf32>
      %276 = arith.negf %275 : vector<8x1xf32>
      %277 = math.exp %276 : vector<8x1xf32>
      %cst_67 = arith.constant 1.000000e+00 : f32
      %278 = vector.broadcast %cst_67 : f32 to vector<8x1xf32>
      %279 = arith.addf %278, %277 : vector<8x1xf32>
      %280 = arith.divf %278, %279 : vector<8x1xf32>
      %c0_68 = arith.constant 0 : index
      %c0_69 = arith.constant 0 : index
      %281 = vector.load %arg7[%c0_68, %c0_69] : memref<8x1xf32, #tpu.memory_space<vmem>>, vector<8x1xf32>
      tpu.vector_store %arg7[%c0_68, %c0_69], %280 {strides = array<i32>} : memref<8x1xf32, #tpu.memory_space<vmem>>, vector<8x1xf32>,
    } else {
    }
    return
  }
  func.func @transform_0(%arg0: i32, %arg1: i32) -> (i32, i32, i32) {
    %c0_i32 = arith.constant 0 : i32
    %c0_i32_0 = arith.constant 0 : i32
    return %arg1, %arg0, %c0_i32 : i32, i32, i32
  }
  func.func @transform_1(%arg0: i32, %arg1: i32) -> (i32, i32) {
    %c0_i32 = arith.constant 0 : i32
    %c0_i32_0 = arith.constant 0 : i32
    %c0_i32_1 = arith.constant 0 : i32
    return %c0_i32, %c0_i32_0 : i32, i32
  }
  func.func @transform_2(%arg0: i32, %arg1: i32) -> (i32, i32) {
    %c0_i32 = arith.constant 0 : i32
    %c0_i32_0 = arith.constant 0 : i32
    %c0_i32_1 = arith.constant 0 : i32
    return %c0_i32, %c0_i32_0 : i32, i32
  }
  func.func @transform_3(%arg0: i32, %arg1: i32) -> (i32, i32) {
    %c0_i32 = arith.constant 0 : i32
    %c0_i32_0 = arith.constant 0 : i32
    %c0_i32_1 = arith.constant 0 : i32
    return %c0_i32, %c0_i32_0 : i32, i32
  }
  func.func @transform_4(%arg0: i32, %arg1: i32) -> (i32, i32) {
    %c0_i32 = arith.constant 0 : i32
    %c0_i32_0 = arith.constant 0 : i32
    %c0_i32_1 = arith.constant 0 : i32
    return %c0_i32, %c0_i32_0 : i32, i32
  }
  func.func @transform_5(%arg0: i32, %arg1: i32) -> (i32, i32) {
    %c0_i32 = arith.constant 0 : i32
    %c0_i32_0 = arith.constant 0 : i32
    return %arg0, %c0_i32 : i32, i32
  }
}

</mosaic_0001>

<llo_original>
// kernel: tpu_custom_call.1
$region0: #{tpu_custom_call.1}
  #allocation0 [shape = 'u32[]', space=smem, size = 0x4, offset = 0x4, fixed_abs, tag = 'smem constant byte address 0x4 - core index']
  #allocation1 [shape = 'u32[144,128]{1,0:T(1,128)}', space=vmem, size = 0x12000, scoped, tag = 'internal scratch']
  #allocation2 [shape = 'f32[8,128]{1,0:T(8,128)}', space=vmem, size = 0x1000, scoped, tag = 'scratch operand']
  #allocation3 [shape = 'f32[8,128]{1,0:T(8,128)}', space=vmem, size = 0x1000, scoped, tag = 'scratch operand']
  #allocation4 [shape = 'f32[1,1]{1,0:T(1,128)S(6)}', space=smem, size = 0x200, scoped, tag = 'scoped memory for tpu_custom_call.1']
  %s0 = inlined_call_operand.hbm [shape: f32[8,8,512], index: 0, kind: input, shape index: {}]
  %s1 = inlined_call_operand.hbm [shape: f32[128,512], index: 1, kind: input, shape index: {}]
  %s2 = inlined_call_operand.vmem [shape: f32[1,512], index: 2, kind: input, shape index: {}]
  %s3 = inlined_call_operand.vmem [shape: f32[1,128], index: 3, kind: input, shape index: {}]
  %s4 = inlined_call_operand.<no memory space> [shape: f32[1,1], index: 4, kind: input, shape index: {}]
  %s5 = inlined_call_operand.vmem [shape: f32[8,1], index: 5, kind: output, shape index: {}]
  %s6 = sld [smem:[#allocation0]]
  $region46: #{tpu_custom_call.1} parent=0
    _
  %s8 = ssub.s32 1, %s6
  %s9 = scalar_select 0, %s8, %s6
  %10 = sst [smem:[#allocation4]] %s4
  $region1: #{tpu_custom_call.1} parent=0
    #allocation5 [shape = 'u8[131072]{0}', space=vmem, size = 0x20000, scoped, tag = 'input window, operand 0, single buffered']
    #allocation6 [shape = 's32[1]{0}', space=sflag, size = 0x4, scoped, tag = 'scoped memory for tpu_custom_call.1']
    #allocation7 [shape = 'u8[262144]{0}', space=vmem, size = 0x40000, scoped, tag = 'input window, operand 1, single buffered']
    #allocation8 [shape = 's32[1]{0}', space=sflag, size = 0x4, scoped, tag = 'scoped memory for tpu_custom_call.1']
    %11 = vsyncpa [#allocation6], 0
    %12 = vsyncpa [#allocation8], 0
    // Predicated region
    $region2: #{tpu_custom_call.1} parent=1 // pred_check
      _
    $region3: #{tpu_custom_call.1} parent=1 // pred_check_branch
      %14 = sbr.rel (0) target = $region5
    $region4: #{tpu_custom_call.1} parent=1 // pred_region
      %s16 = ssub.s32 4096, 4096
      %17 = vsyncadd [#allocation6], %s16
      %s18 = sshll.u32 [#allocation5], 4
      %s19 = int_to_ptr.vmem [resolvable:$true] %s18
      %24 = dma.hbm_to_vmem [thread:$0]  %s0, 4096, %s19, [#allocation6], 512, 512, 32
    $region5: #{tpu_custom_call.1} parent=1 // pred_fallthru
      _
    // Predicated region
    $region6: #{tpu_custom_call.1} parent=1 // pred_check
      _
    $region7: #{tpu_custom_call.1} parent=1 // pred_check_branch
      %26 = sbr.rel (0) target = $region9
    $region8: #{tpu_custom_call.1} parent=1 // pred_region
      %s28 = ssub.s32 8192, 8192
      %29 = vsyncadd [#allocation8], %s28
      %s30 = sshll.u32 [#allocation7], 4
      %s31 = int_to_ptr.vmem [resolvable:$true] %s30
      %36 = dma.hbm_to_vmem [thread:$0]  %s1, 8192, %s31, [#allocation8], 512, 512, 32
    $region9: #{tpu_custom_call.1} parent=1 // pred_fallthru
      _
    // Predicated region
    $region10: #{tpu_custom_call.1} parent=1 // pred_check
      _
    $region11: #{tpu_custom_call.1} parent=1 // pred_check_branch
      %38 = sbr.rel (0) target = $region13
    $region12: #{tpu_custom_call.1} parent=1 // pred_region
      _
    $region13: #{tpu_custom_call.1} parent=1 // pred_fallthru
      _
    // Predicated region
    $region14: #{tpu_custom_call.1} parent=1 // pred_check
      _
    $region15: #{tpu_custom_call.1} parent=1 // pred_check_branch
      %40 = sbr.rel (0) target = $region17
    $region16: #{tpu_custom_call.1} parent=1 // pred_region
      _
    $region17: #{tpu_custom_call.1} parent=1 // pred_fallthru
      _
    // Predicated region
    $region18: #{tpu_custom_call.1} parent=1 // pred_check
      _
    $region19: #{tpu_custom_call.1} parent=1 // pred_check_branch
      %42 = sbr.rel (0) target = $region21
    $region20: #{tpu_custom_call.1} parent=1 // pred_region
      _
    $region21: #{tpu_custom_call.1} parent=1 // pred_fallthru
      _
    // Predicated region
    $region22: #{tpu_custom_call.1} parent=1 // pred_check
      _
    $region23: #{tpu_custom_call.1} parent=1 // pred_check_branch
      %44 = sbr.rel (0) target = $region25
    $region24: #{tpu_custom_call.1} parent=1 // pred_region
      %45 = dma.done [#allocation6], 4096
    $region25: #{tpu_custom_call.1} parent=1 // pred_fallthru
      _
    // Predicated region
    $region26: #{tpu_custom_call.1} parent=1 // pred_check
      _
    $region27: #{tpu_custom_call.1} parent=1 // pred_check_branch
      %47 = sbr.rel (0) target = $region29
    $region28: #{tpu_custom_call.1} parent=1 // pred_region
      %48 = dma.done [#allocation8], 8192
    $region29: #{tpu_custom_call.1} parent=1 // pred_fallthru
      _
    %p49 = scmp.eq.s32.totalorder 0, 0
    // Predicated region
    $region30: #{tpu_custom_call.1} parent=1 // pred_check
      %p50 = pneg %p49
    $region31: #{tpu_custom_call.1} parent=1 // pred_check_branch
      %52 = sbr.rel (%p50) target = $region33
    $region32: #{tpu_custom_call.1} parent=1 // pred_region
      %53 = vst [vmem:[#allocation2] sm:$0xff] 0.0
      %54 = vst [vmem:[#allocation3] sm:$0xff] 0.0
    $region33: #{tpu_custom_call.1} parent=1 // pred_fallthru
      _
    %v55 = vld [vmem:[%s2] sm:$0xf]
    %v56 = vld [vmem:[#allocation7] sm:$0xff]
    %v57 = vld [vmem:[#allocation7 + $0x8] sm:$0xff]
    %v58 = vld [vmem:[#allocation7 + $0x10] sm:$0xff]
    %v59 = vld [vmem:[#allocation7 + $0x18] sm:$0xff]
    %v60 = vld [vmem:[#allocation7 + $0x20] sm:$0xff]
    %v61 = vld [vmem:[#allocation7 + $0x28] sm:$0xff]
    %v62 = vld [vmem:[#allocation7 + $0x30] sm:$0xff]
    %v63 = vld [vmem:[#allocation7 + $0x38] sm:$0xff]
    %v64 = vld [vmem:[#allocation7 + $0x40] sm:$0xff]
    %v65 = vld [vmem:[#allocation7 + $0x48] sm:$0xff]
    %v66 = vld [vmem:[#allocation7 + $0x50] sm:$0xff]
    %v67 = vld [vmem:[#allocation7 + $0x58] sm:$0xff]
    %v68 = vld [vmem:[#allocation7 + $0x60] sm:$0xff]
    %v69 = vld [vmem:[#allocation7 + $0x68] sm:$0xff]
    %v70 = vld [vmem:[#allocation7 + $0x70] sm:$0xff]
    %v71 = vld [vmem:[#allocation7 + $0x78] sm:$0xff]
    %v72 = vld [vmem:[#allocation7 + $0x80] sm:$0xff]
    %v73 = vld [vmem:[#allocation7 + $0x88] sm:$0xff]
    %v74 = vld [vmem:[#allocation7 + $0x90] sm:$0xff]
    %v75 = vld [vmem:[#allocation7 + $0x98] sm:$0xff]
    %v76 = vld [vmem:[#allocation7 + $0xa0] sm:$0xff]
    %v77 = vld [vmem:[#allocation7 + $0xa8] sm:$0xff]
    %v78 = vld [vmem:[#allocation7 + $0xb0] sm:$0xff]
    %v79 = vld [vmem:[#allocation7 + $0xb8] sm:$0xff]
    %v80 = vld [vmem:[#allocation7 + $0xc0] sm:$0xff]
    %v81 = vld [vmem:[#allocation7 + $0xc8] sm:$0xff]
    %v82 = vld [vmem:[#allocation7 + $0xd0] sm:$0xff]
    %v83 = vld [vmem:[#allocation7 + $0xd8] sm:$0xff]
    %v84 = vld [vmem:[#allocation7 + $0xe0] sm:$0xff]
    %v85 = vld [vmem:[#allocation7 + $0xe8] sm:$0xff]
    %v86 = vld [vmem:[#allocation7 + $0xf0] sm:$0xff]
    %v87 = vld [vmem:[#allocation7 + $0xf8] sm:$0xff]
    %v88 = vld [vmem:[#allocation7 + $0x100] sm:$0xff]
    %v89 = vld [vmem:[#allocation7 + $0x108] sm:$0xff]
    %v90 = vld [vmem:[#allocation7 + $0x110] sm:$0xff]
    %v91 = vld [vmem:[#allocation7 + $0x118] sm:$0xff]
    %v92 = vld [vmem:[#allocation7 + $0x120] sm:$0xff]
    %v93 = vld [vmem:[#allocation7 + $0x128] sm:$0xff]
    %v94 = vld [vmem:[#allocation7 + $0x130] sm:$0xff]
    %v95 = vld [vmem:[#allocation7 + $0x138] sm:$0xff]
    %v96 = vld [vmem:[#allocation7 + $0x140] sm:$0xff]
    %v97 = vld [vmem:[#allocation7 + $0x148] sm:$0xff]
    %v98 = vld [vmem:[#allocation7 + $0x150] sm:$0xff]
    %v99 = vld [vmem:[#allocation7 + $0x158] sm:$0xff]
    %v100 = vld [vmem:[#allocation7 + $0x160] sm:$0xff]
    %v101 = vld [vmem:[#allocation7 + $0x168] sm:$0xff]
    %v102 = vld [vmem:[#allocation7 + $0x170] sm:$0xff]
    %v103 = vld [vmem:[#allocation7 + $0x178] sm:$0xff]
    %v104 = vld [vmem:[#allocation7 + $0x180] sm:$0xff]
    %v105 = vld [vmem:[#allocation7 + $0x188] sm:$0xff]
    %v106 = vld [vmem:[#allocation7 + $0x190] sm:$0xff]
    %v107 = vld [vmem:[#allocation7 + $0x198] sm:$0xff]
    %v108 = vld [vmem:[#allocation7 + $0x1a0] sm:$0xff]
    %v109 = vld [vmem:[#allocation7 + $0x1a8] sm:$0xff]
    %v110 = vld [vmem:[#allocation7 + $0x1b0] sm:$0xff]
    %v111 = vld [vmem:[#allocation7 + $0x1b8] sm:$0xff]
    %v112 = vld [vmem:[#allocation7 + $0x1c0] sm:$0xff]
    %v113 = vld [vmem:[#allocation7 + $0x1c8] sm:$0xff]
    %v114 = vld [vmem:[#allocation7 + $0x1d0] sm:$0xff]
    %v115 = vld [vmem:[#allocation7 + $0x1d8] sm:$0xff]
    %v116 = vld [vmem:[#allocation7 + $0x1e0] sm:$0xff]
    %v117 = vld [vmem:[#allocation7 + $0x1e8] sm:$0xff]
    %v118 = vld [vmem:[#allocation7 + $0x1f0] sm:$0xff]
    %v119 = vld [vmem:[#allocation7 + $0x1f8] sm:$0xff]
    %v120 = vld [vmem:[#allocation2] sm:$0xff]
    %v121 = vld [vmem:[#allocation3] sm:$0xff]
    %v122 = vld [vmem:[#allocation5] sm:$0xff]
    %v123 = vld [vmem:[#allocation5 + $0x8] sm:$0xff]
    %v124 = vld [vmem:[#allocation5 + $0x10] sm:$0xff]
    %v125 = vld [vmem:[#allocation5 + $0x18] sm:$0xff]
    %v127 = vlaneseq
    %v128 = vshrl.u32 %v127, 7
    %v129 = vsub.s32 0, %v128
    %v130 = vrot.slane %v55, %v129
    %v131 = vlaneseq
    %v132 = vshrl.u32 %v131, 7
    %v133 = vsub.s32 1, %v132
    %v134 = vrot.slane %v55, %v133
    %v135 = vlaneseq
    %v136 = vshrl.u32 %v135, 7
    %v137 = vsub.s32 2, %v136
    %v138 = vrot.slane %v55, %v137
    %v139 = vlaneseq
    %v140 = vshrl.u32 %v139, 7
    %v141 = vsub.s32 3, %v140
    %v142 = vrot.slane %v55, %v141
    %v147 = vadd.f32 %v122, %v130
    %v148 = vadd.f32 %v123, %v134
    %v149 = vadd.f32 %v124, %v138
    %v150 = vadd.f32 %v125, %v142
    %151 = vmatprep.subr.mxu0 %v57
    %152 = vmatpush1.msra.mxu0 %v56
    %153 = vmatprep.subr.mxu0 %v61
    %154 = vmatpush1.msra.mxu0 %v60
    %155 = vmatprep.subr.mxu0 %v65
    %156 = vmatpush1.msra.mxu0 %v64
    %157 = vmatprep.subr.mxu0 %v69
    %158 = vmatpush1.msra.mxu0 %v68
    %159 = vmatprep.subr.mxu0 %v73
    %160 = vmatpush1.msra.mxu0 %v72
    %161 = vmatprep.subr.mxu0 %v77
    %162 = vmatpush1.msra.mxu0 %v76
    %163 = vmatprep.subr.mxu0 %v81
    %164 = vmatpush1.msra.mxu0 %v80
    %165 = vmatprep.subr.mxu0 %v85
    %166 = vmatpush1.msra.mxu0 %v84
    %167 = vmatprep.subr.mxu0 %v89
    %168 = vmatpush1.msra.mxu0 %v88
    %169 = vmatprep.subr.mxu0 %v93
    %170 = vmatpush1.msra.mxu0 %v92
    %171 = vmatprep.subr.mxu0 %v97
    %172 = vmatpush1.msra.mxu0 %v96
    %173 = vmatprep.subr.mxu0 %v101
    %174 = vmatpush1.msra.mxu0 %v100
    %175 = vmatprep.subr.mxu0 %v105
    %176 = vmatpush1.msra.mxu0 %v104
    %177 = vmatprep.subr.mxu0 %v109
    %178 = vmatpush1.msra.mxu0 %v108
    %179 = vmatprep.subr.mxu0 %v113
    %180 = vmatpush1.msra.mxu0 %v112
    %181 = vmatprep.subr.mxu0 %v117
    %182 = vmatpush1.msra.mxu0 %v116
    %183 = vmatprep.subr.mxu0 0.0
    %184 = vmatpush1.msra.mxu0 0.0
    %185 = vmatprep.subr.mxu0 0.0
    %186 = vmatpush1.msra.mxu0 0.0
    %187 = vmatprep.subr.mxu0 0.0
    %188 = vmatpush1.msra.mxu0 0.0
    %189 = vmatprep.subr.mxu0 0.0
    %190 = vmatpush1.msra.mxu0 0.0
    %191 = vmatprep.subr.mxu0 0.0
    %192 = vmatpush1.msra.mxu0 0.0
    %193 = vmatprep.subr.mxu0 0.0
    %194 = vmatpush1.msra.mxu0 0.0
    %195 = vmatprep.subr.mxu0 0.0
    %196 = vmatpush1.msra.mxu0 0.0
    %197 = vmatprep.subr.mxu0 0.0
    %198 = vmatpush1.msra.mxu0 0.0
    %199 = vmatprep.subr.mxu0 0.0
    %200 = vmatpush1.msra.mxu0 0.0
    %201 = vmatprep.subr.mxu0 0.0
    %202 = vmatpush1.msra.mxu0 0.0
    %203 = vmatprep.subr.mxu0 0.0
    %204 = vmatpush1.msra.mxu0 0.0
    %205 = vmatprep.subr.mxu0 0.0
    %206 = vmatpush1.msra.mxu0 0.0
    %207 = vmatprep.subr.mxu0 0.0
    %208 = vmatpush1.msra.mxu0 0.0
    %209 = vmatprep.subr.mxu0 0.0
    %210 = vmatpush1.msra.mxu0 0.0
    %211 = vmatprep.subr.mxu0 0.0
    %212 = vmatpush1.msra.mxu0 0.0
    %213 = vmatprep.subr.mxu0 0.0
    %214 = vmatpush1.msra.mxu0 0.0
    %215 = vmatprep.mubr.f32.mxu0 0.0
    %216 = vmatmul.mubr.f32.gmra.mrb[0].mxu0 %v120
    %v217 = vpop.f32.mrb[0].mxu0
    %v218 = vadd.f32 0.0, %v217
    %v219 = vpop.f32.mrb[0].mxu0
    %v220 = vadd.f32 0.0, %v219
    %221 = vdwg.mxu0
    %222 = vmatprep.subr.mxu0 %v59
    %223 = vmatpush1.msra.mxu0 %v58
    %224 = vmatprep.subr.mxu0 %v63
    %225 = vmatpush1.msra.mxu0 %v62
    %226 = vmatprep.subr.mxu0 %v67
    %227 = vmatpush1.msra.mxu0 %v66
    %228 = vmatprep.subr.mxu0 %v71
    %229 = vmatpush1.msra.mxu0 %v70
    %230 = vmatprep.subr.mxu0 %v75
    %231 = vmatpush1.msra.mxu0 %v74
    %232 = vmatprep.subr.mxu0 %v79
    %233 = vmatpush1.msra.mxu0 %v78
    %234 = vmatprep.subr.mxu0 %v83
    %235 = vmatpush1.msra.mxu0 %v82
    %236 = vmatprep.subr.mxu0 %v87
    %237 = vmatpush1.msra.mxu0 %v86
    %238 = vmatprep.subr.mxu0 %v91
    %239 = vmatpush1.msra.mxu0 %v90
    %240 = vmatprep.subr.mxu0 %v95
    %241 = vmatpush1.msra.mxu0 %v94
    %242 = vmatprep.subr.mxu0 %v99
    %243 = vmatpush1.msra.mxu0 %v98
    %244 = vmatprep.subr.mxu0 %v103
    %245 = vmatpush1.msra.mxu0 %v102
    %246 = vmatprep.subr.mxu0 %v107
    %247 = vmatpush1.msra.mxu0 %v106
    %248 = vmatprep.subr.mxu0 %v111
    %249 = vmatpush1.msra.mxu0 %v110
    %250 = vmatprep.subr.mxu0 %v115
    %251 = vmatpush1.msra.mxu0 %v114
    %252 = vmatprep.subr.mxu0 %v119
    %253 = vmatpush1.msra.mxu0 %v118
    %254 = vmatprep.subr.mxu0 0.0
    %255 = vmatpush1.msra.mxu0 0.0
    %256 = vmatprep.subr.mxu0 0.0
    %257 = vmatpush1.msra.mxu0 0.0
    %258 = vmatprep.subr.mxu0 0.0
    %259 = vmatpush1.msra.mxu0 0.0
    %260 = vmatprep.subr.mxu0 0.0
    %261 = vmatpush1.msra.mxu0 0.0
    %262 = vmatprep.subr.mxu0 0.0
    %263 = vmatpush1.msra.mxu0 0.0
    %264 = vmatprep.subr.mxu0 0.0
    %265 = vmatpush1.msra.mxu0 0.0
    %266 = vmatprep.subr.mxu0 0.0
    %267 = vmatpush1.msra.mxu0 0.0
    %268 = vmatprep.subr.mxu0 0.0
    %269 = vmatpush1.msra.mxu0 0.0
    %270 = vmatprep.subr.mxu0 0.0
    %271 = vmatpush1.msra.mxu0 0.0
    %272 = vmatprep.subr.mxu0 0.0
    %273 = vmatpush1.msra.mxu0 0.0
    %274 = vmatprep.subr.mxu0 0.0
    %275 = vmatpush1.msra.mxu0 0.0
    %276 = vmatprep.subr.mxu0 0.0
    %277 = vmatpush1.msra.mxu0 0.0
    %278 = vmatprep.subr.mxu0 0.0
    %279 = vmatpush1.msra.mxu0 0.0
    %280 = vmatprep.subr.mxu0 0.0
    %281 = vmatpush1.msra.mxu0 0.0
    %282 = vmatprep.subr.mxu0 0.0
    %283 = vmatpush1.msra.mxu0 0.0
    %284 = vmatprep.subr.mxu0 0.0
    %285 = vmatpush1.msra.mxu0 0.0
    %286 = vmatprep.mubr.f32.mxu0 0.0
    %287 = vmatmul.mubr.f32.gmra.mrb[0].mxu0 %v120
    %v288 = vpop.f32.mrb[0].mxu0
    %v289 = vadd.f32 0.0, %v288
    %v290 = vpop.f32.mrb[0].mxu0
    %v291 = vadd.f32 0.0, %v290
    %292 = vdwg.mxu0
    %v293 = vadd.f32 %v147, %v218
    %v294 = vadd.f32 %v148, %v220
    %v295 = vadd.f32 %v149, %v289
    %v296 = vadd.f32 %v150, %v291
    %v297 = vxor.u32 %v293, 2147483648
    %v298 = vmul.f32 %v297, 1.442695
    %v299 = vpow.pop %v298
    %v300 = vadd.f32 %v299, 1.0
    %v301 = vrcp.pop %v300
    %v302 = vmul.f32 1.0, %v301
    %v303 = vxor.u32 %v294, 2147483648
    %v304 = vmul.f32 %v303, 1.442695
    %v305 = vpow.pop %v304
    %v306 = vadd.f32 %v305, 1.0
    %v307 = vrcp.pop %v306
    %v308 = vmul.f32 1.0, %v307
    %v309 = vtanh.pop %v295
    %v310 = vxor.u32 %v296, 2147483648
    %v311 = vmul.f32 %v310, 1.442695
    %v312 = vpow.pop %v311
    %v313 = vadd.f32 %v312, 1.0
    %v314 = vrcp.pop %v313
    %v315 = vmul.f32 1.0, %v314
    %v316 = vmul.f32 %v308, %v121
    %v317 = vmul.f32 %v302, %v309
    %v318 = vadd.f32 %v316, %v317
    %v319 = vtanh.pop %v318
    %v320 = vmul.f32 %v315, %v319
    %s321 = scalar_lea.vmem [#allocation5], 32
    %v322 = vld [vmem:[%s321] sm:$0xff]
    %v323 = vld [vmem:[%s321 + $0x8] sm:$0xff]
    %v324 = vld [vmem:[%s321 + $0x10] sm:$0xff]
    %v325 = vld [vmem:[%s321 + $0x18] sm:$0xff]
    %v326 = vadd.f32 %v322, %v130
    %v327 = vadd.f32 %v323, %v134
    %v328 = vadd.f32 %v324, %v138
    %v329 = vadd.f32 %v325, %v142
    %330 = vmatprep.subr.mxu0 %v57
    %331 = vmatpush1.msra.mxu0 %v56
    %332 = vmatprep.subr.mxu0 %v61
    %333 = vmatpush1.msra.mxu0 %v60
    %334 = vmatprep.subr.mxu0 %v65
    %335 = vmatpush1.msra.mxu0 %v64
    %336 = vmatprep.subr.mxu0 %v69
    %337 = vmatpush1.msra.mxu0 %v68
    %338 = vmatprep.subr.mxu0 %v73
    %339 = vmatpush1.msra.mxu0 %v72
    %340 = vmatprep.subr.mxu0 %v77
    %341 = vmatpush1.msra.mxu0 %v76
    %342 = vmatprep.subr.mxu0 %v81
    %343 = vmatpush1.msra.mxu0 %v80
    %344 = vmatprep.subr.mxu0 %v85
    %345 = vmatpush1.msra.mxu0 %v84
    %346 = vmatprep.subr.mxu0 %v89
    %347 = vmatpush1.msra.mxu0 %v88
    %348 = vmatprep.subr.mxu0 %v93
    %349 = vmatpush1.msra.mxu0 %v92
    %350 = vmatprep.subr.mxu0 %v97
    %351 = vmatpush1.msra.mxu0 %v96
    %352 = vmatprep.subr.mxu0 %v101
    %353 = vmatpush1.msra.mxu0 %v100
    %354 = vmatprep.subr.mxu0 %v105
    %355 = vmatpush1.msra.mxu0 %v104
    %356 = vmatprep.subr.mxu0 %v109
    %357 = vmatpush1.msra.mxu0 %v108
    %358 = vmatprep.subr.mxu0 %v113
    %359 = vmatpush1.msra.mxu0 %v112
    %360 = vmatprep.subr.mxu0 %v117
    %361 = vmatpush1.msra.mxu0 %v116
    %362 = vmatprep.subr.mxu0 0.0
    %363 = vmatpush1.msra.mxu0 0.0
    %364 = vmatprep.subr.mxu0 0.0
    %365 = vmatpush1.msra.mxu0 0.0
    %366 = vmatprep.subr.mxu0 0.0
    %367 = vmatpush1.msra.mxu0 0.0
    %368 = vmatprep.subr.mxu0 0.0
    %369 = vmatpush1.msra.mxu0 0.0
    %370 = vmatprep.subr.mxu0 0.0
    %371 = vmatpush1.msra.mxu0 0.0
    %372 = vmatprep.subr.mxu0 0.0
    %373 = vmatpush1.msra.mxu0 0.0
    %374 = vmatprep.subr.mxu0 0.0
    %375 = vmatpush1.msra.mxu0 0.0
    %376 = vmatprep.subr.mxu0 0.0
    %377 = vmatpush1.msra.mxu0 0.0
    %378 = vmatprep.subr.mxu0 0.0
    %379 = vmatpush1.msra.mxu0 0.0
    %380 = vmatprep.subr.mxu0 0.0
    %381 = vmatpush1.msra.mxu0 0.0
    %382 = vmatprep.subr.mxu0 0.0
    %383 = vmatpush1.msra.mxu0 0.0
    %384 = vmatprep.subr.mxu0 0.0
    %385 = vmatpush1.msra.mxu0 0.0
    %386 = vmatprep.subr.mxu0 0.0
    %387 = vmatpush1.msra.mxu0 0.0
    %388 = vmatprep.subr.mxu0 0.0
    %389 = vmatpush1.msra.mxu0 0.0
    %390 = vmatprep.subr.mxu0 0.0
    %391 = vmatpush1.msra.mxu0 0.0
    %392 = vmatprep.subr.mxu0 0.0
    %393 = vmatpush1.msra.mxu0 0.0
    %394 = vmatprep.mubr.f32.mxu0 0.0
    %395 = vmatmul.mubr.f32.gmra.mrb[0].mxu0 %v320
    %v396 = vpop.f32.mrb[0].mxu0
    %v397 = vadd.f32 0.0, %v396
    %v398 = vpop.f32.mrb[0].mxu0
    %v399 = vadd.f32 0.0, %v398
    %400 = vdwg.mxu0
    %401 = vmatprep.subr.mxu0 %v59
    %402 = vmatpush1.msra.mxu0 %v58
    %403 = vmatprep.subr.mxu0 %v63
    %404 = vmatpush1.msra.mxu0 %v62
    %405 = vmatprep.subr.mxu0 %v67
    %406 = vmatpush1.msra.mxu0 %v66
    %407 = vmatprep.subr.mxu0 %v71
    %408 = vmatpush1.msra.mxu0 %v70
    %409 = vmatprep.subr.mxu0 %v75
    %410 = vmatpush1.msra.mxu0 %v74
    %411 = vmatprep.subr.mxu0 %v79
    %412 = vmatpush1.msra.mxu0 %v78
    %413 = vmatprep.subr.mxu0 %v83
    %414 = vmatpush1.msra.mxu0 %v82
    %415 = vmatprep.subr.mxu0 %v87
    %416 = vmatpush1.msra.mxu0 %v86
    %417 = vmatprep.subr.mxu0 %v91
    %418 = vmatpush1.msra.mxu0 %v90
    %419 = vmatprep.subr.mxu0 %v95
    %420 = vmatpush1.msra.mxu0 %v94
    %421 = vmatprep.subr.mxu0 %v99
    %422 = vmatpush1.msra.mxu0 %v98
    %423 = vmatprep.subr.mxu0 %v103
    %424 = vmatpush1.msra.mxu0 %v102
    %425 = vmatprep.subr.mxu0 %v107
    %426 = vmatpush1.msra.mxu0 %v106
    %427 = vmatprep.subr.mxu0 %v111
    %428 = vmatpush1.msra.mxu0 %v110
    %429 = vmatprep.subr.mxu0 %v115
    %430 = vmatpush1.msra.mxu0 %v114
    %431 = vmatprep.subr.mxu0 %v119
    %432 = vmatpush1.msra.mxu0 %v118
    %433 = vmatprep.subr.mxu0 0.0
    %434 = vmatpush1.msra.mxu0 0.0
    %435 = vmatprep.subr.mxu0 0.0
    %436 = vmatpush1.msra.mxu0 0.0
    %437 = vmatprep.subr.mxu0 0.0
    %438 = vmatpush1.msra.mxu0 0.0
    %439 = vmatprep.subr.mxu0 0.0
    %440 = vmatpush1.msra.mxu0 0.0
    %441 = vmatprep.subr.mxu0 0.0
    %442 = vmatpush1.msra.mxu0 0.0
    %443 = vmatprep.subr.mxu0 0.0
    %444 = vmatpush1.msra.mxu0 0.0
    %445 = vmatprep.subr.mxu0 0.0
    %446 = vmatpush1.msra.mxu0 0.0
    %447 = vmatprep.subr.mxu0 0.0
    %448 = vmatpush1.msra.mxu0 0.0
    %449 = vmatprep.subr.mxu0 0.0
    %450 = vmatpush1.msra.mxu0 0.0
    %451 = vmatprep.subr.mxu0 0.0
    %452 = vmatpush1.msra.mxu0 0.0
    %453 = vmatprep.subr.mxu0 0.0
    %454 = vmatpush1.msra.mxu0 0.0
    %455 = vmatprep.subr.mxu0 0.0
    %456 = vmatpush1.msra.mxu0 0.0
    %457 = vmatprep.subr.mxu0 0.0
    %458 = vmatpush1.msra.mxu0 0.0
    %459 = vmatprep.subr.mxu0 0.0
    %460 = vmatpush1.msra.mxu0 0.0
    %461 = vmatprep.subr.mxu0 0.0
    %462 = vmatpush1.msra.mxu0 0.0
    %463 = vmatprep.subr.mxu0 0.0
    %464 = vmatpush1.msra.mxu0 0.0
    %465 = vmatprep.mubr.f32.mxu0 0.0
    %466 = vmatmul.mubr.f32.gmra.mrb[0].mxu0 %v320
    %v467 = vpop.f32.mrb[0].mxu0
    %v468 = vadd.f32 0.0, %v467
    %v469 = vpop.f32.mrb[0].mxu0
    %v470 = vadd.f32 0.0, %v469
    %471 = vdwg.mxu0
    %v472 = vadd.f32 %v326, %v397
    %v473 = vadd.f32 %v327, %v399
    %v474 = vadd.f32 %v328, %v468
    %v475 = vadd.f32 %v329, %v470
    %v476 = vxor.u32 %v472, 2147483648
    %v477 = vmul.f32 %v476, 1.442695
    %v478 = vpow.pop %v477
    %v479 = vadd.f32 %v478, 1.0
    %v480 = vrcp.pop %v479
    %v481 = vmul.f32 1.0, %v480
    %v482 = vxor.u32 %v473, 2147483648
    %v483 = vmul.f32 %v482, 1.442695
    %v484 = vpow.pop %v483
    %v485 = vadd.f32 %v484, 1.0
    %v486 = vrcp.pop %v485
    %v487 = vmul.f32 1.0, %v486
    %v488 = vtanh.pop %v474
    %v489 = vxor.u32 %v475, 2147483648
    %v490 = vmul.f32 %v489, 1.442695
    %v491 = vpow.pop %v490
    %v492 = vadd.f32 %v491, 1.0
    %v493 = vrcp.pop %v492
    %v494 = vmul.f32 1.0, %v493
    %v495 = vmul.f32 %v487, %v318
    %v496 = vmul.f32 %v481, %v488
    %v497 = vadd.f32 %v495, %v496
    %v498 = vtanh.pop %v497
    %v499 = vmul.f32 %v494, %v498
    %s500 = scalar_lea.vmem [#allocation5], 64
    %v501 = vld [vmem:[%s500] sm:$0xff]
    %v502 = vld [vmem:[%s500 + $0x8] sm:$0xff]
    %v503 = vld [vmem:[%s500 + $0x10] sm:$0xff]
    %v504 = vld [vmem:[%s500 + $0x18] sm:$0xff]
    %v505 = vadd.f32 %v501, %v130
    %v506 = vadd.f32 %v502, %v134
    %v507 = vadd.f32 %v503, %v138
    %v508 = vadd.f32 %v504, %v142
    %509 = vmatprep.subr.mxu0 %v57
    %510 = vmatpush1.msra.mxu0 %v56
    %511 = vmatprep.subr.mxu0 %v61
    %512 = vmatpush1.msra.mxu0 %v60
    %513 = vmatprep.subr.mxu0 %v65
    %514 = vmatpush1.msra.mxu0 %v64
    %515 = vmatprep.subr.mxu0 %v69
    %516 = vmatpush1.msra.mxu0 %v68
    %517 = vmatprep.subr.mxu0 %v73
    %518 = vmatpush1.msra.mxu0 %v72
    %519 = vmatprep.subr.mxu0 %v77
    %520 = vmatpush1.msra.mxu0 %v76
    %521 = vmatprep.subr.mxu0 %v81
    %522 = vmatpush1.msra.mxu0 %v80
    %523 = vmatprep.subr.mxu0 %v85
    %524 = vmatpush1.msra.mxu0 %v84
    %525 = vmatprep.subr.mxu0 %v89
    %526 = vmatpush1.msra.mxu0 %v88
    %527 = vmatprep.subr.mxu0 %v93
    %528 = vmatpush1.msra.mxu0 %v92
    %529 = vmatprep.subr.mxu0 %v97
    %530 = vmatpush1.msra.mxu0 %v96
    %531 = vmatprep.subr.mxu0 %v101
    %532 = vmatpush1.msra.mxu0 %v100
    %533 = vmatprep.subr.mxu0 %v105
    %534 = vmatpush1.msra.mxu0 %v104
    %535 = vmatprep.subr.mxu0 %v109
    %536 = vmatpush1.msra.mxu0 %v108
    %537 = vmatprep.subr.mxu0 %v113
    %538 = vmatpush1.msra.mxu0 %v112
    %539 = vmatprep.subr.mxu0 %v117
    %540 = vmatpush1.msra.mxu0 %v116
    %541 = vmatprep.subr.mxu0 0.0
    %542 = vmatpush1.msra.mxu0 0.0
    %543 = vmatprep.subr.mxu0 0.0
    %544 = vmatpush1.msra.mxu0 0.0
    %545 = vmatprep.subr.mxu0 0.0
    %546 = vmatpush1.msra.mxu0 0.0
    %547 = vmatprep.subr.mxu0 0.0
    %548 = vmatpush1.msra.mxu0 0.0
    %549 = vmatprep.subr.mxu0 0.0
    %550 = vmatpush1.msra.mxu0 0.0
    %551 = vmatprep.subr.mxu0 0.0
    %552 = vmatpush1.msra.mxu0 0.0
    %553 = vmatprep.subr.mxu0 0.0
    %554 = vmatpush1.msra.mxu0 0.0
    %555 = vmatprep.subr.mxu0 0.0
    %556 = vmatpush1.msra.mxu0 0.0
    %557 = vmatprep.subr.mxu0 0.0
    %558 = vmatpush1.msra.mxu0 0.0
    %559 = vmatprep.subr.mxu0 0.0
    %560 = vmatpush1.msra.mxu0 0.0
    %561 = vmatprep.subr.mxu0 0.0
    %562 = vmatpush1.msra.mxu0 0.0
    %563 = vmatprep.subr.mxu0 0.0
    %564 = vmatpush1.msra.mxu0 0.0
    %565 = vmatprep.subr.mxu0 0.0
    %566 = vmatpush1.msra.mxu0 0.0
    %567 = vmatprep.subr.mxu0 0.0
    %568 = vmatpush1.msra.mxu0 0.0
    %569 = vmatprep.subr.mxu0 0.0
    %570 = vmatpush1.msra.mxu0 0.0
    %571 = vmatprep.subr.mxu0 0.0
    %572 = vmatpush1.msra.mxu0 0.0
    %573 = vmatprep.mubr.f32.mxu0 0.0
    %574 = vmatmul.mubr.f32.gmra.mrb[0].mxu0 %v499
    %v575 = vpop.f32.mrb[0].mxu0
    %v576 = vadd.f32 0.0, %v575
    %v577 = vpop.f32.mrb[0].mxu0
    %v578 = vadd.f32 0.0, %v577
    %579 = vdwg.mxu0
    %580 = vmatprep.subr.mxu0 %v59
    %581 = vmatpush1.msra.mxu0 %v58
    %582 = vmatprep.subr.mxu0 %v63
    %583 = vmatpush1.msra.mxu0 %v62
    %584 = vmatprep.subr.mxu0 %v67
    %585 = vmatpush1.msra.mxu0 %v66
    %586 = vmatprep.subr.mxu0 %v71
    %587 = vmatpush1.msra.mxu0 %v70
    %588 = vmatprep.subr.mxu0 %v75
    %589 = vmatpush1.msra.mxu0 %v74
    %590 = vmatprep.subr.mxu0 %v79
    %591 = vmatpush1.msra.mxu0 %v78
    %592 = vmatprep.subr.mxu0 %v83
    %593 = vmatpush1.msra.mxu0 %v82
    %594 = vmatprep.subr.mxu0 %v87
    %595 = vmatpush1.msra.mxu0 %v86
    %596 = vmatprep.subr.mxu0 %v91
    %597 = vmatpush1.msra.mxu0 %v90
    %598 = vmatprep.subr.mxu0 %v95
    %599 = vmatpush1.msra.mxu0 %v94
    %600 = vmatprep.subr.mxu0 %v99
    %601 = vmatpush1.msra.mxu0 %v98
    %602 = vmatprep.subr.mxu0 %v103
    %603 = vmatpush1.msra.mxu0 %v102
    %604 = vmatprep.subr.mxu0 %v107
    %605 = vmatpush1.msra.mxu0 %v106
    %606 = vmatprep.subr.mxu0 %v111
    %607 = vmatpush1.msra.mxu0 %v110
    %608 = vmatprep.subr.mxu0 %v115
    %609 = vmatpush1.msra.mxu0 %v114
    %610 = vmatprep.subr.mxu0 %v119
    %611 = vmatpush1.msra.mxu0 %v118
    %612 = vmatprep.subr.mxu0 0.0
    %613 = vmatpush1.msra.mxu0 0.0
    %614 = vmatprep.subr.mxu0 0.0
    %615 = vmatpush1.msra.mxu0 0.0
    %616 = vmatprep.subr.mxu0 0.0
    %617 = vmatpush1.msra.mxu0 0.0
    %618 = vmatprep.subr.mxu0 0.0
    %619 = vmatpush1.msra.mxu0 0.0
    %620 = vmatprep.subr.mxu0 0.0
    %621 = vmatpush1.msra.mxu0 0.0
    %622 = vmatprep.subr.mxu0 0.0
    %623 = vmatpush1.msra.mxu0 0.0
    %624 = vmatprep.subr.mxu0 0.0
    %625 = vmatpush1.msra.mxu0 0.0
    %626 = vmatprep.subr.mxu0 0.0
    %627 = vmatpush1.msra.mxu0 0.0
    %628 = vmatprep.subr.mxu0 0.0
    %629 = vmatpush1.msra.mxu0 0.0
    %630 = vmatprep.subr.mxu0 0.0
    %631 = vmatpush1.msra.mxu0 0.0
    %632 = vmatprep.subr.mxu0 0.0
    %633 = vmatpush1.msra.mxu0 0.0
    %634 = vmatprep.subr.mxu0 0.0
    %635 = vmatpush1.msra.mxu0 0.0
    %636 = vmatprep.subr.mxu0 0.0
    %637 = vmatpush1.msra.mxu0 0.0
    %638 = vmatprep.subr.mxu0 0.0
    %639 = vmatpush1.msra.mxu0 0.0
    %640 = vmatprep.subr.mxu0 0.0
    %641 = vmatpush1.msra.mxu0 0.0
    %642 = vmatprep.subr.mxu0 0.0
    %643 = vmatpush1.msra.mxu0 0.0
    %644 = vmatprep.mubr.f32.mxu0 0.0
    %645 = vmatmul.mubr.f32.gmra.mrb[0].mxu0 %v499
    %v646 = vpop.f32.mrb[0].mxu0
    %v647 = vadd.f32 0.0, %v646
    %v648 = vpop.f32.mrb[0].mxu0
    %v649 = vadd.f32 0.0, %v648
    %650 = vdwg.mxu0
    %v651 = vadd.f32 %v505, %v576
    %v652 = vadd.f32 %v506, %v578
    %v653 = vadd.f32 %v507, %v647
    %v654 = vadd.f32 %v508, %v649
    %v655 = vxor.u32 %v651, 2147483648
    %v656 = vmul.f32 %v655, 1.442695
    %v657 = vpow.pop %v656
    %v658 = vadd.f32 %v657, 1.0
    %v659 = vrcp.pop %v658
    %v660 = vmul.f32 1.0, %v659
    %v661 = vxor.u32 %v652, 2147483648
    %v662 = vmul.f32 %v661, 1.442695
    %v663 = vpow.pop %v662
    %v664 = vadd.f32 %v663, 1.0
    %v665 = vrcp.pop %v664
    %v666 = vmul.f32 1.0, %v665
    %v667 = vtanh.pop %v653
    %v668 = vxor.u32 %v654, 2147483648
    %v669 = vmul.f32 %v668, 1.442695
    %v670 = vpow.pop %v669
    %v671 = vadd.f32 %v670, 1.0
    %v672 = vrcp.pop %v671
    %v673 = vmul.f32 1.0, %v672
    %v674 = vmul.f32 %v666, %v497
    %v675 = vmul.f32 %v660, %v667
    %v676 = vadd.f32 %v674, %v675
    %v677 = vtanh.pop %v676
    %v678 = vmul.f32 %v673, %v677
    %s679 = scalar_lea.vmem [#allocation5], 96
    %v680 = vld [vmem:[%s679] sm:$0xff]
    %v681 = vld [vmem:[%s679 + $0x8] sm:$0xff]
    %v682 = vld [vmem:[%s679 + $0x10] sm:$0xff]
    %v683 = vld [vmem:[%s679 + $0x18] sm:$0xff]
    %v684 = vadd.f32 %v680, %v130
    %v685 = vadd.f32 %v681, %v134
    %v686 = vadd.f32 %v682, %v138
    %v687 = vadd.f32 %v683, %v142
    %688 = vmatprep.subr.mxu0 %v57
    %689 = vmatpush1.msra.mxu0 %v56
    %690 = vmatprep.subr.mxu0 %v61
    %691 = vmatpush1.msra.mxu0 %v60
    %692 = vmatprep.subr.mxu0 %v65
    %693 = vmatpush1.msra.mxu0 %v64
    %694 = vmatprep.subr.mxu0 %v69
    %695 = vmatpush1.msra.mxu0 %v68
    %696 = vmatprep.subr.mxu0 %v73
    %697 = vmatpush1.msra.mxu0 %v72
    %698 = vmatprep.subr.mxu0 %v77
    %699 = vmatpush1.msra.mxu0 %v76
    %700 = vmatprep.subr.mxu0 %v81
    %701 = vmatpush1.msra.mxu0 %v80
    %702 = vmatprep.subr.mxu0 %v85
    %703 = vmatpush1.msra.mxu0 %v84
    %704 = vmatprep.subr.mxu0 %v89
    %705 = vmatpush1.msra.mxu0 %v88
    %706 = vmatprep.subr.mxu0 %v93
    %707 = vmatpush1.msra.mxu0 %v92
    %708 = vmatprep.subr.mxu0 %v97
    %709 = vmatpush1.msra.mxu0 %v96
    %710 = vmatprep.subr.mxu0 %v101
    %711 = vmatpush1.msra.mxu0 %v100
    %712 = vmatprep.subr.mxu0 %v105
    %713 = vmatpush1.msra.mxu0 %v104
    %714 = vmatprep.subr.mxu0 %v109
    %715 = vmatpush1.msra.mxu0 %v108
    %716 = vmatprep.subr.mxu0 %v113
    %717 = vmatpush1.msra.mxu0 %v112
    %718 = vmatprep.subr.mxu0 %v117
    %719 = vmatpush1.msra.mxu0 %v116
    %720 = vmatprep.subr.mxu0 0.0
    %721 = vmatpush1.msra.mxu0 0.0
    %722 = vmatprep.subr.mxu0 0.0
    %723 = vmatpush1.msra.mxu0 0.0
    %724 = vmatprep.subr.mxu0 0.0
    %725 = vmatpush1.msra.mxu0 0.0
    %726 = vmatprep.subr.mxu0 0.0
    %727 = vmatpush1.msra.mxu0 0.0
    %728 = vmatprep.subr.mxu0 0.0
    %729 = vmatpush1.msra.mxu0 0.0
    %730 = vmatprep.subr.mxu0 0.0
    %731 = vmatpush1.msra.mxu0 0.0
    %732 = vmatprep.subr.mxu0 0.0
    %733 = vmatpush1.msra.mxu0 0.0
    %734 = vmatprep.subr.mxu0 0.0
    %735 = vmatpush1.msra.mxu0 0.0
    %736 = vmatprep.subr.mxu0 0.0
    %737 = vmatpush1.msra.mxu0 0.0
    %738 = vmatprep.subr.mxu0 0.0
    %739 = vmatpush1.msra.mxu0 0.0
    %740 = vmatprep.subr.mxu0 0.0
    %741 = vmatpush1.msra.mxu0 0.0
    %742 = vmatprep.subr.mxu0 0.0
    %743 = vmatpush1.msra.mxu0 0.0
    %744 = vmatprep.subr.mxu0 0.0
    %745 = vmatpush1.msra.mxu0 0.0
    %746 = vmatprep.subr.mxu0 0.0
    %747 = vmatpush1.msra.mxu0 0.0
    %748 = vmatprep.subr.mxu0 0.0
    %749 = vmatpush1.msra.mxu0 0.0
    %750 = vmatprep.subr.mxu0 0.0
    %751 = vmatpush1.msra.mxu0 0.0
    %752 = vmatprep.mubr.f32.mxu0 0.0
    %753 = vmatmul.mubr.f32.gmra.mrb[0].mxu0 %v678
    %v754 = vpop.f32.mrb[0].mxu0
    %v755 = vadd.f32 0.0, %v754
    %v756 = vpop.f32.mrb[0].mxu0
    %v757 = vadd.f32 0.0, %v756
    %758 = vdwg.mxu0
    %759 = vmatprep.subr.mxu0 %v59
    %760 = vmatpush1.msra.mxu0 %v58
    %761 = vmatprep.subr.mxu0 %v63
    %762 = vmatpush1.msra.mxu0 %v62
    %763 = vmatprep.subr.mxu0 %v67
    %764 = vmatpush1.msra.mxu0 %v66
    %765 = vmatprep.subr.mxu0 %v71
    %766 = vmatpush1.msra.mxu0 %v70
    %767 = vmatprep.subr.mxu0 %v75
    %768 = vmatpush1.msra.mxu0 %v74
    %769 = vmatprep.subr.mxu0 %v79
    %770 = vmatpush1.msra.mxu0 %v78
    %771 = vmatprep.subr.mxu0 %v83
    %772 = vmatpush1.msra.mxu0 %v82
    %773 = vmatprep.subr.mxu0 %v87
    %774 = vmatpush1.msra.mxu0 %v86
    %775 = vmatprep.subr.mxu0 %v91
    %776 = vmatpush1.msra.mxu0 %v90
    %777 = vmatprep.subr.mxu0 %v95
    %778 = vmatpush1.msra.mxu0 %v94
    %779 = vmatprep.subr.mxu0 %v99
    %780 = vmatpush1.msra.mxu0 %v98
    %781 = vmatprep.subr.mxu0 %v103
    %782 = vmatpush1.msra.mxu0 %v102
    %783 = vmatprep.subr.mxu0 %v107
    %784 = vmatpush1.msra.mxu0 %v106
    %785 = vmatprep.subr.mxu0 %v111
    %786 = vmatpush1.msra.mxu0 %v110
    %787 = vmatprep.subr.mxu0 %v115
    %788 = vmatpush1.msra.mxu0 %v114
    %789 = vmatprep.subr.mxu0 %v119
    %790 = vmatpush1.msra.mxu0 %v118
    %791 = vmatprep.subr.mxu0 0.0
    %792 = vmatpush1.msra.mxu0 0.0
    %793 = vmatprep.subr.mxu0 0.0
    %794 = vmatpush1.msra.mxu0 0.0
    %795 = vmatprep.subr.mxu0 0.0
    %796 = vmatpush1.msra.mxu0 0.0
    %797 = vmatprep.subr.mxu0 0.0
    %798 = vmatpush1.msra.mxu0 0.0
    %799 = vmatprep.subr.mxu0 0.0
    %800 = vmatpush1.msra.mxu0 0.0
    %801 = vmatprep.subr.mxu0 0.0
    %802 = vmatpush1.msra.mxu0 0.0
    %803 = vmatprep.subr.mxu0 0.0
    %804 = vmatpush1.msra.mxu0 0.0
    %805 = vmatprep.subr.mxu0 0.0
    %806 = vmatpush1.msra.mxu0 0.0
    %807 = vmatprep.subr.mxu0 0.0
    %808 = vmatpush1.msra.mxu0 0.0
    %809 = vmatprep.subr.mxu0 0.0
    %810 = vmatpush1.msra.mxu0 0.0
    %811 = vmatprep.subr.mxu0 0.0
    %812 = vmatpush1.msra.mxu0 0.0
    %813 = vmatprep.subr.mxu0 0.0
    %814 = vmatpush1.msra.mxu0 0.0
    %815 = vmatprep.subr.mxu0 0.0
    %816 = vmatpush1.msra.mxu0 0.0
    %817 = vmatprep.subr.mxu0 0.0
    %818 = vmatpush1.msra.mxu0 0.0
    %819 = vmatprep.subr.mxu0 0.0
    %820 = vmatpush1.msra.mxu0 0.0
    %821 = vmatprep.subr.mxu0 0.0
    %822 = vmatpush1.msra.mxu0 0.0
    %823 = vmatprep.mubr.f32.mxu0 0.0
    %824 = vmatmul.mubr.f32.gmra.mrb[0].mxu0 %v678
    %v825 = vpop.f32.mrb[0].mxu0
    %v826 = vadd.f32 0.0, %v825
    %v827 = vpop.f32.mrb[0].mxu0
    %v828 = vadd.f32 0.0, %v827
    %829 = vdwg.mxu0
    %v830 = vadd.f32 %v684, %v755
    %v831 = vadd.f32 %v685, %v757
    %v832 = vadd.f32 %v686, %v826
    %v833 = vadd.f32 %v687, %v828
    %v834 = vxor.u32 %v830, 2147483648
    %v835 = vmul.f32 %v834, 1.442695
    %v836 = vpow.pop %v835
    %v837 = vadd.f32 %v836, 1.0
    %v838 = vrcp.pop %v837
    %v839 = vmul.f32 1.0, %v838
    %v840 = vxor.u32 %v831, 2147483648
    %v841 = vmul.f32 %v840, 1.442695
    %v842 = vpow.pop %v841
    %v843 = vadd.f32 %v842, 1.0
    %v844 = vrcp.pop %v843
    %v845 = vmul.f32 1.0, %v844
    %v846 = vtanh.pop %v832
    %v847 = vxor.u32 %v833, 2147483648
    %v848 = vmul.f32 %v847, 1.442695
    %v849 = vpow.pop %v848
    %v850 = vadd.f32 %v849, 1.0
    %v851 = vrcp.pop %v850
    %v852 = vmul.f32 1.0, %v851
    %v853 = vmul.f32 %v845, %v676
    %v854 = vmul.f32 %v839, %v846
    %v855 = vadd.f32 %v853, %v854
    %v856 = vtanh.pop %v855
    %v857 = vmul.f32 %v852, %v856
    %s858 = scalar_lea.vmem [#allocation5], 128
    %v859 = vld [vmem:[%s858] sm:$0xff]
    %v860 = vld [vmem:[%s858 + $0x8] sm:$0xff]
    %v861 = vld [vmem:[%s858 + $0x10] sm:$0xff]
    %v862 = vld [vmem:[%s858 + $0x18] sm:$0xff]
    %v863 = vadd.f32 %v859, %v130
    %v864 = vadd.f32 %v860, %v134
    %v865 = vadd.f32 %v861, %v138
    %v866 = vadd.f32 %v862, %v142
    %867 = vmatprep.subr.mxu0 %v57
    %868 = vmatpush1.msra.mxu0 %v56
    %869 = vmatprep.subr.mxu0 %v61
    %870 = vmatpush1.msra.mxu0 %v60
    %871 = vmatprep.subr.mxu0 %v65
    %872 = vmatpush1.msra.mxu0 %v64
    %873 = vmatprep.subr.mxu0 %v69
    %874 = vmatpush1.msra.mxu0 %v68
    %875 = vmatprep.subr.mxu0 %v73
    %876 = vmatpush1.msra.mxu0 %v72
    %877 = vmatprep.subr.mxu0 %v77
    %878 = vmatpush1.msra.mxu0 %v76
    %879 = vmatprep.subr.mxu0 %v81
    %880 = vmatpush1.msra.mxu0 %v80
    %881 = vmatprep.subr.mxu0 %v85
    %882 = vmatpush1.msra.mxu0 %v84
    %883 = vmatprep.subr.mxu0 %v89
    %884 = vmatpush1.msra.mxu0 %v88
    %885 = vmatprep.subr.mxu0 %v93
    %886 = vmatpush1.msra.mxu0 %v92
    %887 = vmatprep.subr.mxu0 %v97
    %888 = vmatpush1.msra.mxu0 %v96
    %889 = vmatprep.subr.mxu0 %v101
    %890 = vmatpush1.msra.mxu0 %v100
    %891 = vmatprep.subr.mxu0 %v105
    %892 = vmatpush1.msra.mxu0 %v104
    %893 = vmatprep.subr.mxu0 %v109
    %894 = vmatpush1.msra.mxu0 %v108
    %895 = vmatprep.subr.mxu0 %v113
    %896 = vmatpush1.msra.mxu0 %v112
    %897 = vmatprep.subr.mxu0 %v117
    %898 = vmatpush1.msra.mxu0 %v116
    %899 = vmatprep.subr.mxu0 0.0
    %900 = vmatpush1.msra.mxu0 0.0
    %901 = vmatprep.subr.mxu0 0.0
    %902 = vmatpush1.msra.mxu0 0.0
    %903 = vmatprep.subr.mxu0 0.0
    %904 = vmatpush1.msra.mxu0 0.0
    %905 = vmatprep.subr.mxu0 0.0
    %906 = vmatpush1.msra.mxu0 0.0
    %907 = vmatprep.subr.mxu0 0.0
    %908 = vmatpush1.msra.mxu0 0.0
    %909 = vmatprep.subr.mxu0 0.0
    %910 = vmatpush1.msra.mxu0 0.0
    %911 = vmatprep.subr.mxu0 0.0
    %912 = vmatpush1.msra.mxu0 0.0
    %913 = vmatprep.subr.mxu0 0.0
    %914 = vmatpush1.msra.mxu0 0.0
    %915 = vmatprep.subr.mxu0 0.0
    %916 = vmatpush1.msra.mxu0 0.0
    %917 = vmatprep.subr.mxu0 0.0
    %918 = vmatpush1.msra.mxu0 0.0
    %919 = vmatprep.subr.mxu0 0.0
    %920 = vmatpush1.msra.mxu0 0.0
    %921 = vmatprep.subr.mxu0 0.0
    %922 = vmatpush1.msra.mxu0 0.0
    %923 = vmatprep.subr.mxu0 0.0
    %924 = vmatpush1.msra.mxu0 0.0
    %925 = vmatprep.subr.mxu0 0.0
    %926 = vmatpush1.msra.mxu0 0.0
    %927 = vmatprep.subr.mxu0 0.0
    %928 = vmatpush1.msra.mxu0 0.0
    %929 = vmatprep.subr.mxu0 0.0
    %930 = vmatpush1.msra.mxu0 0.0
    %931 = vmatprep.mubr.f32.mxu0 0.0
    %932 = vmatmul.mubr.f32.gmra.mrb[0].mxu0 %v857
    %v933 = vpop.f32.mrb[0].mxu0
    %v934 = vadd.f32 0.0, %v933
    %v935 = vpop.f32.mrb[0].mxu0
    %v936 = vadd.f32 0.0, %v935
    %937 = vdwg.mxu0
    %938 = vmatprep.subr.mxu0 %v59
    %939 = vmatpush1.msra.mxu0 %v58
    %940 = vmatprep.subr.mxu0 %v63
    %941 = vmatpush1.msra.mxu0 %v62
    %942 = vmatprep.subr.mxu0 %v67
    %943 = vmatpush1.msra.mxu0 %v66
    %944 = vmatprep.subr.mxu0 %v71
    %945 = vmatpush1.msra.mxu0 %v70
    %946 = vmatprep.subr.mxu0 %v75
    %947 = vmatpush1.msra.mxu0 %v74
    %948 = vmatprep.subr.mxu0 %v79
    %949 = vmatpush1.msra.mxu0 %v78
    %950 = vmatprep.subr.mxu0 %v83
    %951 = vmatpush1.msra.mxu0 %v82
    %952 = vmatprep.subr.mxu0 %v87
    %953 = vmatpush1.msra.mxu0 %v86
    %954 = vmatprep.subr.mxu0 %v91
    %955 = vmatpush1.msra.mxu0 %v90
    %956 = vmatprep.subr.mxu0 %v95
    %957 = vmatpush1.msra.mxu0 %v94
    %958 = vmatprep.subr.mxu0 %v99
    %959 = vmatpush1.msra.mxu0 %v98
    %960 = vmatprep.subr.mxu0 %v103
    %961 = vmatpush1.msra.mxu0 %v102
    %962 = vmatprep.subr.mxu0 %v107
    %963 = vmatpush1.msra.mxu0 %v106
    %964 = vmatprep.subr.mxu0 %v111
    %965 = vmatpush1.msra.mxu0 %v110
    %966 = vmatprep.subr.mxu0 %v115
    %967 = vmatpush1.msra.mxu0 %v114
    %968 = vmatprep.subr.mxu0 %v119
    %969 = vmatpush1.msra.mxu0 %v118
    %970 = vmatprep.subr.mxu0 0.0
    %971 = vmatpush1.msra.mxu0 0.0
    %972 = vmatprep.subr.mxu0 0.0
    %973 = vmatpush1.msra.mxu0 0.0
    %974 = vmatprep.subr.mxu0 0.0
    %975 = vmatpush1.msra.mxu0 0.0
    %976 = vmatprep.subr.mxu0 0.0
    %977 = vmatpush1.msra.mxu0 0.0
    %978 = vmatprep.subr.mxu0 0.0
    %979 = vmatpush1.msra.mxu0 0.0
    %980 = vmatprep.subr.mxu0 0.0
    %981 = vmatpush1.msra.mxu0 0.0
    %982 = vmatprep.subr.mxu0 0.0
    %983 = vmatpush1.msra.mxu0 0.0
    %984 = vmatprep.subr.mxu0 0.0
    %985 = vmatpush1.msra.mxu0 0.0
    %986 = vmatprep.subr.mxu0 0.0
    %987 = vmatpush1.msra.mxu0 0.0
    %988 = vmatprep.subr.mxu0 0.0
    %989 = vmatpush1.msra.mxu0 0.0
    %990 = vmatprep.subr.mxu0 0.0
    %991 = vmatpush1.msra.mxu0 0.0
    %992 = vmatprep.subr.mxu0 0.0
    %993 = vmatpush1.msra.mxu0 0.0
    %994 = vmatprep.subr.mxu0 0.0
    %995 = vmatpush1.msra.mxu0 0.0
    %996 = vmatprep.subr.mxu0 0.0
    %997 = vmatpush1.msra.mxu0 0.0
    %998 = vmatprep.subr.mxu0 0.0
    %999 = vmatpush1.msra.mxu0 0.0
    %1000 = vmatprep.subr.mxu0 0.0
    %1001 = vmatpush1.msra.mxu0 0.0
    %1002 = vmatprep.mubr.f32.mxu0 0.0
    %1003 = vmatmul.mubr.f32.gmra.mrb[0].mxu0 %v857
    %v1004 = vpop.f32.mrb[0].mxu0
    %v1005 = vadd.f32 0.0, %v1004
    %v1006 = vpop.f32.mrb[0].mxu0
    %v1007 = vadd.f32 0.0, %v1006
    %1008 = vdwg.mxu0
    %v1009 = vadd.f32 %v863, %v934
    %v1010 = vadd.f32 %v864, %v936
    %v1011 = vadd.f32 %v865, %v1005
    %v1012 = vadd.f32 %v866, %v1007
    %v1013 = vxor.u32 %v1009, 2147483648
    %v1014 = vmul.f32 %v1013, 1.442695
    %v1015 = vpow.pop %v1014
    %v1016 = vadd.f32 %v1015, 1.0
    %v1017 = vrcp.pop %v1016
    %v1018 = vmul.f32 1.0, %v1017
    %v1019 = vxor.u32 %v1010, 2147483648
    %v1020 = vmul.f32 %v1019, 1.442695
    %v1021 = vpow.pop %v1020
    %v1022 = vadd.f32 %v1021, 1.0
    %v1023 = vrcp.pop %v1022
    %v1024 = vmul.f32 1.0, %v1023
    %v1025 = vtanh.pop %v1011
    %v1026 = vxor.u32 %v1012, 2147483648
    %v1027 = vmul.f32 %v1026, 1.442695
    %v1028 = vpow.pop %v1027
    %v1029 = vadd.f32 %v1028, 1.0
    %v1030 = vrcp.pop %v1029
    %v1031 = vmul.f32 1.0, %v1030
    %v1032 = vmul.f32 %v1024, %v855
    %v1033 = vmul.f32 %v1018, %v1025
    %v1034 = vadd.f32 %v1032, %v1033
    %v1035 = vtanh.pop %v1034
    %v1036 = vmul.f32 %v1031, %v1035
    %s1037 = scalar_lea.vmem [#allocation5], 160
    %v1038 = vld [vmem:[%s1037] sm:$0xff]
    %v1039 = vld [vmem:[%s1037 + $0x8] sm:$0xff]
    %v1040 = vld [vmem:[%s1037 + $0x10] sm:$0xff]
    %v1041 = vld [vmem:[%s1037 + $0x18] sm:$0xff]
    %v1042 = vadd.f32 %v1038, %v130
    %v1043 = vadd.f32 %v1039, %v134
    %v1044 = vadd.f32 %v1040, %v138
    %v1045 = vadd.f32 %v1041, %v142
    %1046 = vmatprep.subr.mxu0 %v57
    %1047 = vmatpush1.msra.mxu0 %v56
    %1048 = vmatprep.subr.mxu0 %v61
    %1049 = vmatpush1.msra.mxu0 %v60
    %1050 = vmatprep.subr.mxu0 %v65
    %1051 = vmatpush1.msra.mxu0 %v64
    %1052 = vmatprep.subr.mxu0 %v69
    %1053 = vmatpush1.msra.mxu0 %v68
    %1054 = vmatprep.subr.mxu0 %v73
    %1055 = vmatpush1.msra.mxu0 %v72
    %1056 = vmatprep.subr.mxu0 %v77
    %1057 = vmatpush1.msra.mxu0 %v76
    %1058 = vmatprep.subr.mxu0 %v81
    %1059 = vmatpush1.msra.mxu0 %v80
    %1060 = vmatprep.subr.mxu0 %v85
    %1061 = vmatpush1.msra.mxu0 %v84
    %1062 = vmatprep.subr.mxu0 %v89
    %1063 = vmatpush1.msra.mxu0 %v88
    %1064 = vmatprep.subr.mxu0 %v93
    %1065 = vmatpush1.msra.mxu0 %v92
    %1066 = vmatprep.subr.mxu0 %v97
    %1067 = vmatpush1.msra.mxu0 %v96
    %1068 = vmatprep.subr.mxu0 %v101
    %1069 = vmatpush1.msra.mxu0 %v100
    %1070 = vmatprep.subr.mxu0 %v105
    %1071 = vmatpush1.msra.mxu0 %v104
    %1072 = vmatprep.subr.mxu0 %v109
    %1073 = vmatpush1.msra.mxu0 %v108
    %1074 = vmatprep.subr.mxu0 %v113
    %1075 = vmatpush1.msra.mxu0 %v112
    %1076 = vmatprep.subr.mxu0 %v117
    %1077 = vmatpush1.msra.mxu0 %v116
    %1078 = vmatprep.subr.mxu0 0.0
    %1079 = vmatpush1.msra.mxu0 0.0
    %1080 = vmatprep.subr.mxu0 0.0
    %1081 = vmatpush1.msra.mxu0 0.0
    %1082 = vmatprep.subr.mxu0 0.0
    %1083 = vmatpush1.msra.mxu0 0.0
    %1084 = vmatprep.subr.mxu0 0.0
    %1085 = vmatpush1.msra.mxu0 0.0
    %1086 = vmatprep.subr.mxu0 0.0
    %1087 = vmatpush1.msra.mxu0 0.0
    %1088 = vmatprep.subr.mxu0 0.0
    %1089 = vmatpush1.msra.mxu0 0.0
    %1090 = vmatprep.subr.mxu0 0.0
    %1091 = vmatpush1.msra.mxu0 0.0
    %1092 = vmatprep.subr.mxu0 0.0
    %1093 = vmatpush1.msra.mxu0 0.0
    %1094 = vmatprep.subr.mxu0 0.0
    %1095 = vmatpush1.msra.mxu0 0.0
    %1096 = vmatprep.subr.mxu0 0.0
    %1097 = vmatpush1.msra.mxu0 0.0
    %1098 = vmatprep.subr.mxu0 0.0
    %1099 = vmatpush1.msra.mxu0 0.0
    %1100 = vmatprep.subr.mxu0 0.0
    %1101 = vmatpush1.msra.mxu0 0.0
    %1102 = vmatprep.subr.mxu0 0.0
    %1103 = vmatpush1.msra.mxu0 0.0
    %1104 = vmatprep.subr.mxu0 0.0
    %1105 = vmatpush1.msra.mxu0 0.0
    %1106 = vmatprep.subr.mxu0 0.0
    %1107 = vmatpush1.msra.mxu0 0.0
    %1108 = vmatprep.subr.mxu0 0.0
    %1109 = vmatpush1.msra.mxu0 0.0
    %1110 = vmatprep.mubr.f32.mxu0 0.0
    %1111 = vmatmul.mubr.f32.gmra.mrb[0].mxu0 %v1036
    %v1112 = vpop.f32.mrb[0].mxu0
    %v1113 = vadd.f32 0.0, %v1112
    %v1114 = vpop.f32.mrb[0].mxu0
    %v1115 = vadd.f32 0.0, %v1114
    %1116 = vdwg.mxu0
    %1117 = vmatprep.subr.mxu0 %v59
    %1118 = vmatpush1.msra.mxu0 %v58
    %1119 = vmatprep.subr.mxu0 %v63
    %1120 = vmatpush1.msra.mxu0 %v62
    %1121 = vmatprep.subr.mxu0 %v67
    %1122 = vmatpush1.msra.mxu0 %v66
    %1123 = vmatprep.subr.mxu0 %v71
    %1124 = vmatpush1.msra.mxu0 %v70
    %1125 = vmatprep.subr.mxu0 %v75
    %1126 = vmatpush1.msra.mxu0 %v74
    %1127 = vmatprep.subr.mxu0 %v79
    %1128 = vmatpush1.msra.mxu0 %v78
    %1129 = vmatprep.subr.mxu0 %v83
    %1130 = vmatpush1.msra.mxu0 %v82
    %1131 = vmatprep.subr.mxu0 %v87
    %1132 = vmatpush1.msra.mxu0 %v86
    %1133 = vmatprep.subr.mxu0 %v91
    %1134 = vmatpush1.msra.mxu0 %v90
    %1135 = vmatprep.subr.mxu0 %v95
    %1136 = vmatpush1.msra.mxu0 %v94
    %1137 = vmatprep.subr.mxu0 %v99
    %1138 = vmatpush1.msra.mxu0 %v98
    %1139 = vmatprep.subr.mxu0 %v103
    %1140 = vmatpush1.msra.mxu0 %v102
    %1141 = vmatprep.subr.mxu0 %v107
    %1142 = vmatpush1.msra.mxu0 %v106
    %1143 = vmatprep.subr.mxu0 %v111
    %1144 = vmatpush1.msra.mxu0 %v110
    %1145 = vmatprep.subr.mxu0 %v115
    %1146 = vmatpush1.msra.mxu0 %v114
    %1147 = vmatprep.subr.mxu0 %v119
    %1148 = vmatpush1.msra.mxu0 %v118
    %1149 = vmatprep.subr.mxu0 0.0
    %1150 = vmatpush1.msra.mxu0 0.0
    %1151 = vmatprep.subr.mxu0 0.0
    %1152 = vmatpush1.msra.mxu0 0.0
    %1153 = vmatprep.subr.mxu0 0.0
    %1154 = vmatpush1.msra.mxu0 0.0
    %1155 = vmatprep.subr.mxu0 0.0
    %1156 = vmatpush1.msra.mxu0 0.0
    %1157 = vmatprep.subr.mxu0 0.0
    %1158 = vmatpush1.msra.mxu0 0.0
    %1159 = vmatprep.subr.mxu0 0.0
    %1160 = vmatpush1.msra.mxu0 0.0
    %1161 = vmatprep.subr.mxu0 0.0
    %1162 = vmatpush1.msra.mxu0 0.0
    %1163 = vmatprep.subr.mxu0 0.0
    %1164 = vmatpush1.msra.mxu0 0.0
    %1165 = vmatprep.subr.mxu0 0.0
    %1166 = vmatpush1.msra.mxu0 0.0
    %1167 = vmatprep.subr.mxu0 0.0
    %1168 = vmatpush1.msra.mxu0 0.0
    %1169 = vmatprep.subr.mxu0 0.0
    %1170 = vmatpush1.msra.mxu0 0.0
    %1171 = vmatprep.subr.mxu0 0.0
    %1172 = vmatpush1.msra.mxu0 0.0
    %1173 = vmatprep.subr.mxu0 0.0
    %1174 = vmatpush1.msra.mxu0 0.0
    %1175 = vmatprep.subr.mxu0 0.0
    %1176 = vmatpush1.msra.mxu0 0.0
    %1177 = vmatprep.subr.mxu0 0.0
    %1178 = vmatpush1.msra.mxu0 0.0
    %1179 = vmatprep.subr.mxu0 0.0
    %1180 = vmatpush1.msra.mxu0 0.0
    %1181 = vmatprep.mubr.f32.mxu0 0.0
    %1182 = vmatmul.mubr.f32.gmra.mrb[0].mxu0 %v1036
    %v1183 = vpop.f32.mrb[0].mxu0
    %v1184 = vadd.f32 0.0, %v1183
    %v1185 = vpop.f32.mrb[0].mxu0
    %v1186 = vadd.f32 0.0, %v1185
    %1187 = vdwg.mxu0
    %v1188 = vadd.f32 %v1042, %v1113
    %v1189 = vadd.f32 %v1043, %v1115
    %v1190 = vadd.f32 %v1044, %v1184
    %v1191 = vadd.f32 %v1045, %v1186
    %v1192 = vxor.u32 %v1188, 2147483648
    %v1193 = vmul.f32 %v1192, 1.442695
    %v1194 = vpow.pop %v1193
    %v1195 = vadd.f32 %v1194, 1.0
    %v1196 = vrcp.pop %v1195
    %v1197 = vmul.f32 1.0, %v1196
    %v1198 = vxor.u32 %v1189, 2147483648
    %v1199 = vmul.f32 %v1198, 1.442695
    %v1200 = vpow.pop %v1199
    %v1201 = vadd.f32 %v1200, 1.0
    %v1202 = vrcp.pop %v1201
    %v1203 = vmul.f32 1.0, %v1202
    %v1204 = vtanh.pop %v1190
    %v1205 = vxor.u32 %v1191, 2147483648
    %v1206 = vmul.f32 %v1205, 1.442695
    %v1207 = vpow.pop %v1206
    %v1208 = vadd.f32 %v1207, 1.0
    %v1209 = vrcp.pop %v1208
    %v1210 = vmul.f32 1.0, %v1209
    %v1211 = vmul.f32 %v1203, %v1034
    %v1212 = vmul.f32 %v1197, %v1204
    %v1213 = vadd.f32 %v1211, %v1212
    %v1214 = vtanh.pop %v1213
    %v1215 = vmul.f32 %v1210, %v1214
    %s1216 = scalar_lea.vmem [#allocation5], 192
    %v1217 = vld [vmem:[%s1216] sm:$0xff]
    %v1218 = vld [vmem:[%s1216 + $0x8] sm:$0xff]
    %v1219 = vld [vmem:[%s1216 + $0x10] sm:$0xff]
    %v1220 = vld [vmem:[%s1216 + $0x18] sm:$0xff]
    %v1221 = vadd.f32 %v1217, %v130
    %v1222 = vadd.f32 %v1218, %v134
    %v1223 = vadd.f32 %v1219, %v138
    %v1224 = vadd.f32 %v1220, %v142
    %1225 = vmatprep.subr.mxu0 %v57
    %1226 = vmatpush1.msra.mxu0 %v56
    %1227 = vmatprep.subr.mxu0 %v61
    %1228 = vmatpush1.msra.mxu0 %v60
    %1229 = vmatprep.subr.mxu0 %v65
    %1230 = vmatpush1.msra.mxu0 %v64
    %1231 = vmatprep.subr.mxu0 %v69
    %1232 = vmatpush1.msra.mxu0 %v68
    %1233 = vmatprep.subr.mxu0 %v73
    %1234 = vmatpush1.msra.mxu0 %v72
    %1235 = vmatprep.subr.mxu0 %v77
    %1236 = vmatpush1.msra.mxu0 %v76
    %1237 = vmatprep.subr.mxu0 %v81
    %1238 = vmatpush1.msra.mxu0 %v80
    %1239 = vmatprep.subr.mxu0 %v85
    %1240 = vmatpush1.msra.mxu0 %v84
    %1241 = vmatprep.subr.mxu0 %v89
    %1242 = vmatpush1.msra.mxu0 %v88
    %1243 = vmatprep.subr.mxu0 %v93
    %1244 = vmatpush1.msra.mxu0 %v92
    %1245 = vmatprep.subr.mxu0 %v97
    %1246 = vmatpush1.msra.mxu0 %v96
    %1247 = vmatprep.subr.mxu0 %v101
    %1248 = vmatpush1.msra.mxu0 %v100
    %1249 = vmatprep.subr.mxu0 %v105
    %1250 = vmatpush1.msra.mxu0 %v104
    %1251 = vmatprep.subr.mxu0 %v109
    %1252 = vmatpush1.msra.mxu0 %v108
    %1253 = vmatprep.subr.mxu0 %v113
    %1254 = vmatpush1.msra.mxu0 %v112
    %1255 = vmatprep.subr.mxu0 %v117
    %1256 = vmatpush1.msra.mxu0 %v116
    %1257 = vmatprep.subr.mxu0 0.0
    %1258 = vmatpush1.msra.mxu0 0.0
    %1259 = vmatprep.subr.mxu0 0.0
    %1260 = vmatpush1.msra.mxu0 0.0
    %1261 = vmatprep.subr.mxu0 0.0
    %1262 = vmatpush1.msra.mxu0 0.0
    %1263 = vmatprep.subr.mxu0 0.0
    %1264 = vmatpush1.msra.mxu0 0.0
    %1265 = vmatprep.subr.mxu0 0.0
    %1266 = vmatpush1.msra.mxu0 0.0
    %1267 = vmatprep.subr.mxu0 0.0
    %1268 = vmatpush1.msra.mxu0 0.0
    %1269 = vmatprep.subr.mxu0 0.0
    %1270 = vmatpush1.msra.mxu0 0.0
    %1271 = vmatprep.subr.mxu0 0.0
    %1272 = vmatpush1.msra.mxu0 0.0
    %1273 = vmatprep.subr.mxu0 0.0
    %1274 = vmatpush1.msra.mxu0 0.0
    %1275 = vmatprep.subr.mxu0 0.0
    %1276 = vmatpush1.msra.mxu0 0.0
    %1277 = vmatprep.subr.mxu0 0.0
    %1278 = vmatpush1.msra.mxu0 0.0
    %1279 = vmatprep.subr.mxu0 0.0
    %1280 = vmatpush1.msra.mxu0 0.0
    %1281 = vmatprep.subr.mxu0 0.0
    %1282 = vmatpush1.msra.mxu0 0.0
    %1283 = vmatprep.subr.mxu0 0.0
    %1284 = vmatpush1.msra.mxu0 0.0
    %1285 = vmatprep.subr.mxu0 0.0
    %1286 = vmatpush1.msra.mxu0 0.0
    %1287 = vmatprep.subr.mxu0 0.0
    %1288 = vmatpush1.msra.mxu0 0.0
    %1289 = vmatprep.mubr.f32.mxu0 0.0
    %1290 = vmatmul.mubr.f32.gmra.mrb[0].mxu0 %v1215
    %v1291 = vpop.f32.mrb[0].mxu0
    %v1292 = vadd.f32 0.0, %v1291
    %v1293 = vpop.f32.mrb[0].mxu0
    %v1294 = vadd.f32 0.0, %v1293
    %1295 = vdwg.mxu0
    %1296 = vmatprep.subr.mxu0 %v59
    %1297 = vmatpush1.msra.mxu0 %v58
    %1298 = vmatprep.subr.mxu0 %v63
    %1299 = vmatpush1.msra.mxu0 %v62
    %1300 = vmatprep.subr.mxu0 %v67
    %1301 = vmatpush1.msra.mxu0 %v66
    %1302 = vmatprep.subr.mxu0 %v71
    %1303 = vmatpush1.msra.mxu0 %v70
    %1304 = vmatprep.subr.mxu0 %v75
    %1305 = vmatpush1.msra.mxu0 %v74
    %1306 = vmatprep.subr.mxu0 %v79
    %1307 = vmatpush1.msra.mxu0 %v78
    %1308 = vmatprep.subr.mxu0 %v83
    %1309 = vmatpush1.msra.mxu0 %v82
    %1310 = vmatprep.subr.mxu0 %v87
    %1311 = vmatpush1.msra.mxu0 %v86
    %1312 = vmatprep.subr.mxu0 %v91
    %1313 = vmatpush1.msra.mxu0 %v90
    %1314 = vmatprep.subr.mxu0 %v95
    %1315 = vmatpush1.msra.mxu0 %v94
    %1316 = vmatprep.subr.mxu0 %v99
    %1317 = vmatpush1.msra.mxu0 %v98
    %1318 = vmatprep.subr.mxu0 %v103
    %1319 = vmatpush1.msra.mxu0 %v102
    %1320 = vmatprep.subr.mxu0 %v107
    %1321 = vmatpush1.msra.mxu0 %v106
    %1322 = vmatprep.subr.mxu0 %v111
    %1323 = vmatpush1.msra.mxu0 %v110
    %1324 = vmatprep.subr.mxu0 %v115
    %1325 = vmatpush1.msra.mxu0 %v114
    %1326 = vmatprep.subr.mxu0 %v119
    %1327 = vmatpush1.msra.mxu0 %v118
    %1328 = vmatprep.subr.mxu0 0.0
    %1329 = vmatpush1.msra.mxu0 0.0
    %1330 = vmatprep.subr.mxu0 0.0
    %1331 = vmatpush1.msra.mxu0 0.0
    %1332 = vmatprep.subr.mxu0 0.0
    %1333 = vmatpush1.msra.mxu0 0.0
    %1334 = vmatprep.subr.mxu0 0.0
    %1335 = vmatpush1.msra.mxu0 0.0
    %1336 = vmatprep.subr.mxu0 0.0
    %1337 = vmatpush1.msra.mxu0 0.0
    %1338 = vmatprep.subr.mxu0 0.0
    %1339 = vmatpush1.msra.mxu0 0.0
    %1340 = vmatprep.subr.mxu0 0.0
    %1341 = vmatpush1.msra.mxu0 0.0
    %1342 = vmatprep.subr.mxu0 0.0
    %1343 = vmatpush1.msra.mxu0 0.0
    %1344 = vmatprep.subr.mxu0 0.0
    %1345 = vmatpush1.msra.mxu0 0.0
    %1346 = vmatprep.subr.mxu0 0.0
    %1347 = vmatpush1.msra.mxu0 0.0
    %1348 = vmatprep.subr.mxu0 0.0
    %1349 = vmatpush1.msra.mxu0 0.0
    %1350 = vmatprep.subr.mxu0 0.0
    %1351 = vmatpush1.msra.mxu0 0.0
    %1352 = vmatprep.subr.mxu0 0.0
    %1353 = vmatpush1.msra.mxu0 0.0
    %1354 = vmatprep.subr.mxu0 0.0
    %1355 = vmatpush1.msra.mxu0 0.0
    %1356 = vmatprep.subr.mxu0 0.0
    %1357 = vmatpush1.msra.mxu0 0.0
    %1358 = vmatprep.subr.mxu0 0.0
    %1359 = vmatpush1.msra.mxu0 0.0
    %1360 = vmatprep.mubr.f32.mxu0 0.0
    %1361 = vmatmul.mubr.f32.gmra.mrb[0].mxu0 %v1215
    %v1362 = vpop.f32.mrb[0].mxu0
    %v1363 = vadd.f32 0.0, %v1362
    %v1364 = vpop.f32.mrb[0].mxu0
    %v1365 = vadd.f32 0.0, %v1364
    %1366 = vdwg.mxu0
    %v1367 = vadd.f32 %v1221, %v1292
    %v1368 = vadd.f32 %v1222, %v1294
    %v1369 = vadd.f32 %v1223, %v1363
    %v1370 = vadd.f32 %v1224, %v1365
    %v1371 = vxor.u32 %v1367, 2147483648
    %v1372 = vmul.f32 %v1371, 1.442695
    %v1373 = vpow.pop %v1372
    %v1374 = vadd.f32 %v1373, 1.0
    %v1375 = vrcp.pop %v1374
    %v1376 = vmul.f32 1.0, %v1375
    %v1377 = vxor.u32 %v1368, 2147483648
    %v1378 = vmul.f32 %v1377, 1.442695
    %v1379 = vpow.pop %v1378
    %v1380 = vadd.f32 %v1379, 1.0
    %v1381 = vrcp.pop %v1380
    %v1382 = vmul.f32 1.0, %v1381
    %v1383 = vtanh.pop %v1369
    %v1384 = vxor.u32 %v1370, 2147483648
    %v1385 = vmul.f32 %v1384, 1.442695
    %v1386 = vpow.pop %v1385
    %v1387 = vadd.f32 %v1386, 1.0
    %v1388 = vrcp.pop %v1387
    %v1389 = vmul.f32 1.0, %v1388
    %v1390 = vmul.f32 %v1382, %v1213
    %v1391 = vmul.f32 %v1376, %v1383
    %v1392 = vadd.f32 %v1390, %v1391
    %v1393 = vtanh.pop %v1392
    %v1394 = vmul.f32 %v1389, %v1393
    %s1395 = scalar_lea.vmem [#allocation5], 224
    %v1396 = vld [vmem:[%s1395] sm:$0xff]
    %v1397 = vld [vmem:[%s1395 + $0x8] sm:$0xff]
    %v1398 = vld [vmem:[%s1395 + $0x10] sm:$0xff]
    %v1399 = vld [vmem:[%s1395 + $0x18] sm:$0xff]
    %v1400 = vadd.f32 %v1396, %v130
    %v1401 = vadd.f32 %v1397, %v134
    %v1402 = vadd.f32 %v1398, %v138
    %v1403 = vadd.f32 %v1399, %v142
    %1404 = vmatprep.subr.mxu0 %v57
    %1405 = vmatpush1.msra.mxu0 %v56
    %1406 = vmatprep.subr.mxu0 %v61
    %1407 = vmatpush1.msra.mxu0 %v60
    %1408 = vmatprep.subr.mxu0 %v65
    %1409 = vmatpush1.msra.mxu0 %v64
    %1410 = vmatprep.subr.mxu0 %v69
    %1411 = vmatpush1.msra.mxu0 %v68
    %1412 = vmatprep.subr.mxu0 %v73
    %1413 = vmatpush1.msra.mxu0 %v72
    %1414 = vmatprep.subr.mxu0 %v77
    %1415 = vmatpush1.msra.mxu0 %v76
    %1416 = vmatprep.subr.mxu0 %v81
    %1417 = vmatpush1.msra.mxu0 %v80
    %1418 = vmatprep.subr.mxu0 %v85
    %1419 = vmatpush1.msra.mxu0 %v84
    %1420 = vmatprep.subr.mxu0 %v89
    %1421 = vmatpush1.msra.mxu0 %v88
    %1422 = vmatprep.subr.mxu0 %v93
    %1423 = vmatpush1.msra.mxu0 %v92
    %1424 = vmatprep.subr.mxu0 %v97
    %1425 = vmatpush1.msra.mxu0 %v96
    %1426 = vmatprep.subr.mxu0 %v101
    %1427 = vmatpush1.msra.mxu0 %v100
    %1428 = vmatprep.subr.mxu0 %v105
    %1429 = vmatpush1.msra.mxu0 %v104
    %1430 = vmatprep.subr.mxu0 %v109
    %1431 = vmatpush1.msra.mxu0 %v108
    %1432 = vmatprep.subr.mxu0 %v113
    %1433 = vmatpush1.msra.mxu0 %v112
    %1434 = vmatprep.subr.mxu0 %v117
    %1435 = vmatpush1.msra.mxu0 %v116
    %1436 = vmatprep.subr.mxu0 0.0
    %1437 = vmatpush1.msra.mxu0 0.0
    %1438 = vmatprep.subr.mxu0 0.0
    %1439 = vmatpush1.msra.mxu0 0.0
    %1440 = vmatprep.subr.mxu0 0.0
    %1441 = vmatpush1.msra.mxu0 0.0
    %1442 = vmatprep.subr.mxu0 0.0
    %1443 = vmatpush1.msra.mxu0 0.0
    %1444 = vmatprep.subr.mxu0 0.0
    %1445 = vmatpush1.msra.mxu0 0.0
    %1446 = vmatprep.subr.mxu0 0.0
    %1447 = vmatpush1.msra.mxu0 0.0
    %1448 = vmatprep.subr.mxu0 0.0
    %1449 = vmatpush1.msra.mxu0 0.0
    %1450 = vmatprep.subr.mxu0 0.0
    %1451 = vmatpush1.msra.mxu0 0.0
    %1452 = vmatprep.subr.mxu0 0.0
    %1453 = vmatpush1.msra.mxu0 0.0
    %1454 = vmatprep.subr.mxu0 0.0
    %1455 = vmatpush1.msra.mxu0 0.0
    %1456 = vmatprep.subr.mxu0 0.0
    %1457 = vmatpush1.msra.mxu0 0.0
    %1458 = vmatprep.subr.mxu0 0.0
    %1459 = vmatpush1.msra.mxu0 0.0
    %1460 = vmatprep.subr.mxu0 0.0
    %1461 = vmatpush1.msra.mxu0 0.0
    %1462 = vmatprep.subr.mxu0 0.0
    %1463 = vmatpush1.msra.mxu0 0.0
    %1464 = vmatprep.subr.mxu0 0.0
    %1465 = vmatpush1.msra.mxu0 0.0
    %1466 = vmatprep.subr.mxu0 0.0
    %1467 = vmatpush1.msra.mxu0 0.0
    %1468 = vmatprep.mubr.f32.mxu0 0.0
    %1469 = vmatmul.mubr.f32.gmra.mrb[0].mxu0 %v1394
    %v1470 = vpop.f32.mrb[0].mxu0
    %v1471 = vadd.f32 0.0, %v1470
    %v1472 = vpop.f32.mrb[0].mxu0
    %v1473 = vadd.f32 0.0, %v1472
    %1474 = vdwg.mxu0
    %1475 = vmatprep.subr.mxu0 %v59
    %1476 = vmatpush1.msra.mxu0 %v58
    %1477 = vmatprep.subr.mxu0 %v63
    %1478 = vmatpush1.msra.mxu0 %v62
    %1479 = vmatprep.subr.mxu0 %v67
    %1480 = vmatpush1.msra.mxu0 %v66
    %1481 = vmatprep.subr.mxu0 %v71
    %1482 = vmatpush1.msra.mxu0 %v70
    %1483 = vmatprep.subr.mxu0 %v75
    %1484 = vmatpush1.msra.mxu0 %v74
    %1485 = vmatprep.subr.mxu0 %v79
    %1486 = vmatpush1.msra.mxu0 %v78
    %1487 = vmatprep.subr.mxu0 %v83
    %1488 = vmatpush1.msra.mxu0 %v82
    %1489 = vmatprep.subr.mxu0 %v87
    %1490 = vmatpush1.msra.mxu0 %v86
    %1491 = vmatprep.subr.mxu0 %v91
    %1492 = vmatpush1.msra.mxu0 %v90
    %1493 = vmatprep.subr.mxu0 %v95
    %1494 = vmatpush1.msra.mxu0 %v94
    %1495 = vmatprep.subr.mxu0 %v99
    %1496 = vmatpush1.msra.mxu0 %v98
    %1497 = vmatprep.subr.mxu0 %v103
    %1498 = vmatpush1.msra.mxu0 %v102
    %1499 = vmatprep.subr.mxu0 %v107
    %1500 = vmatpush1.msra.mxu0 %v106
    %1501 = vmatprep.subr.mxu0 %v111
    %1502 = vmatpush1.msra.mxu0 %v110
    %1503 = vmatprep.subr.mxu0 %v115
    %1504 = vmatpush1.msra.mxu0 %v114
    %1505 = vmatprep.subr.mxu0 %v119
    %1506 = vmatpush1.msra.mxu0 %v118
    %1507 = vmatprep.subr.mxu0 0.0
    %1508 = vmatpush1.msra.mxu0 0.0
    %1509 = vmatprep.subr.mxu0 0.0
    %1510 = vmatpush1.msra.mxu0 0.0
    %1511 = vmatprep.subr.mxu0 0.0
    %1512 = vmatpush1.msra.mxu0 0.0
    %1513 = vmatprep.subr.mxu0 0.0
    %1514 = vmatpush1.msra.mxu0 0.0
    %1515 = vmatprep.subr.mxu0 0.0
    %1516 = vmatpush1.msra.mxu0 0.0
    %1517 = vmatprep.subr.mxu0 0.0
    %1518 = vmatpush1.msra.mxu0 0.0
    %1519 = vmatprep.subr.mxu0 0.0
    %1520 = vmatpush1.msra.mxu0 0.0
    %1521 = vmatprep.subr.mxu0 0.0
    %1522 = vmatpush1.msra.mxu0 0.0
    %1523 = vmatprep.subr.mxu0 0.0
    %1524 = vmatpush1.msra.mxu0 0.0
    %1525 = vmatprep.subr.mxu0 0.0
    %1526 = vmatpush1.msra.mxu0 0.0
    %1527 = vmatprep.subr.mxu0 0.0
    %1528 = vmatpush1.msra.mxu0 0.0
    %1529 = vmatprep.subr.mxu0 0.0
    %1530 = vmatpush1.msra.mxu0 0.0
    %1531 = vmatprep.subr.mxu0 0.0
    %1532 = vmatpush1.msra.mxu0 0.0
    %1533 = vmatprep.subr.mxu0 0.0
    %1534 = vmatpush1.msra.mxu0 0.0
    %1535 = vmatprep.subr.mxu0 0.0
    %1536 = vmatpush1.msra.mxu0 0.0
    %1537 = vmatprep.subr.mxu0 0.0
    %1538 = vmatpush1.msra.mxu0 0.0
    %1539 = vmatprep.mubr.f32.mxu0 0.0
    %1540 = vmatmul.mubr.f32.gmra.mrb[0].mxu0 %v1394
    %v1541 = vpop.f32.mrb[0].mxu0
    %v1542 = vadd.f32 0.0, %v1541
    %v1543 = vpop.f32.mrb[0].mxu0
    %v1544 = vadd.f32 0.0, %v1543
    %1545 = vdwg.mxu0
    %v1546 = vadd.f32 %v1400, %v1471
    %v1547 = vadd.f32 %v1401, %v1473
    %v1548 = vadd.f32 %v1402, %v1542
    %v1549 = vadd.f32 %v1403, %v1544
    %v1550 = vxor.u32 %v1546, 2147483648
    %v1551 = vmul.f32 %v1550, 1.442695
    %v1552 = vpow.pop %v1551
    %v1553 = vadd.f32 %v1552, 1.0
    %v1554 = vrcp.pop %v1553
    %v1555 = vmul.f32 1.0, %v1554
    %v1556 = vxor.u32 %v1547, 2147483648
    %v1557 = vmul.f32 %v1556, 1.442695
    %v1558 = vpow.pop %v1557
    %v1559 = vadd.f32 %v1558, 1.0
    %v1560 = vrcp.pop %v1559
    %v1561 = vmul.f32 1.0, %v1560
    %v1562 = vtanh.pop %v1548
    %v1563 = vxor.u32 %v1549, 2147483648
    %v1564 = vmul.f32 %v1563, 1.442695
    %v1565 = vpow.pop %v1564
    %v1566 = vadd.f32 %v1565, 1.0
    %v1567 = vrcp.pop %v1566
    %v1568 = vmul.f32 1.0, %v1567
    %v1569 = vmul.f32 %v1561, %v1392
    %v1570 = vmul.f32 %v1555, %v1562
    %v1571 = vadd.f32 %v1569, %v1570
    %v1572 = vtanh.pop %v1571
    %v1573 = vmul.f32 %v1568, %v1572
    %1574 = vst [vmem:[#allocation2] sm:$0xff] %v1573
    %1575 = vst [vmem:[#allocation3] sm:$0xff] %v1571
    // Predicated region
    $region34: #{tpu_custom_call.1} parent=1 // pred_check
      %p1576 = pneg %p49
    $region35: #{tpu_custom_call.1} parent=1 // pred_check_branch
      %1578 = sbr.rel (%p1576) target = $region37
    $region36: #{tpu_custom_call.1} parent=1 // pred_region
      %v1579 = vld [vmem:[%s3] sm:$0x1]
      %v1581 = vlaneseq
      %v1582 = vshrl.u32 %v1581, 7
      %v1583 = vsub.s32 0, %v1582
      %v1584 = vrot.slane %v1579, %v1583
      %v1586 = vmul.f32 %v1573, %v1584
      %1587 = vadd.xlane.f32.xlu0 %v1586
      %v1588 = vpop.xlane.xlu0 %1587
      %s1589 = sld [smem:[#allocation4]]
      %v1590 = vstv %s1589
      %v1591 = vadd.f32 %v1588, %v1590
      %v1592 = vxor.u32 %v1591, 2147483648
      %v1593 = vmul.f32 %v1592, 1.442695
      %v1594 = vpow.pop %v1593
      %v1595 = vadd.f32 %v1594, 1.0
      %v1596 = vrcp.pop %v1595
      %v1597 = vmul.f32 1.0, %v1596
      %vm1598 = vcmask 7168
      %1599 = vst.msk [vmem:[%s5] sm:$0xff] %vm1598, %v1597
    $region37: #{tpu_custom_call.1} parent=1 // pred_fallthru
      _
    // Predicated region
    $region38: #{tpu_custom_call.1} parent=1 // pred_check
      _
    $region39: #{tpu_custom_call.1} parent=1 // pred_check_branch
      %1601 = sbr.rel (0) target = $region41
    $region40: #{tpu_custom_call.1} parent=1 // pred_region
      _
    $region41: #{tpu_custom_call.1} parent=1 // pred_fallthru
      _
    // Predicated region
    $region42: #{tpu_custom_call.1} parent=1 // pred_check
      _
    $region43: #{tpu_custom_call.1} parent=1 // pred_check_branch
      %1603 = sbr.rel (0) target = $region45
    $region44: #{tpu_custom_call.1} parent=1 // pred_region
      _
    $region45: #{tpu_custom_call.1} parent=1 // pred_fallthru
      _
    %1604 = vsyncpa [#allocation6], 1
    %1605 = vsyncpa [#allocation8], 1

// kernel: tpu_custom_call.1
$region0: #{tpu_custom_call.1}
  #allocation0 [shape = 'u32[]', space=smem, size = 0x4, offset = 0x4, fixed_abs, tag = 'smem constant byte address 0x4 - core index']
  #allocation1 [shape = 'u32[144,128]{1,0:T(1,128)}', space=vmem, size = 0x12000, scoped, tag = 'internal scratch']
  #allocation2 [shape = 'f32[8,128]{1,0:T(8,128)}', space=vmem, size = 0x1000, scoped, tag = 'scratch operand']
  #allocation3 [shape = 'f32[8,128]{1,0:T(8,128)}', space=vmem, size = 0x1000, scoped, tag = 'scratch operand']
  #allocation4 [shape = 'f32[1,1]{1,0:T(1,128)S(6)}', space=smem, size = 0x200, scoped, tag = 'scoped memory for tpu_custom_call.1']
  %s0 = inlined_call_operand.hbm [shape: f32[8,8,512], index: 0, kind: input, shape index: {}]
  %s1 = inlined_call_operand.hbm [shape: f32[128,512], index: 1, kind: input, shape index: {}]
  %s2 = inlined_call_operand.vmem [shape: f32[1,512], index: 2, kind: input, shape index: {}]
  %s3 = inlined_call_operand.vmem [shape: f32[1,128], index: 3, kind: input, shape index: {}]
  %s4 = inlined_call_operand.<no memory space> [shape: f32[1,1], index: 4, kind: input, shape index: {}]
  %s5 = inlined_call_operand.vmem [shape: f32[8,1], index: 5, kind: output, shape index: {}]
  %s6 = sld [smem:[#allocation0]]
  $region46: #{tpu_custom_call.1} parent=0
    _
  %s8 = ssub.s32 1, %s6
  %s9 = scalar_select 0, %s8, %s6
  %10 = sst [smem:[#allocation4]] %s4
  $region1: #{tpu_custom_call.1} parent=0
    #allocation5 [shape = 'u8[131072]{0}', space=vmem, size = 0x20000, scoped, tag = 'input window, operand 0, single buffered']
    #allocation6 [shape = 's32[1]{0}', space=sflag, size = 0x4, scoped, tag = 'scoped memory for tpu_custom_call.1']
    #allocation7 [shape = 'u8[262144]{0}', space=vmem, size = 0x40000, scoped, tag = 'input window, operand 1, single buffered']
    #allocation8 [shape = 's32[1]{0}', space=sflag, size = 0x4, scoped, tag = 'scoped memory for tpu_custom_call.1']
    %11 = vsyncpa [#allocation6], 0
    %12 = vsyncpa [#allocation8], 0
    // Predicated region
    $region2: #{tpu_custom_call.1} parent=1 // pred_check
      _
    $region3: #{tpu_custom_call.1} parent=1 // pred_check_branch
      %14 = sbr.rel (0) target = $region5
    $region4: #{tpu_custom_call.1} parent=1 // pred_region
      %s16 = ssub.s32 4096, 4096
      %17 = vsyncadd [#allocation6], %s16
      %s18 = sshll.u32 [#allocation5], 4
      %s19 = int_to_ptr.vmem [resolvable:$true] %s18
      %24 = dma.hbm_to_vmem [thread:$0]  %s0, 4096, %s19, [#allocation6], 512, 512, 32
    $region5: #{tpu_custom_call.1} parent=1 // pred_fallthru
      _
    // Predicated region
    $region6: #{tpu_custom_call.1} parent=1 // pred_check
      _
    $region7: #{tpu_custom_call.1} parent=1 // pred_check_branch
      %26 = sbr.rel (0) target = $region9
    $region8: #{tpu_custom_call.1} parent=1 // pred_region
      %s28 = ssub.s32 8192, 8192
      %29 = vsyncadd [#allocation8], %s28
      %s30 = sshll.u32 [#allocation7], 4
      %s31 = int_to_ptr.vmem [resolvable:$true] %s30
      %36 = dma.hbm_to_vmem [thread:$0]  %s1, 8192, %s31, [#allocation8], 512, 512, 32
    $region9: #{tpu_custom_call.1} parent=1 // pred_fallthru
      _
    // Predicated region
    $region10: #{tpu_custom_call.1} parent=1 // pred_check
      _
    $region11: #{tpu_custom_call.1} parent=1 // pred_check_branch
      %38 = sbr.rel (0) target = $region13
    $region12: #{tpu_custom_call.1} parent=1 // pred_region
      _
    $region13: #{tpu_custom_call.1} parent=1 // pred_fallthru
      _
    // Predicated region
    $region14: #{tpu_custom_call.1} parent=1 // pred_check
      _
    $region15: #{tpu_custom_call.1} parent=1 // pred_check_branch
      %40 = sbr.rel (0) target = $region17
    $region16: #{tpu_custom_call.1} parent=1 // pred_region
      _
    $region17: #{tpu_custom_call.1} parent=1 // pred_fallthru
      _
    // Predicated region
    $region18: #{tpu_custom_call.1} parent=1 // pred_check
      _
    $region19: #{tpu_custom_call.1} parent=1 // pred_check_branch
      %42 = sbr.rel (0) target = $region21
    $region20: #{tpu_custom_call.1} parent=1 // pred_region
      _
    $region21: #{tpu_custom_call.1} parent=1 // pred_fallthru
      _
    // Predicated region
    $region22: #{tpu_custom_call.1} parent=1 // pred_check
      _
    $region23: #{tpu_custom_call.1} parent=1 // pred_check_branch
      %44 = sbr.rel (0) target = $region25
    $region24: #{tpu_custom_call.1} parent=1 // pred_region
      %45 = dma.done [#allocation6], 4096
    $region25: #{tpu_custom_call.1} parent=1 // pred_fallthru
      _
    // Predicated region
    $region26: #{tpu_custom_call.1} parent=1 // pred_check
      _
    $region27: #{tpu_custom_call.1} parent=1 // pred_check_branch
      %47 = sbr.rel (0) target = $region29
    $region28: #{tpu_custom_call.1} parent=1 // pred_region
      %48 = dma.done [#allocation8], 8192
    $region29: #{tpu_custom_call.1} parent=1 // pred_fallthru
      _
    %p49 = scmp.eq.s32.totalorder 0, 0
    // Predicated region
    $region30: #{tpu_custom_call.1} parent=1 // pred_check
      %p50 = pneg %p49
    $region31: #{tpu_custom_call.1} parent=1 // pred_check_branch
      %52 = sbr.rel (%p50) target = $region33
    $region32: #{tpu_custom_call.1} parent=1 // pred_region
      %53 = vst [vmem:[#allocation2] sm:$0xff] 0.0
      %54 = vst [vmem:[#allocation3] sm:$0xff] 0.0
    $region33: #{tpu_custom_call.1} parent=1 // pred_fallthru
      _
    %v55 = vld [vmem:[%s2] sm:$0xf]
    %v56 = vld [vmem:[#allocation7] sm:$0xff]
    %v57 = vld [vmem:[#allocation7 + $0x8] sm:$0xff]
    %v58 = vld [vmem:[#allocation7 + $0x10] sm:$0xff]
    %v59 = vld [vmem:[#allocation7 + $0x18] sm:$0xff]
    %v60 = vld [vmem:[#allocation7 + $0x20] sm:$0xff]
    %v61 = vld [vmem:[#allocation7 + $0x28] sm:$0xff]
    %v62 = vld [vmem:[#allocation7 + $0x30] sm:$0xff]
    %v63 = vld [vmem:[#allocation7 + $0x38] sm:$0xff]
    %v64 = vld [vmem:[#allocation7 + $0x40] sm:$0xff]
    %v65 = vld [vmem:[#allocation7 + $0x48] sm:$0xff]
    %v66 = vld [vmem:[#allocation7 + $0x50] sm:$0xff]
    %v67 = vld [vmem:[#allocation7 + $0x58] sm:$0xff]
    %v68 = vld [vmem:[#allocation7 + $0x60] sm:$0xff]
    %v69 = vld [vmem:[#allocation7 + $0x68] sm:$0xff]
    %v70 = vld [vmem:[#allocation7 + $0x70] sm:$0xff]
    %v71 = vld [vmem:[#allocation7 + $0x78] sm:$0xff]
    %v72 = vld [vmem:[#allocation7 + $0x80] sm:$0xff]
    %v73 = vld [vmem:[#allocation7 + $0x88] sm:$0xff]
    %v74 = vld [vmem:[#allocation7 + $0x90] sm:$0xff]
    %v75 = vld [vmem:[#allocation7 + $0x98] sm:$0xff]
    %v76 = vld [vmem:[#allocation7 + $0xa0] sm:$0xff]
    %v77 = vld [vmem:[#allocation7 + $0xa8] sm:$0xff]
    %v78 = vld [vmem:[#allocation7 + $0xb0] sm:$0xff]
    %v79 = vld [vmem:[#allocation7 + $0xb8] sm:$0xff]
    %v80 = vld [vmem:[#allocation7 + $0xc0] sm:$0xff]
    %v81 = vld [vmem:[#allocation7 + $0xc8] sm:$0xff]
    %v82 = vld [vmem:[#allocation7 + $0xd0] sm:$0xff]
    %v83 = vld [vmem:[#allocation7 + $0xd8] sm:$0xff]
    %v84 = vld [vmem:[#allocation7 + $0xe0] sm:$0xff]
    %v85 = vld [vmem:[#allocation7 + $0xe8] sm:$0xff]
    %v86 = vld [vmem:[#allocation7 + $0xf0] sm:$0xff]
    %v87 = vld [vmem:[#allocation7 + $0xf8] sm:$0xff]
    %v88 = vld [vmem:[#allocation7 + $0x100] sm:$0xff]
    %v89 = vld [vmem:[#allocation7 + $0x108] sm:$0xff]
    %v90 = vld [vmem:[#allocation7 + $0x110] sm:$0xff]
    %v91 = vld [vmem:[#allocation7 + $0x118] sm:$0xff]
    %v92 = vld [vmem:[#allocation7 + $0x120] sm:$0xff]
    %v93 = vld [vmem:[#allocation7 + $0x128] sm:$0xff]
    %v94 = vld [vmem:[#allocation7 + $0x130] sm:$0xff]
    %v95 = vld [vmem:[#allocation7 + $0x138] sm:$0xff]
    %v96 = vld [vmem:[#allocation7 + $0x140] sm:$0xff]
    %v97 = vld [vmem:[#allocation7 + $0x148] sm:$0xff]
    %v98 = vld [vmem:[#allocation7 + $0x150] sm:$0xff]
    %v99 = vld [vmem:[#allocation7 + $0x158] sm:$0xff]
    %v100 = vld [vmem:[#allocation7 + $0x160] sm:$0xff]
    %v101 = vld [vmem:[#allocation7 + $0x168] sm:$0xff]
    %v102 = vld [vmem:[#allocation7 + $0x170] sm:$0xff]
    %v103 = vld [vmem:[#allocation7 + $0x178] sm:$0xff]
    %v104 = vld [vmem:[#allocation7 + $0x180] sm:$0xff]
    %v105 = vld [vmem:[#allocation7 + $0x188] sm:$0xff]
    %v106 = vld [vmem:[#allocation7 + $0x190] sm:$0xff]
    %v107 = vld [vmem:[#allocation7 + $0x198] sm:$0xff]
    %v108 = vld [vmem:[#allocation7 + $0x1a0] sm:$0xff]
    %v109 = vld [vmem:[#allocation7 + $0x1a8] sm:$0xff]
    %v110 = vld [vmem:[#allocation7 + $0x1b0] sm:$0xff]
    %v111 = vld [vmem:[#allocation7 + $0x1b8] sm:$0xff]
    %v112 = vld [vmem:[#allocation7 + $0x1c0] sm:$0xff]
    %v113 = vld [vmem:[#allocation7 + $0x1c8] sm:$0xff]
    %v114 = vld [vmem:[#allocation7 + $0x1d0] sm:$0xff]
    %v115 = vld [vmem:[#allocation7 + $0x1d8] sm:$0xff]
    %v116 = vld [vmem:[#allocation7 + $0x1e0] sm:$0xff]
    %v117 = vld [vmem:[#allocation7 + $0x1e8] sm:$0xff]
    %v118 = vld [vmem:[#allocation7 + $0x1f0] sm:$0xff]
    %v119 = vld [vmem:[#allocation7 + $0x1f8] sm:$0xff]
    %v120 = vld [vmem:[#allocation2] sm:$0xff]
    %v121 = vld [vmem:[#allocation3] sm:$0xff]
    %v122 = vld [vmem:[#allocation5] sm:$0xff]
    %v123 = vld [vmem:[#allocation5 + $0x8] sm:$0xff]
    %v124 = vld [vmem:[#allocation5 + $0x10] sm:$0xff]
    %v125 = vld [vmem:[#allocation5 + $0x18] sm:$0xff]
    %v127 = vlaneseq
    %v128 = vshrl.u32 %v127, 7
    %v129 = vsub.s32 0, %v128
    %v130 = vrot.slane %v55, %v129
    %v131 = vlaneseq
    %v132 = vshrl.u32 %v131, 7
    %v133 = vsub.s32 1, %v132
    %v134 = vrot.slane %v55, %v133
    %v135 = vlaneseq
    %v136 = vshrl.u32 %v135, 7
    %v137 = vsub.s32 2, %v136
    %v138 = vrot.slane %v55, %v137
    %v139 = vlaneseq
    %v140 = vshrl.u32 %v139, 7
    %v141 = vsub.s32 3, %v140
    %v142 = vrot.slane %v55, %v141
    %v147 = vadd.f32 %v122, %v130
    %v148 = vadd.f32 %v123, %v134
    %v149 = vadd.f32 %v124, %v138
    %v150 = vadd.f32 %v125, %v142
    %151 = vmatprep.subr.mxu0 %v57
    %152 = vmatpush1.msra.mxu0 %v56
    %153 = vmatprep.subr.mxu0 %v61
    %154 = vmatpush1.msra.mxu0 %v60
    %155 = vmatprep.subr.mxu0 %v65
    %156 = vmatpush1.msra.mxu0 %v64
    %157 = vmatprep.subr.mxu0 %v69
    %158 = vmatpush1.msra.mxu0 %v68
    %159 = vmatprep.subr.mxu0 %v73
    %160 = vmatpush1.msra.mxu0 %v72
    %161 = vmatprep.subr.mxu0 %v77
    %162 = vmatpush1.msra.mxu0 %v76
    %163 = vmatprep.subr.mxu0 %v81
    %164 = vmatpush1.msra.mxu0 %v80
    %165 = vmatprep.subr.mxu0 %v85
    %166 = vmatpush1.msra.mxu0 %v84
    %167 = vmatprep.subr.mxu0 %v89
    %168 = vmatpush1.msra.mxu0 %v88
    %169 = vmatprep.subr.mxu0 %v93
    %170 = vmatpush1.msra.mxu0 %v92
    %171 = vmatprep.subr.mxu0 %v97
    %172 = vmatpush1.msra.mxu0 %v96
    %173 = vmatprep.subr.mxu0 %v101
    %174 = vmatpush1.msra.mxu0 %v100
    %175 = vmatprep.subr.mxu0 %v105
    %176 = vmatpush1.msra.mxu0 %v104
    %177 = vmatprep.subr.mxu0 %v109
    %178 = vmatpush1.msra.mxu0 %v108
    %179 = vmatprep.subr.mxu0 %v113
    %180 = vmatpush1.msra.mxu0 %v112
    %181 = vmatprep.subr.mxu0 %v117
    %182 = vmatpush1.msra.mxu0 %v116
    %183 = vmatprep.subr.mxu0 0.0
    %184 = vmatpush1.msra.mxu0 0.0
    %185 = vmatprep.subr.mxu0 0.0
    %186 = vmatpush1.msra.mxu0 0.0
    %187 = vmatprep.subr.mxu0 0.0
    %188 = vmatpush1.msra.mxu0 0.0
    %189 = vmatprep.subr.mxu0 0.0
    %190 = vmatpush1.msra.mxu0 0.0
    %191 = vmatprep.subr.mxu0 0.0
    %192 = vmatpush1.msra.mxu0 0.0
    %193 = vmatprep.subr.mxu0 0.0
    %194 = vmatpush1.msra.mxu0 0.0
    %195 = vmatprep.subr.mxu0 0.0
    %196 = vmatpush1.msra.mxu0 0.0
    %197 = vmatprep.subr.mxu0 0.0
    %198 = vmatpush1.msra.mxu0 0.0
    %199 = vmatprep.subr.mxu0 0.0
    %200 = vmatpush1.msra.mxu0 0.0
    %201 = vmatprep.subr.mxu0 0.0
    %202 = vmatpush1.msra.mxu0 0.0
    %203 = vmatprep.subr.mxu0 0.0
    %204 = vmatpush1.msra.mxu0 0.0
    %205 = vmatprep.subr.mxu0 0.0
    %206 = vmatpush1.msra.mxu0 0.0
    %207 = vmatprep.subr.mxu0 0.0
    %208 = vmatpush1.msra.mxu0 0.0
    %209 = vmatprep.subr.mxu0 0.0
    %210 = vmatpush1.msra.mxu0 0.0
    %211 = vmatprep.subr.mxu0 0.0
    %212 = vmatpush1.msra.mxu0 0.0
    %213 = vmatprep.subr.mxu0 0.0
    %214 = vmatpush1.msra.mxu0 0.0
    %215 = vmatprep.mubr.f32.mxu0 0.0
    %216 = vmatmul.mubr.f32.gmra.mrb[0].mxu0 %v120
    %v217 = vpop.f32.mrb[0].mxu0
    %v218 = vadd.f32 0.0, %v217
    %v219 = vpop.f32.mrb[0].mxu0
    %v220 = vadd.f32 0.0, %v219
    %221 = vdwg.mxu0
    %222 = vmatprep.subr.mxu0 %v59
    %223 = vmatpush1.msra.mxu0 %v58
    %224 = vmatprep.subr.mxu0 %v63
    %225 = vmatpush1.msra.mxu0 %v62
    %226 = vmatprep.subr.mxu0 %v67
    %227 = vmatpush1.msra.mxu0 %v66
    %228 = vmatprep.subr.mxu0 %v71
    %229 = vmatpush1.msra.mxu0 %v70
    %230 = vmatprep.subr.mxu0 %v75
    %231 = vmatpush1.msra.mxu0 %v74
    %232 = vmatprep.subr.mxu0 %v79
    %233 = vmatpush1.msra.mxu0 %v78
    %234 = vmatprep.subr.mxu0 %v83
    %235 = vmatpush1.msra.mxu0 %v82
    %236 = vmatprep.subr.mxu0 %v87
    %237 = vmatpush1.msra.mxu0 %v86
    %238 = vmatprep.subr.mxu0 %v91
    %239 = vmatpush1.msra.mxu0 %v90
    %240 = vmatprep.subr.mxu0 %v95
    %241 = vmatpush1.msra.mxu0 %v94
    %242 = vmatprep.subr.mxu0 %v99
    %243 = vmatpush1.msra.mxu0 %v98
    %244 = vmatprep.subr.mxu0 %v103
    %245 = vmatpush1.msra.mxu0 %v102
    %246 = vmatprep.subr.mxu0 %v107
    %247 = vmatpush1.msra.mxu0 %v106
    %248 = vmatprep.subr.mxu0 %v111
    %249 = vmatpush1.msra.mxu0 %v110
    %250 = vmatprep.subr.mxu0 %v115
    %251 = vmatpush1.msra.mxu0 %v114
    %252 = vmatprep.subr.mxu0 %v119
    %253 = vmatpush1.msra.mxu0 %v118
    %254 = vmatprep.subr.mxu0 0.0
    %255 = vmatpush1.msra.mxu0 0.0
    %256 = vmatprep.subr.mxu0 0.0
    %257 = vmatpush1.msra.mxu0 0.0
    %258 = vmatprep.subr.mxu0 0.0
    %259 = vmatpush1.msra.mxu0 0.0
    %260 = vmatprep.subr.mxu0 0.0
    %261 = vmatpush1.msra.mxu0 0.0
    %262 = vmatprep.subr.mxu0 0.0
    %263 = vmatpush1.msra.mxu0 0.0
    %264 = vmatprep.subr.mxu0 0.0
    %265 = vmatpush1.msra.mxu0 0.0
    %266 = vmatprep.subr.mxu0 0.0
    %267 = vmatpush1.msra.mxu0 0.0
    %268 = vmatprep.subr.mxu0 0.0
    %269 = vmatpush1.msra.mxu0 0.0
    %270 = vmatprep.subr.mxu0 0.0
    %271 = vmatpush1.msra.mxu0 0.0
    %272 = vmatprep.subr.mxu0 0.0
    %273 = vmatpush1.msra.mxu0 0.0
    %274 = vmatprep.subr.mxu0 0.0
    %275 = vmatpush1.msra.mxu0 0.0
    %276 = vmatprep.subr.mxu0 0.0
    %277 = vmatpush1.msra.mxu0 0.0
    %278 = vmatprep.subr.mxu0 0.0
    %279 = vmatpush1.msra.mxu0 0.0
    %280 = vmatprep.subr.mxu0 0.0
    %281 = vmatpush1.msra.mxu0 0.0
    %282 = vmatprep.subr.mxu0 0.0
    %283 = vmatpush1.msra.mxu0 0.0
    %284 = vmatprep.subr.mxu0 0.0
    %285 = vmatpush1.msra.mxu0 0.0
    %286 = vmatprep.mubr.f32.mxu0 0.0
    %287 = vmatmul.mubr.f32.gmra.mrb[0].mxu0 %v120
    %v288 = vpop.f32.mrb[0].mxu0
    %v289 = vadd.f32 0.0, %v288
    %v290 = vpop.f32.mrb[0].mxu0
    %v291 = vadd.f32 0.0, %v290
    %292 = vdwg.mxu0
    %v293 = vadd.f32 %v147, %v218
    %v294 = vadd.f32 %v148, %v220
    %v295 = vadd.f32 %v149, %v289
    %v296 = vadd.f32 %v150, %v291
    %v297 = vxor.u32 %v293, 2147483648
    %v298 = vmul.f32 %v297, 1.442695
    %v299 = vpow.pop %v298
    %v300 = vadd.f32 %v299, 1.0
    %v301 = vrcp.pop %v300
    %v302 = vmul.f32 1.0, %v301
    %v303 = vxor.u32 %v294, 2147483648
    %v304 = vmul.f32 %v303, 1.442695
    %v305 = vpow.pop %v304
    %v306 = vadd.f32 %v305, 1.0
    %v307 = vrcp.pop %v306
    %v308 = vmul.f32 1.0, %v307
    %v309 = vtanh.pop %v295
    %v310 = vxor.u32 %v296, 2147483648
    %v311 = vmul.f32 %v310, 1.442695
    %v312 = vpow.pop %v311
    %v313 = vadd.f32 %v312, 1.0
    %v314 = vrcp.pop %v313
    %v315 = vmul.f32 1.0, %v314
    %v316 = vmul.f32 %v308, %v121
    %v317 = vmul.f32 %v302, %v309
    %v318 = vadd.f32 %v316, %v317
    %v319 = vtanh.pop %v318
    %v320 = vmul.f32 %v315, %v319
    %s321 = scalar_lea.vmem [#allocation5], 32
    %v322 = vld [vmem:[%s321] sm:$0xff]
    %v323 = vld [vmem:[%s321 + $0x8] sm:$0xff]
    %v324 = vld [vmem:[%s321 + $0x10] sm:$0xff]
    %v325 = vld [vmem:[%s321 + $0x18] sm:$0xff]
    %v326 = vadd.f32 %v322, %v130
    %v327 = vadd.f32 %v323, %v134
    %v328 = vadd.f32 %v324, %v138
    %v329 = vadd.f32 %v325, %v142
    %330 = vmatprep.subr.mxu0 %v57
    %331 = vmatpush1.msra.mxu0 %v56
    %332 = vmatprep.subr.mxu0 %v61
    %333 = vmatpush1.msra.mxu0 %v60
    %334 = vmatprep.subr.mxu0 %v65
    %335 = vmatpush1.msra.mxu0 %v64
    %336 = vmatprep.subr.mxu0 %v69
    %337 = vmatpush1.msra.mxu0 %v68
    %338 = vmatprep.subr.mxu0 %v73
    %339 = vmatpush1.msra.mxu0 %v72
    %340 = vmatprep.subr.mxu0 %v77
    %341 = vmatpush1.msra.mxu0 %v76
    %342 = vmatprep.subr.mxu0 %v81
    %343 = vmatpush1.msra.mxu0 %v80
    %344 = vmatprep.subr.mxu0 %v85
    %345 = vmatpush1.msra.mxu0 %v84
    %346 = vmatprep.subr.mxu0 %v89
    %347 = vmatpush1.msra.mxu0 %v88
    %348 = vmatprep.subr.mxu0 %v93
    %349 = vmatpush1.msra.mxu0 %v92
    %350 = vmatprep.subr.mxu0 %v97
    %351 = vmatpush1.msra.mxu0 %v96
    %352 = vmatprep.subr.mxu0 %v101
    %353 = vmatpush1.msra.mxu0 %v100
    %354 = vmatprep.subr.mxu0 %v105
    %355 = vmatpush1.msra.mxu0 %v104
    %356 = vmatprep.subr.mxu0 %v109
    %357 = vmatpush1.msra.mxu0 %v108
    %358 = vmatprep.subr.mxu0 %v113
    %359 = vmatpush1.msra.mxu0 %v112
    %360 = vmatprep.subr.mxu0 %v117
    %361 = vmatpush1.msra.mxu0 %v116
    %362 = vmatprep.subr.mxu0 0.0
    %363 = vmatpush1.msra.mxu0 0.0
    %364 = vmatprep.subr.mxu0 0.0
    %365 = vmatpush1.msra.mxu0 0.0
    %366 = vmatprep.subr.mxu0 0.0
    %367 = vmatpush1.msra.mxu0 0.0
    %368 = vmatprep.subr.mxu0 0.0
    %369 = vmatpush1.msra.mxu0 0.0
    %370 = vmatprep.subr.mxu0 0.0
    %371 = vmatpush1.msra.mxu0 0.0
    %372 = vmatprep.subr.mxu0 0.0
    %373 = vmatpush1.msra.mxu0 0.0
    %374 = vmatprep.subr.mxu0 0.0
    %375 = vmatpush1.msra.mxu0 0.0
    %376 = vmatprep.subr.mxu0 0.0
    %377 = vmatpush1.msra.mxu0 0.0
    %378 = vmatprep.subr.mxu0 0.0
    %379 = vmatpush1.msra.mxu0 0.0
    %380 = vmatprep.subr.mxu0 0.0
    %381 = vmatpush1.msra.mxu0 0.0
    %382 = vmatprep.subr.mxu0 0.0
    %383 = vmatpush1.msra.mxu0 0.0
    %384 = vmatprep.subr.mxu0 0.0
    %385 = vmatpush1.msra.mxu0 0.0
    %386 = vmatprep.subr.mxu0 0.0
    %387 = vmatpush1.msra.mxu0 0.0
    %388 = vmatprep.subr.mxu0 0.0
    %389 = vmatpush1.msra.mxu0 0.0
    %390 = vmatprep.subr.mxu0 0.0
    %391 = vmatpush1.msra.mxu0 0.0
    %392 = vmatprep.subr.mxu0 0.0
    %393 = vmatpush1.msra.mxu0 0.0
    %394 = vmatprep.mubr.f32.mxu0 0.0
    %395 = vmatmul.mubr.f32.gmra.mrb[0].mxu0 %v320
    %v396 = vpop.f32.mrb[0].mxu0
    %v397 = vadd.f32 0.0, %v396
    %v398 = vpop.f32.mrb[0].mxu0
    %v399 = vadd.f32 0.0, %v398
    %400 = vdwg.mxu0
    %401 = vmatprep.subr.mxu0 %v59
    %402 = vmatpush1.msra.mxu0 %v58
    %403 = vmatprep.subr.mxu0 %v63
    %404 = vmatpush1.msra.mxu0 %v62
    %405 = vmatprep.subr.mxu0 %v67
    %406 = vmatpush1.msra.mxu0 %v66
    %407 = vmatprep.subr.mxu0 %v71
    %408 = vmatpush1.msra.mxu0 %v70
    %409 = vmatprep.subr.mxu0 %v75
    %410 = vmatpush1.msra.mxu0 %v74
    %411 = vmatprep.subr.mxu0 %v79
    %412 = vmatpush1.msra.mxu0 %v78
    %413 = vmatprep.subr.mxu0 %v83
    %414 = vmatpush1.msra.mxu0 %v82
    %415 = vmatprep.subr.mxu0 %v87
    %416 = vmatpush1.msra.mxu0 %v86
    %417 = vmatprep.subr.mxu0 %v91
    %418 = vmatpush1.msra.mxu0 %v90
    %419 = vmatprep.subr.mxu0 %v95
    %420 = vmatpush1.msra.mxu0 %v94
    %421 = vmatprep.subr.mxu0 %v99
    %422 = vmatpush1.msra.mxu0 %v98
    %423 = vmatprep.subr.mxu0 %v103
    %424 = vmatpush1.msra.mxu0 %v102
    %425 = vmatprep.subr.mxu0 %v107
    %426 = vmatpush1.msra.mxu0 %v106
    %427 = vmatprep.subr.mxu0 %v111
    %428 = vmatpush1.msra.mxu0 %v110
    %429 = vmatprep.subr.mxu0 %v115
    %430 = vmatpush1.msra.mxu0 %v114
    %431 = vmatprep.subr.mxu0 %v119
    %432 = vmatpush1.msra.mxu0 %v118
    %433 = vmatprep.subr.mxu0 0.0
    %434 = vmatpush1.msra.mxu0 0.0
    %435 = vmatprep.subr.mxu0 0.0
    %436 = vmatpush1.msra.mxu0 0.0
    %437 = vmatprep.subr.mxu0 0.0
    %438 = vmatpush1.msra.mxu0 0.0
    %439 = vmatprep.subr.mxu0 0.0
    %440 = vmatpush1.msra.mxu0 0.0
    %441 = vmatprep.subr.mxu0 0.0
    %442 = vmatpush1.msra.mxu0 0.0
    %443 = vmatprep.subr.mxu0 0.0
    %444 = vmatpush1.msra.mxu0 0.0
    %445 = vmatprep.subr.mxu0 0.0
    %446 = vmatpush1.msra.mxu0 0.0
    %447 = vmatprep.subr.mxu0 0.0
    %448 = vmatpush1.msra.mxu0 0.0
    %449 = vmatprep.subr.mxu0 0.0
    %450 = vmatpush1.msra.mxu0 0.0
    %451 = vmatprep.subr.mxu0 0.0
    %452 = vmatpush1.msra.mxu0 0.0
    %453 = vmatprep.subr.mxu0 0.0
    %454 = vmatpush1.msra.mxu0 0.0
    %455 = vmatprep.subr.mxu0 0.0
    %456 = vmatpush1.msra.mxu0 0.0
    %457 = vmatprep.subr.mxu0 0.0
    %458 = vmatpush1.msra.mxu0 0.0
    %459 = vmatprep.subr.mxu0 0.0
    %460 = vmatpush1.msra.mxu0 0.0
    %461 = vmatprep.subr.mxu0 0.0
    %462 = vmatpush1.msra.mxu0 0.0
    %463 = vmatprep.subr.mxu0 0.0
    %464 = vmatpush1.msra.mxu0 0.0
    %465 = vmatprep.mubr.f32.mxu0 0.0
    %466 = vmatmul.mubr.f32.gmra.mrb[0].mxu0 %v320
    %v467 = vpop.f32.mrb[0].mxu0
    %v468 = vadd.f32 0.0, %v467
    %v469 = vpop.f32.mrb[0].mxu0
    %v470 = vadd.f32 0.0, %v469
    %471 = vdwg.mxu0
    %v472 = vadd.f32 %v326, %v397
    %v473 = vadd.f32 %v327, %v399
    %v474 = vadd.f32 %v328, %v468
    %v475 = vadd.f32 %v329, %v470
    %v476 = vxor.u32 %v472, 2147483648
    %v477 = vmul.f32 %v476, 1.442695
    %v478 = vpow.pop %v477
    %v479 = vadd.f32 %v478, 1.0
    %v480 = vrcp.pop %v479
    %v481 = vmul.f32 1.0, %v480
    %v482 = vxor.u32 %v473, 2147483648
    %v483 = vmul.f32 %v482, 1.442695
    %v484 = vpow.pop %v483
    %v485 = vadd.f32 %v484, 1.0
    %v486 = vrcp.pop %v485
    %v487 = vmul.f32 1.0, %v486
    %v488 = vtanh.pop %v474
    %v489 = vxor.u32 %v475, 2147483648
    %v490 = vmul.f32 %v489, 1.442695
    %v491 = vpow.pop %v490
    %v492 = vadd.f32 %v491, 1.0
    %v493 = vrcp.pop %v492
    %v494 = vmul.f32 1.0, %v493
    %v495 = vmul.f32 %v487, %v318
    %v496 = vmul.f32 %v481, %v488
    %v497 = vadd.f32 %v495, %v496
    %v498 = vtanh.pop %v497
    %v499 = vmul.f32 %v494, %v498
    %s500 = scalar_lea.vmem [#allocation5], 64
    %v501 = vld [vmem:[%s500] sm:$0xff]
    %v502 = vld [vmem:[%s500 + $0x8] sm:$0xff]
    %v503 = vld [vmem:[%s500 + $0x10] sm:$0xff]
    %v504 = vld [vmem:[%s500 + $0x18] sm:$0xff]
    %v505 = vadd.f32 %v501, %v130
    %v506 = vadd.f32 %v502, %v134
    %v507 = vadd.f32 %v503, %v138
    %v508 = vadd.f32 %v504, %v142
    %509 = vmatprep.subr.mxu0 %v57
    %510 = vmatpush1.msra.mxu0 %v56
    %511 = vmatprep.subr.mxu0 %v61
    %512 = vmatpush1.msra.mxu0 %v60
    %513 = vmatprep.subr.mxu0 %v65
    %514 = vmatpush1.msra.mxu0 %v64
    %515 = vmatprep.subr.mxu0 %v69
    %516 = vmatpush1.msra.mxu0 %v68
    %517 = vmatprep.subr.mxu0 %v73
    %518 = vmatpush1.msra.mxu0 %v72
    %519 = vmatprep.subr.mxu0 %v77
    %520 = vmatpush1.msra.mxu0 %v76
    %521 = vmatprep.subr.mxu0 %v81
    %522 = vmatpush1.msra.mxu0 %v80
    %523 = vmatprep.subr.mxu0 %v85
    %524 = vmatpush1.msra.mxu0 %v84
    %525 = vmatprep.subr.mxu0 %v89
    %526 = vmatpush1.msra.mxu0 %v88
    %527 = vmatprep.subr.mxu0 %v93
    %528 = vmatpush1.msra.mxu0 %v92
    %529 = vmatprep.subr.mxu0 %v97
    %530 = vmatpush1.msra.mxu0 %v96
    %531 = vmatprep.subr.mxu0 %v101
    %532 = vmatpush1.msra.mxu0 %v100
    %533 = vmatprep.subr.mxu0 %v105
    %534 = vmatpush1.msra.mxu0 %v104
    %535 = vmatprep.subr.mxu0 %v109
    %536 = vmatpush1.msra.mxu0 %v108
    %537 = vmatprep.subr.mxu0 %v113
    %538 = vmatpush1.msra.mxu0 %v112
    %539 = vmatprep.subr.mxu0 %v117
    %540 = vmatpush1.msra.mxu0 %v116
    %541 = vmatprep.subr.mxu0 0.0
    %542 = vmatpush1.msra.mxu0 0.0
    %543 = vmatprep.subr.mxu0 0.0
    %544 = vmatpush1.msra.mxu0 0.0
    %545 = vmatprep.subr.mxu0 0.0
    %546 = vmatpush1.msra.mxu0 0.0
    %547 = vmatprep.subr.mxu0 0.0
    %548 = vmatpush1.msra.mxu0 0.0
    %549 = vmatprep.subr.mxu0 0.0
    %550 = vmatpush1.msra.mxu0 0.0
    %551 = vmatprep.subr.mxu0 0.0
    %552 = vmatpush1.msra.mxu0 0.0
    %553 = vmatprep.subr.mxu0 0.0
    %554 = vmatpush1.msra.mxu0 0.0
    %555 = vmatprep.subr.mxu0 0.0
    %556 = vmatpush1.msra.mxu0 0.0
    %557 = vmatprep.subr.mxu0 0.0
    %558 = vmatpush1.msra.mxu0 0.0
    %559 = vmatprep.subr.mxu0 0.0
    %560 = vmatpush1.msra.mxu0 0.0
    %561 = vmatprep.subr.mxu0 0.0
    %562 = vmatpush1.msra.mxu0 0.0
    %563 = vmatprep.subr.mxu0 0.0
    %564 = vmatpush1.msra.mxu0 0.0
    %565 = vmatprep.subr.mxu0 0.0
    %566 = vmatpush1.msra.mxu0 0.0
    %567 = vmatprep.subr.mxu0 0.0
    %568 = vmatpush1.msra.mxu0 0.0
    %569 = vmatprep.subr.mxu0 0.0
    %570 = vmatpush1.msra.mxu0 0.0
    %571 = vmatprep.subr.mxu0 0.0
    %572 = vmatpush1.msra.mxu0 0.0
    %573 = vmatprep.mubr.f32.mxu0 0.0
    %574 = vmatmul.mubr.f32.gmra.mrb[0].mxu0 %v499
    %v575 = vpop.f32.mrb[0].mxu0
    %v576 = vadd.f32 0.0, %v575
    %v577 = vpop.f32.mrb[0].mxu0
    %v578 = vadd.f32 0.0, %v577
    %579 = vdwg.mxu0
    %580 = vmatprep.subr.mxu0 %v59
    %581 = vmatpush1.msra.mxu0 %v58
    %582 = vmatprep.subr.mxu0 %v63
    %583 = vmatpush1.msra.mxu0 %v62
    %584 = vmatprep.subr.mxu0 %v67
    %585 = vmatpush1.msra.mxu0 %v66
    %586 = vmatprep.subr.mxu0 %v71
    %587 = vmatpush1.msra.mxu0 %v70
    %588 = vmatprep.subr.mxu0 %v75
    %589 = vmatpush1.msra.mxu0 %v74
    %590 = vmatprep.subr.mxu0 %v79
    %591 = vmatpush1.msra.mxu0 %v78
    %592 = vmatprep.subr.mxu0 %v83
    %593 = vmatpush1.msra.mxu0 %v82
    %594 = vmatprep.subr.mxu0 %v87
    %595 = vmatpush1.msra.mxu0 %v86
    %596 = vmatprep.subr.mxu0 %v91
    %597 = vmatpush1.msra.mxu0 %v90
    %598 = vmatprep.subr.mxu0 %v95
    %599 = vmatpush1.msra.mxu0 %v94
    %600 = vmatprep.subr.mxu0 %v99
    %601 = vmatpush1.msra.mxu0 %v98
    %602 = vmatprep.subr.mxu0 %v103
    %603 = vmatpush1.msra.mxu0 %v102
    %604 = vmatprep.subr.mxu0 %v107
    %605 = vmatpush1.msra.mxu0 %v106
    %606 = vmatprep.subr.mxu0 %v111
    %607 = vmatpush1.msra.mxu0 %v110
    %608 = vmatprep.subr.mxu0 %v115
    %609 = vmatpush1.msra.mxu0 %v114
    %610 = vmatprep.subr.mxu0 %v119
    %611 = vmatpush1.msra.mxu0 %v118
    %612 = vmatprep.subr.mxu0 0.0
    %613 = vmatpush1.msra.mxu0 0.0
    %614 = vmatprep.subr.mxu0 0.0
    %615 = vmatpush1.msra.mxu0 0.0
    %616 = vmatprep.subr.mxu0 0.0
    %617 = vmatpush1.msra.mxu0 0.0
    %618 = vmatprep.subr.mxu0 0.0
    %619 = vmatpush1.msra.mxu0 0.0
    %620 = vmatprep.subr.mxu0 0.0
    %621 = vmatpush1.msra.mxu0 0.0
    %622 = vmatprep.subr.mxu0 0.0
    %623 = vmatpush1.msra.mxu0 0.0
    %624 = vmatprep.subr.mxu0 0.0
    %625 = vmatpush1.msra.mxu0 0.0
    %626 = vmatprep.subr.mxu0 0.0
    %627 = vmatpush1.msra.mxu0 0.0
    %628 = vmatprep.subr.mxu0 0.0
    %629 = vmatpush1.msra.mxu0 0.0
    %630 = vmatprep.subr.mxu0 0.0
    %631 = vmatpush1.msra.mxu0 0.0
    %632 = vmatprep.subr.mxu0 0.0
    %633 = vmatpush1.msra.mxu0 0.0
    %634 = vmatprep.subr.mxu0 0.0
    %635 = vmatpush1.msra.mxu0 0.0
    %636 = vmatprep.subr.mxu0 0.0
    %637 = vmatpush1.msra.mxu0 0.0
    %638 = vmatprep.subr.mxu0 0.0
    %639 = vmatpush1.msra.mxu0 0.0
    %640 = vmatprep.subr.mxu0 0.0
    %641 = vmatpush1.msra.mxu0 0.0
    %642 = vmatprep.subr.mxu0 0.0
    %643 = vmatpush1.msra.mxu0 0.0
    %644 = vmatprep.mubr.f32.mxu0 0.0
    %645 = vmatmul.mubr.f32.gmra.mrb[0].mxu0 %v499
    %v646 = vpop.f32.mrb[0].mxu0
    %v647 = vadd.f32 0.0, %v646
    %v648 = vpop.f32.mrb[0].mxu0
    %v649 = vadd.f32 0.0, %v648
    %650 = vdwg.mxu0
    %v651 = vadd.f32 %v505, %v576
    %v652 = vadd.f32 %v506, %v578
    %v653 = vadd.f32 %v507, %v647
    %v654 = vadd.f32 %v508, %v649
    %v655 = vxor.u32 %v651, 2147483648
    %v656 = vmul.f32 %v655, 1.442695
    %v657 = vpow.pop %v656
    %v658 = vadd.f32 %v657, 1.0
    %v659 = vrcp.pop %v658
    %v660 = vmul.f32 1.0, %v659
    %v661 = vxor.u32 %v652, 2147483648
    %v662 = vmul.f32 %v661, 1.442695
    %v663 = vpow.pop %v662
    %v664 = vadd.f32 %v663, 1.0
    %v665 = vrcp.pop %v664
    %v666 = vmul.f32 1.0, %v665
    %v667 = vtanh.pop %v653
    %v668 = vxor.u32 %v654, 2147483648
    %v669 = vmul.f32 %v668, 1.442695
    %v670 = vpow.pop %v669
    %v671 = vadd.f32 %v670, 1.0
    %v672 = vrcp.pop %v671
    %v673 = vmul.f32 1.0, %v672
    %v674 = vmul.f32 %v666, %v497
    %v675 = vmul.f32 %v660, %v667
    %v676 = vadd.f32 %v674, %v675
    %v677 = vtanh.pop %v676
    %v678 = vmul.f32 %v673, %v677
    %s679 = scalar_lea.vmem [#allocation5], 96
    %v680 = vld [vmem:[%s679] sm:$0xff]
    %v681 = vld [vmem:[%s679 + $0x8] sm:$0xff]
    %v682 = vld [vmem:[%s679 + $0x10] sm:$0xff]
    %v683 = vld [vmem:[%s679 + $0x18] sm:$0xff]
    %v684 = vadd.f32 %v680, %v130
    %v685 = vadd.f32 %v681, %v134
    %v686 = vadd.f32 %v682, %v138
    %v687 = vadd.f32 %v683, %v142
    %688 = vmatprep.subr.mxu0 %v57
    %689 = vmatpush1.msra.mxu0 %v56
    %690 = vmatprep.subr.mxu0 %v61
    %691 = vmatpush1.msra.mxu0 %v60
    %692 = vmatprep.subr.mxu0 %v65
    %693 = vmatpush1.msra.mxu0 %v64
    %694 = vmatprep.subr.mxu0 %v69
    %695 = vmatpush1.msra.mxu0 %v68
    %696 = vmatprep.subr.mxu0 %v73
    %697 = vmatpush1.msra.mxu0 %v72
    %698 = vmatprep.subr.mxu0 %v77
    %699 = vmatpush1.msra.mxu0 %v76
    %700 = vmatprep.subr.mxu0 %v81
    %701 = vmatpush1.msra.mxu0 %v80
    %702 = vmatprep.subr.mxu0 %v85
    %703 = vmatpush1.msra.mxu0 %v84
    %704 = vmatprep.subr.mxu0 %v89
    %705 = vmatpush1.msra.mxu0 %v88
    %706 = vmatprep.subr.mxu0 %v93
    %707 = vmatpush1.msra.mxu0 %v92
    %708 = vmatprep.subr.mxu0 %v97
    %709 = vmatpush1.msra.mxu0 %v96
    %710 = vmatprep.subr.mxu0 %v101
    %711 = vmatpush1.msra.mxu0 %v100
    %712 = vmatprep.subr.mxu0 %v105
    %713 = vmatpush1.msra.mxu0 %v104
    %714 = vmatprep.subr.mxu0 %v109
    %715 = vmatpush1.msra.mxu0 %v108
    %716 = vmatprep.subr.mxu0 %v113
    %717 = vmatpush1.msra.mxu0 %v112
    %718 = vmatprep.subr.mxu0 %v117
    %719 = vmatpush1.msra.mxu0 %v116
    %720 = vmatprep.subr.mxu0 0.0
    %721 = vmatpush1.msra.mxu0 0.0
    %722 = vmatprep.subr.mxu0 0.0
    %723 = vmatpush1.msra.mxu0 0.0
    %724 = vmatprep.subr.mxu0 0.0
    %725 = vmatpush1.msra.mxu0 0.0
    %726 = vmatprep.subr.mxu0 0.0
    %727 = vmatpush1.msra.mxu0 0.0
    %728 = vmatprep.subr.mxu0 0.0
    %729 = vmatpush1.msra.mxu0 0.0
    %730 = vmatprep.subr.mxu0 0.0
    %731 = vmatpush1.msra.mxu0 0.0
    %732 = vmatprep.subr.mxu0 0.0
    %733 = vmatpush1.msra.mxu0 0.0
    %734 = vmatprep.subr.mxu0 0.0
    %735 = vmatpush1.msra.mxu0 0.0
    %736 = vmatprep.subr.mxu0 0.0
    %737 = vmatpush1.msra.mxu0 0.0
    %738 = vmatprep.subr.mxu0 0.0
    %739 = vmatpush1.msra.mxu0 0.0
    %740 = vmatprep.subr.mxu0 0.0
    %741 = vmatpush1.msra.mxu0 0.0
    %742 = vmatprep.subr.mxu0 0.0
    %743 = vmatpush1.msra.mxu0 0.0
    %744 = vmatprep.subr.mxu0 0.0
    %745 = vmatpush1.msra.mxu0 0.0
    %746 = vmatprep.subr.mxu0 0.0
    %747 = vmatpush1.msra.mxu0 0.0
    %748 = vmatprep.subr.mxu0 0.0
    %749 = vmatpush1.msra.mxu0 0.0
    %750 = vmatprep.subr.mxu0 0.0
    %751 = vmatpush1.msra.mxu0 0.0
    %752 = vmatprep.mubr.f32.mxu0 0.0
    %753 = vmatmul.mubr.f32.gmra.mrb[0].mxu0 %v678
    %v754 = vpop.f32.mrb[0].mxu0
    %v755 = vadd.f32 0.0, %v754
    %v756 = vpop.f32.mrb[0].mxu0
    %v757 = vadd.f32 0.0, %v756
    %758 = vdwg.mxu0
    %759 = vmatprep.subr.mxu0 %v59
    %760 = vmatpush1.msra.mxu0 %v58
    %761 = vmatprep.subr.mxu0 %v63
    %762 = vmatpush1.msra.mxu0 %v62
    %763 = vmatprep.subr.mxu0 %v67
    %764 = vmatpush1.msra.mxu0 %v66
    %765 = vmatprep.subr.mxu0 %v71
    %766 = vmatpush1.msra.mxu0 %v70
    %767 = vmatprep.subr.mxu0 %v75
    %768 = vmatpush1.msra.mxu0 %v74
    %769 = vmatprep.subr.mxu0 %v79
    %770 = vmatpush1.msra.mxu0 %v78
    %771 = vmatprep.subr.mxu0 %v83
    %772 = vmatpush1.msra.mxu0 %v82
    %773 = vmatprep.subr.mxu0 %v87
    %774 = vmatpush1.msra.mxu0 %v86
    %775 = vmatprep.subr.mxu0 %v91
    %776 = vmatpush1.msra.mxu0 %v90
    %777 = vmatprep.subr.mxu0 %v95
    %778 = vmatpush1.msra.mxu0 %v94
    %779 = vmatprep.subr.mxu0 %v99
    %780 = vmatpush1.msra.mxu0 %v98
    %781 = vmatprep.subr.mxu0 %v103
    %782 = vmatpush1.msra.mxu0 %v102
    %783 = vmatprep.subr.mxu0 %v107
    %784 = vmatpush1.msra.mxu0 %v106
    %785 = vmatprep.subr.mxu0 %v111
    %786 = vmatpush1.msra.mxu0 %v110
    %787 = vmatprep.subr.mxu0 %v115
    %788 = vmatpush1.msra.mxu0 %v114
    %789 = vmatprep.subr.mxu0 %v119
    %790 = vmatpush1.msra.mxu0 %v118
    %791 = vmatprep.subr.mxu0 0.0
    %792 = vmatpush1.msra.mxu0 0.0
    %793 = vmatprep.subr.mxu0 0.0
    %794 = vmatpush1.msra.mxu0 0.0
    %795 = vmatprep.subr.mxu0 0.0
    %796 = vmatpush1.msra.mxu0 0.0
    %797 = vmatprep.subr.mxu0 0.0
    %798 = vmatpush1.msra.mxu0 0.0
    %799 = vmatprep.subr.mxu0 0.0
    %800 = vmatpush1.msra.mxu0 0.0
    %801 = vmatprep.subr.mxu0 0.0
    %802 = vmatpush1.msra.mxu0 0.0
    %803 = vmatprep.subr.mxu0 0.0
    %804 = vmatpush1.msra.mxu0 0.0
    %805 = vmatprep.subr.mxu0 0.0
    %806 = vmatpush1.msra.mxu0 0.0
    %807 = vmatprep.subr.mxu0 0.0
    %808 = vmatpush1.msra.mxu0 0.0
    %809 = vmatprep.subr.mxu0 0.0
    %810 = vmatpush1.msra.mxu0 0.0
    %811 = vmatprep.subr.mxu0 0.0
    %812 = vmatpush1.msra.mxu0 0.0
    %813 = vmatprep.subr.mxu0 0.0
    %814 = vmatpush1.msra.mxu0 0.0
    %815 = vmatprep.subr.mxu0 0.0
    %816 = vmatpush1.msra.mxu0 0.0
    %817 = vmatprep.subr.mxu0 0.0
    %818 = vmatpush1.msra.mxu0 0.0
    %819 = vmatprep.subr.mxu0 0.0
    %820 = vmatpush1.msra.mxu0 0.0
    %821 = vmatprep.subr.mxu0 0.0
    %822 = vmatpush1.msra.mxu0 0.0
    %823 = vmatprep.mubr.f32.mxu0 0.0
    %824 = vmatmul.mubr.f32.gmra.mrb[0].mxu0 %v678
    %v825 = vpop.f32.mrb[0].mxu0
    %v826 = vadd.f32 0.0, %v825
    %v827 = vpop.f32.mrb[0].mxu0
    %v828 = vadd.f32 0.0, %v827
    %829 = vdwg.mxu0
    %v830 = vadd.f32 %v684, %v755
    %v831 = vadd.f32 %v685, %v757
    %v832 = vadd.f32 %v686, %v826
    %v833 = vadd.f32 %v687, %v828
    %v834 = vxor.u32 %v830, 2147483648
    %v835 = vmul.f32 %v834, 1.442695
    %v836 = vpow.pop %v835
    %v837 = vadd.f32 %v836, 1.0
    %v838 = vrcp.pop %v837
    %v839 = vmul.f32 1.0, %v838
    %v840 = vxor.u32 %v831, 2147483648
    %v841 = vmul.f32 %v840, 1.442695
    %v842 = vpow.pop %v841
    %v843 = vadd.f32 %v842, 1.0
    %v844 = vrcp.pop %v843
    %v845 = vmul.f32 1.0, %v844
    %v846 = vtanh.pop %v832
    %v847 = vxor.u32 %v833, 2147483648
    %v848 = vmul.f32 %v847, 1.442695
    %v849 = vpow.pop %v848
    %v850 = vadd.f32 %v849, 1.0
    %v851 = vrcp.pop %v850
    %v852 = vmul.f32 1.0, %v851
    %v853 = vmul.f32 %v845, %v676
    %v854 = vmul.f32 %v839, %v846
    %v855 = vadd.f32 %v853, %v854
    %v856 = vtanh.pop %v855
    %v857 = vmul.f32 %v852, %v856
    %s858 = scalar_lea.vmem [#allocation5], 128
    %v859 = vld [vmem:[%s858] sm:$0xff]
    %v860 = vld [vmem:[%s858 + $0x8] sm:$0xff]
    %v861 = vld [vmem:[%s858 + $0x10] sm:$0xff]
    %v862 = vld [vmem:[%s858 + $0x18] sm:$0xff]
    %v863 = vadd.f32 %v859, %v130
    %v864 = vadd.f32 %v860, %v134
    %v865 = vadd.f32 %v861, %v138
    %v866 = vadd.f32 %v862, %v142
    %867 = vmatprep.subr.mxu0 %v57
    %868 = vmatpush1.msra.mxu0 %v56
    %869 = vmatprep.subr.mxu0 %v61
    %870 = vmatpush1.msra.mxu0 %v60
    %871 = vmatprep.subr.mxu0 %v65
    %872 = vmatpush1.msra.mxu0 %v64
    %873 = vmatprep.subr.mxu0 %v69
    %874 = vmatpush1.msra.mxu0 %v68
    %875 = vmatprep.subr.mxu0 %v73
    %876 = vmatpush1.msra.mxu0 %v72
    %877 = vmatprep.subr.mxu0 %v77
    %878 = vmatpush1.msra.mxu0 %v76
    %879 = vmatprep.subr.mxu0 %v81
    %880 = vmatpush1.msra.mxu0 %v80
    %881 = vmatprep.subr.mxu0 %v85
    %882 = vmatpush1.msra.mxu0 %v84
    %883 = vmatprep.subr.mxu0 %v89
    %884 = vmatpush1.msra.mxu0 %v88
    %885 = vmatprep.subr.mxu0 %v93
    %886 = vmatpush1.msra.mxu0 %v92
    %887 = vmatprep.subr.mxu0 %v97
    %888 = vmatpush1.msra.mxu0 %v96
    %889 = vmatprep.subr.mxu0 %v101
    %890 = vmatpush1.msra.mxu0 %v100
    %891 = vmatprep.subr.mxu0 %v105
    %892 = vmatpush1.msra.mxu0 %v104
    %893 = vmatprep.subr.mxu0 %v109
    %894 = vmatpush1.msra.mxu0 %v108
    %895 = vmatprep.subr.mxu0 %v113
    %896 = vmatpush1.msra.mxu0 %v112
    %897 = vmatprep.subr.mxu0 %v117
    %898 = vmatpush1.msra.mxu0 %v116
    %899 = vmatprep.subr.mxu0 0.0
    %900 = vmatpush1.msra.mxu0 0.0
    %901 = vmatprep.subr.mxu0 0.0
    %902 = vmatpush1.msra.mxu0 0.0
    %903 = vmatprep.subr.mxu0 0.0
    %904 = vmatpush1.msra.mxu0 0.0
    %905 = vmatprep.subr.mxu0 0.0
    %906 = vmatpush1.msra.mxu0 0.0
    %907 = vmatprep.subr.mxu0 0.0
    %908 = vmatpush1.msra.mxu0 0.0
    %909 = vmatprep.subr.mxu0 0.0
    %910 = vmatpush1.msra.mxu0 0.0
    %911 = vmatprep.subr.mxu0 0.0
    %912 = vmatpush1.msra.mxu0 0.0
    %913 = vmatprep.subr.mxu0 0.0
    %914 = vmatpush1.msra.mxu0 0.0
    %915 = vmatprep.subr.mxu0 0.0
    %916 = vmatpush1.msra.mxu0 0.0
    %917 = vmatprep.subr.mxu0 0.0
    %918 = vmatpush1.msra.mxu0 0.0
    %919 = vmatprep.subr.mxu0 0.0
    %920 = vmatpush1.msra.mxu0 0.0
    %921 = vmatprep.subr.mxu0 0.0
    %922 = vmatpush1.msra.mxu0 0.0
    %923 = vmatprep.subr.mxu0 0.0
    %924 = vmatpush1.msra.mxu0 0.0
    %925 = vmatprep.subr.mxu0 0.0
    %926 = vmatpush1.msra.mxu0 0.0
    %927 = vmatprep.subr.mxu0 0.0
    %928 = vmatpush1.msra.mxu0 0.0
    %929 = vmatprep.subr.mxu0 0.0
    %930 = vmatpush1.msra.mxu0 0.0
    %931 = vmatprep.mubr.f32.mxu0 0.0
    %932 = vmatmul.mubr.f32.gmra.mrb[0].mxu0 %v857
    %v933 = vpop.f32.mrb[0].mxu0
    %v934 = vadd.f32 0.0, %v933
    %v935 = vpop.f32.mrb[0].mxu0
    %v936 = vadd.f32 0.0, %v935
    %937 = vdwg.mxu0
    %938 = vmatprep.subr.mxu0 %v59
    %939 = vmatpush1.msra.mxu0 %v58
    %940 = vmatprep.subr.mxu0 %v63
    %941 = vmatpush1.msra.mxu0 %v62
    %942 = vmatprep.subr.mxu0 %v67
    %943 = vmatpush1.msra.mxu0 %v66
    %944 = vmatprep.subr.mxu0 %v71
    %945 = vmatpush1.msra.mxu0 %v70
    %946 = vmatprep.subr.mxu0 %v75
    %947 = vmatpush1.msra.mxu0 %v74
    %948 = vmatprep.subr.mxu0 %v79
    %949 = vmatpush1.msra.mxu0 %v78
    %950 = vmatprep.subr.mxu0 %v83
    %951 = vmatpush1.msra.mxu0 %v82
    %952 = vmatprep.subr.mxu0 %v87
    %953 = vmatpush1.msra.mxu0 %v86
    %954 = vmatprep.subr.mxu0 %v91
    %955 = vmatpush1.msra.mxu0 %v90
    %956 = vmatprep.subr.mxu0 %v95
    %957 = vmatpush1.msra.mxu0 %v94
    %958 = vmatprep.subr.mxu0 %v99
    %959 = vmatpush1.msra.mxu0 %v98
    %960 = vmatprep.subr.mxu0 %v103
    %961 = vmatpush1.msra.mxu0 %v102
    %962 = vmatprep.subr.mxu0 %v107
    %963 = vmatpush1.msra.mxu0 %v106
    %964 = vmatprep.subr.mxu0 %v111
    %965 = vmatpush1.msra.mxu0 %v110
    %966 = vmatprep.subr.mxu0 %v115
    %967 = vmatpush1.msra.mxu0 %v114
    %968 = vmatprep.subr.mxu0 %v119
    %969 = vmatpush1.msra.mxu0 %v118
    %970 = vmatprep.subr.mxu0 0.0
    %971 = vmatpush1.msra.mxu0 0.0
    %972 = vmatprep.subr.mxu0 0.0
    %973 = vmatpush1.msra.mxu0 0.0
    %974 = vmatprep.subr.mxu0 0.0
    %975 = vmatpush1.msra.mxu0 0.0
    %976 = vmatprep.subr.mxu0 0.0
    %977 = vmatpush1.msra.mxu0 0.0
    %978 = vmatprep.subr.mxu0 0.0
    %979 = vmatpush1.msra.mxu0 0.0
    %980 = vmatprep.subr.mxu0 0.0
    %981 = vmatpush1.msra.mxu0 0.0
    %982 = vmatprep.subr.mxu0 0.0
    %983 = vmatpush1.msra.mxu0 0.0
    %984 = vmatprep.subr.mxu0 0.0
    %985 = vmatpush1.msra.mxu0 0.0
    %986 = vmatprep.subr.mxu0 0.0
    %987 = vmatpush1.msra.mxu0 0.0
    %988 = vmatprep.subr.mxu0 0.0
    %989 = vmatpush1.msra.mxu0 0.0
    %990 = vmatprep.subr.mxu0 0.0
    %991 = vmatpush1.msra.mxu0 0.0
    %992 = vmatprep.subr.mxu0 0.0
    %993 = vmatpush1.msra.mxu0 0.0
    %994 = vmatprep.subr.mxu0 0.0
    %995 = vmatpush1.msra.mxu0 0.0
    %996 = vmatprep.subr.mxu0 0.0
    %997 = vmatpush1.msra.mxu0 0.0
    %998 = vmatprep.subr.mxu0 0.0
    %999 = vmatpush1.msra.mxu0 0.0
    %1000 = vmatprep.subr.mxu0 0.0
    %1001 = vmatpush1.msra.mxu0 0.0
    %1002 = vmatprep.mubr.f32.mxu0 0.0
    %1003 = vmatmul.mubr.f32.gmra.mrb[0].mxu0 %v857
    %v1004 = vpop.f32.mrb[0].mxu0
    %v1005 = vadd.f32 0.0, %v1004
    %v1006 = vpop.f32.mrb[0].mxu0
    %v1007 = vadd.f32 0.0, %v1006
    %1008 = vdwg.mxu0
    %v1009 = vadd.f32 %v863, %v934
    %v1010 = vadd.f32 %v864, %v936
    %v1011 = vadd.f32 %v865, %v1005
    %v1012 = vadd.f32 %v866, %v1007
    %v1013 = vxor.u32 %v1009, 2147483648
    %v1014 = vmul.f32 %v1013, 1.442695
    %v1015 = vpow.pop %v1014
    %v1016 = vadd.f32 %v1015, 1.0
    %v1017 = vrcp.pop %v1016
    %v1018 = vmul.f32 1.0, %v1017
    %v1019 = vxor.u32 %v1010, 2147483648
    %v1020 = vmul.f32 %v1019, 1.442695
    %v1021 = vpow.pop %v1020
    %v1022 = vadd.f32 %v1021, 1.0
    %v1023 = vrcp.pop %v1022
    %v1024 = vmul.f32 1.0, %v1023
    %v1025 = vtanh.pop %v1011
    %v1026 = vxor.u32 %v1012, 2147483648
    %v1027 = vmul.f32 %v1026, 1.442695
    %v1028 = vpow.pop %v1027
    %v1029 = vadd.f32 %v1028, 1.0
    %v1030 = vrcp.pop %v1029
    %v1031 = vmul.f32 1.0, %v1030
    %v1032 = vmul.f32 %v1024, %v855
    %v1033 = vmul.f32 %v1018, %v1025
    %v1034 = vadd.f32 %v1032, %v1033
    %v1035 = vtanh.pop %v1034
    %v1036 = vmul.f32 %v1031, %v1035
    %s1037 = scalar_lea.vmem [#allocation5], 160
    %v1038 = vld [vmem:[%s1037] sm:$0xff]
    %v1039 = vld [vmem:[%s1037 + $0x8] sm:$0xff]
    %v1040 = vld [vmem:[%s1037 + $0x10] sm:$0xff]
    %v1041 = vld [vmem:[%s1037 + $0x18] sm:$0xff]
    %v1042 = vadd.f32 %v1038, %v130
    %v1043 = vadd.f32 %v1039, %v134
    %v1044 = vadd.f32 %v1040, %v138
    %v1045 = vadd.f32 %v1041, %v142
    %1046 = vmatprep.subr.mxu0 %v57
    %1047 = vmatpush1.msra.mxu0 %v56
    %1048 = vmatprep.subr.mxu0 %v61
    %1049 = vmatpush1.msra.mxu0 %v60
    %1050 = vmatprep.subr.mxu0 %v65
    %1051 = vmatpush1.msra.mxu0 %v64
    %1052 = vmatprep.subr.mxu0 %v69
    %1053 = vmatpush1.msra.mxu0 %v68
    %1054 = vmatprep.subr.mxu0 %v73
    %1055 = vmatpush1.msra.mxu0 %v72
    %1056 = vmatprep.subr.mxu0 %v77
    %1057 = vmatpush1.msra.mxu0 %v76
    %1058 = vmatprep.subr.mxu0 %v81
    %1059 = vmatpush1.msra.mxu0 %v80
    %1060 = vmatprep.subr.mxu0 %v85
    %1061 = vmatpush1.msra.mxu0 %v84
    %1062 = vmatprep.subr.mxu0 %v89
    %1063 = vmatpush1.msra.mxu0 %v88
    %1064 = vmatprep.subr.mxu0 %v93
    %1065 = vmatpush1.msra.mxu0 %v92
    %1066 = vmatprep.subr.mxu0 %v97
    %1067 = vmatpush1.msra.mxu0 %v96
    %1068 = vmatprep.subr.mxu0 %v101
    %1069 = vmatpush1.msra.mxu0 %v100
    %1070 = vmatprep.subr.mxu0 %v105
    %1071 = vmatpush1.msra.mxu0 %v104
    %1072 = vmatprep.subr.mxu0 %v109
    %1073 = vmatpush1.msra.mxu0 %v108
    %1074 = vmatprep.subr.mxu0 %v113
    %1075 = vmatpush1.msra.mxu0 %v112
    %1076 = vmatprep.subr.mxu0 %v117
    %1077 = vmatpush1.msra.mxu0 %v116
    %1078 = vmatprep.subr.mxu0 0.0
    %1079 = vmatpush1.msra.mxu0 0.0
    %1080 = vmatprep.subr.mxu0 0.0
    %1081 = vmatpush1.msra.mxu0 0.0
    %1082 = vmatprep.subr.mxu0 0.0
    %1083 = vmatpush1.msra.mxu0 0.0
    %1084 = vmatprep.subr.mxu0 0.0
    %1085 = vmatpush1.msra.mxu0 0.0
    %1086 = vmatprep.subr.mxu0 0.0
    %1087 = vmatpush1.msra.mxu0 0.0
    %1088 = vmatprep.subr.mxu0 0.0
    %1089 = vmatpush1.msra.mxu0 0.0
    %1090 = vmatprep.subr.mxu0 0.0
    %1091 = vmatpush1.msra.mxu0 0.0
    %1092 = vmatprep.subr.mxu0 0.0
    %1093 = vmatpush1.msra.mxu0 0.0
    %1094 = vmatprep.subr.mxu0 0.0
    %1095 = vmatpush1.msra.mxu0 0.0
    %1096 = vmatprep.subr.mxu0 0.0
    %1097 = vmatpush1.msra.mxu0 0.0
    %1098 = vmatprep.subr.mxu0 0.0
    %1099 = vmatpush1.msra.mxu0 0.0
    %1100 = vmatprep.subr.mxu0 0.0
    %1101 = vmatpush1.msra.mxu0 0.0
    %1102 = vmatprep.subr.mxu0 0.0
    %1103 = vmatpush1.msra.mxu0 0.0
    %1104 = vmatprep.subr.mxu0 0.0
    %1105 = vmatpush1.msra.mxu0 0.0
    %1106 = vmatprep.subr.mxu0 0.0
    %1107 = vmatpush1.msra.mxu0 0.0
    %1108 = vmatprep.subr.mxu0 0.0
    %1109 = vmatpush1.msra.mxu0 0.0
    %1110 = vmatprep.mubr.f32.mxu0 0.0
    %1111 = vmatmul.mubr.f32.gmra.mrb[0].mxu0 %v1036
    %v1112 = vpop.f32.mrb[0].mxu0
    %v1113 = vadd.f32 0.0, %v1112
    %v1114 = vpop.f32.mrb[0].mxu0
    %v1115 = vadd.f32 0.0, %v1114
    %1116 = vdwg.mxu0
    %1117 = vmatprep.subr.mxu0 %v59
    %1118 = vmatpush1.msra.mxu0 %v58
    %1119 = vmatprep.subr.mxu0 %v63
    %1120 = vmatpush1.msra.mxu0 %v62
    %1121 = vmatprep.subr.mxu0 %v67
    %1122 = vmatpush1.msra.mxu0 %v66
    %1123 = vmatprep.subr.mxu0 %v71
    %1124 = vmatpush1.msra.mxu0 %v70
    %1125 = vmatprep.subr.mxu0 %v75
    %1126 = vmatpush1.msra.mxu0 %v74
    %1127 = vmatprep.subr.mxu0 %v79
    %1128 = vmatpush1.msra.mxu0 %v78
    %1129 = vmatprep.subr.mxu0 %v83
    %1130 = vmatpush1.msra.mxu0 %v82
    %1131 = vmatprep.subr.mxu0 %v87
    %1132 = vmatpush1.msra.mxu0 %v86
    %1133 = vmatprep.subr.mxu0 %v91
    %1134 = vmatpush1.msra.mxu0 %v90
    %1135 = vmatprep.subr.mxu0 %v95
    %1136 = vmatpush1.msra.mxu0 %v94
    %1137 = vmatprep.subr.mxu0 %v99
    %1138 = vmatpush1.msra.mxu0 %v98
    %1139 = vmatprep.subr.mxu0 %v103
    %1140 = vmatpush1.msra.mxu0 %v102
    %1141 = vmatprep.subr.mxu0 %v107
    %1142 = vmatpush1.msra.mxu0 %v106
    %1143 = vmatprep.subr.mxu0 %v111
    %1144 = vmatpush1.msra.mxu0 %v110
    %1145 = vmatprep.subr.mxu0 %v115
    %1146 = vmatpush1.msra.mxu0 %v114
    %1147 = vmatprep.subr.mxu0 %v119
    %1148 = vmatpush1.msra.mxu0 %v118
    %1149 = vmatprep.subr.mxu0 0.0
    %1150 = vmatpush1.msra.mxu0 0.0
    %1151 = vmatprep.subr.mxu0 0.0
    %1152 = vmatpush1.msra.mxu0 0.0
    %1153 = vmatprep.subr.mxu0 0.0
    %1154 = vmatpush1.msra.mxu0 0.0
    %1155 = vmatprep.subr.mxu0 0.0
    %1156 = vmatpush1.msra.mxu0 0.0
    %1157 = vmatprep.subr.mxu0 0.0
    %1158 = vmatpush1.msra.mxu0 0.0
    %1159 = vmatprep.subr.mxu0 0.0
    %1160 = vmatpush1.msra.mxu0 0.0
    %1161 = vmatprep.subr.mxu0 0.0
    %1162 = vmatpush1.msra.mxu0 0.0
    %1163 = vmatprep.subr.mxu0 0.0
    %1164 = vmatpush1.msra.mxu0 0.0
    %1165 = vmatprep.subr.mxu0 0.0
    %1166 = vmatpush1.msra.mxu0 0.0
    %1167 = vmatprep.subr.mxu0 0.0
    %1168 = vmatpush1.msra.mxu0 0.0
    %1169 = vmatprep.subr.mxu0 0.0
    %1170 = vmatpush1.msra.mxu0 0.0
    %1171 = vmatprep.subr.mxu0 0.0
    %1172 = vmatpush1.msra.mxu0 0.0
    %1173 = vmatprep.subr.mxu0 0.0
    %1174 = vmatpush1.msra.mxu0 0.0
    %1175 = vmatprep.subr.mxu0 0.0
    %1176 = vmatpush1.msra.mxu0 0.0
    %1177 = vmatprep.subr.mxu0 0.0
    %1178 = vmatpush1.msra.mxu0 0.0
    %1179 = vmatprep.subr.mxu0 0.0
    %1180 = vmatpush1.msra.mxu0 0.0
    %1181 = vmatprep.mubr.f32.mxu0 0.0
    %1182 = vmatmul.mubr.f32.gmra.mrb[0].mxu0 %v1036
    %v1183 = vpop.f32.mrb[0].mxu0
    %v1184 = vadd.f32 0.0, %v1183
    %v1185 = vpop.f32.mrb[0].mxu0
    %v1186 = vadd.f32 0.0, %v1185
    %1187 = vdwg.mxu0
    %v1188 = vadd.f32 %v1042, %v1113
    %v1189 = vadd.f32 %v1043, %v1115
    %v1190 = vadd.f32 %v1044, %v1184
    %v1191 = vadd.f32 %v1045, %v1186
    %v1192 = vxor.u32 %v1188, 2147483648
    %v1193 = vmul.f32 %v1192, 1.442695
    %v1194 = vpow.pop %v1193
    %v1195 = vadd.f32 %v1194, 1.0
    %v1196 = vrcp.pop %v1195
    %v1197 = vmul.f32 1.0, %v1196
    %v1198 = vxor.u32 %v1189, 2147483648
    %v1199 = vmul.f32 %v1198, 1.442695
    %v1200 = vpow.pop %v1199
    %v1201 = vadd.f32 %v1200, 1.0
    %v1202 = vrcp.pop %v1201
    %v1203 = vmul.f32 1.0, %v1202
    %v1204 = vtanh.pop %v1190
    %v1205 = vxor.u32 %v1191, 2147483648
    %v1206 = vmul.f32 %v1205, 1.442695
    %v1207 = vpow.pop %v1206
    %v1208 = vadd.f32 %v1207, 1.0
    %v1209 = vrcp.pop %v1208
    %v1210 = vmul.f32 1.0, %v1209
    %v1211 = vmul.f32 %v1203, %v1034
    %v1212 = vmul.f32 %v1197, %v1204
    %v1213 = vadd.f32 %v1211, %v1212
    %v1214 = vtanh.pop %v1213
    %v1215 = vmul.f32 %v1210, %v1214
    %s1216 = scalar_lea.vmem [#allocation5], 192
    %v1217 = vld [vmem:[%s1216] sm:$0xff]
    %v1218 = vld [vmem:[%s1216 + $0x8] sm:$0xff]
    %v1219 = vld [vmem:[%s1216 + $0x10] sm:$0xff]
    %v1220 = vld [vmem:[%s1216 + $0x18] sm:$0xff]
    %v1221 = vadd.f32 %v1217, %v130
    %v1222 = vadd.f32 %v1218, %v134
    %v1223 = vadd.f32 %v1219, %v138
    %v1224 = vadd.f32 %v1220, %v142
    %1225 = vmatprep.subr.mxu0 %v57
    %1226 = vmatpush1.msra.mxu0 %v56
    %1227 = vmatprep.subr.mxu0 %v61
    %1228 = vmatpush1.msra.mxu0 %v60
    %1229 = vmatprep.subr.mxu0 %v65
    %1230 = vmatpush1.msra.mxu0 %v64
    %1231 = vmatprep.subr.mxu0 %v69
    %1232 = vmatpush1.msra.mxu0 %v68
    %1233 = vmatprep.subr.mxu0 %v73
    %1234 = vmatpush1.msra.mxu0 %v72
    %1235 = vmatprep.subr.mxu0 %v77
    %1236 = vmatpush1.msra.mxu0 %v76
    %1237 = vmatprep.subr.mxu0 %v81
    %1238 = vmatpush1.msra.mxu0 %v80
    %1239 = vmatprep.subr.mxu0 %v85
    %1240 = vmatpush1.msra.mxu0 %v84
    %1241 = vmatprep.subr.mxu0 %v89
    %1242 = vmatpush1.msra.mxu0 %v88
    %1243 = vmatprep.subr.mxu0 %v93
    %1244 = vmatpush1.msra.mxu0 %v92
    %1245 = vmatprep.subr.mxu0 %v97
    %1246 = vmatpush1.msra.mxu0 %v96
    %1247 = vmatprep.subr.mxu0 %v101
    %1248 = vmatpush1.msra.mxu0 %v100
    %1249 = vmatprep.subr.mxu0 %v105
    %1250 = vmatpush1.msra.mxu0 %v104
    %1251 = vmatprep.subr.mxu0 %v109
    %1252 = vmatpush1.msra.mxu0 %v108
    %1253 = vmatprep.subr.mxu0 %v113
    %1254 = vmatpush1.msra.mxu0 %v112
    %1255 = vmatprep.subr.mxu0 %v117
    %1256 = vmatpush1.msra.mxu0 %v116
    %1257 = vmatprep.subr.mxu0 0.0
    %1258 = vmatpush1.msra.mxu0 0.0
    %1259 = vmatprep.subr.mxu0 0.0
    %1260 = vmatpush1.msra.mxu0 0.0
    %1261 = vmatprep.subr.mxu0 0.0
    %1262 = vmatpush1.msra.mxu0 0.0
    %1263 = vmatprep.subr.mxu0 0.0
    %1264 = vmatpush1.msra.mxu0 0.0
    %1265 = vmatprep.subr.mxu0 0.0
    %1266 = vmatpush1.msra.mxu0 0.0
    %1267 = vmatprep.subr.mxu0 0.0
    %1268 = vmatpush1.msra.mxu0 0.0
    %1269 = vmatprep.subr.mxu0 0.0
    %1270 = vmatpush1.msra.mxu0 0.0
    %1271 = vmatprep.subr.mxu0 0.0
    %1272 = vmatpush1.msra.mxu0 0.0
    %1273 = vmatprep.subr.mxu0 0.0
    %1274 = vmatpush1.msra.mxu0 0.0
    %1275 = vmatprep.subr.mxu0 0.0
    %1276 = vmatpush1.msra.mxu0 0.0
    %1277 = vmatprep.subr.mxu0 0.0
    %1278 = vmatpush1.msra.mxu0 0.0
    %1279 = vmatprep.subr.mxu0 0.0
    %1280 = vmatpush1.msra.mxu0 0.0
    %1281 = vmatprep.subr.mxu0 0.0
    %1282 = vmatpush1.msra.mxu0 0.0
    %1283 = vmatprep.subr.mxu0 0.0
    %1284 = vmatpush1.msra.mxu0 0.0
    %1285 = vmatprep.subr.mxu0 0.0
    %1286 = vmatpush1.msra.mxu0 0.0
    %1287 = vmatprep.subr.mxu0 0.0
    %1288 = vmatpush1.msra.mxu0 0.0
    %1289 = vmatprep.mubr.f32.mxu0 0.0
    %1290 = vmatmul.mubr.f32.gmra.mrb[0].mxu0 %v1215
    %v1291 = vpop.f32.mrb[0].mxu0
    %v1292 = vadd.f32 0.0, %v1291
    %v1293 = vpop.f32.mrb[0].mxu0
    %v1294 = vadd.f32 0.0, %v1293
    %1295 = vdwg.mxu0
    %1296 = vmatprep.subr.mxu0 %v59
    %1297 = vmatpush1.msra.mxu0 %v58
    %1298 = vmatprep.subr.mxu0 %v63
    %1299 = vmatpush1.msra.mxu0 %v62
    %1300 = vmatprep.subr.mxu0 %v67
    %1301 = vmatpush1.msra.mxu0 %v66
    %1302 = vmatprep.subr.mxu0 %v71
    %1303 = vmatpush1.msra.mxu0 %v70
    %1304 = vmatprep.subr.mxu0 %v75
    %1305 = vmatpush1.msra.mxu0 %v74
    %1306 = vmatprep.subr.mxu0 %v79
    %1307 = vmatpush1.msra.mxu0 %v78
    %1308 = vmatprep.subr.mxu0 %v83
    %1309 = vmatpush1.msra.mxu0 %v82
    %1310 = vmatprep.subr.mxu0 %v87
    %1311 = vmatpush1.msra.mxu0 %v86
    %1312 = vmatprep.subr.mxu0 %v91
    %1313 = vmatpush1.msra.mxu0 %v90
    %1314 = vmatprep.subr.mxu0 %v95
    %1315 = vmatpush1.msra.mxu0 %v94
    %1316 = vmatprep.subr.mxu0 %v99
    %1317 = vmatpush1.msra.mxu0 %v98
    %1318 = vmatprep.subr.mxu0 %v103
    %1319 = vmatpush1.msra.mxu0 %v102
    %1320 = vmatprep.subr.mxu0 %v107
    %1321 = vmatpush1.msra.mxu0 %v106
    %1322 = vmatprep.subr.mxu0 %v111
    %1323 = vmatpush1.msra.mxu0 %v110
    %1324 = vmatprep.subr.mxu0 %v115
    %1325 = vmatpush1.msra.mxu0 %v114
    %1326 = vmatprep.subr.mxu0 %v119
    %1327 = vmatpush1.msra.mxu0 %v118
    %1328 = vmatprep.subr.mxu0 0.0
    %1329 = vmatpush1.msra.mxu0 0.0
    %1330 = vmatprep.subr.mxu0 0.0
    %1331 = vmatpush1.msra.mxu0 0.0
    %1332 = vmatprep.subr.mxu0 0.0
    %1333 = vmatpush1.msra.mxu0 0.0
    %1334 = vmatprep.subr.mxu0 0.0
    %1335 = vmatpush1.msra.mxu0 0.0
    %1336 = vmatprep.subr.mxu0 0.0
    %1337 = vmatpush1.msra.mxu0 0.0
    %1338 = vmatprep.subr.mxu0 0.0
    %1339 = vmatpush1.msra.mxu0 0.0
    %1340 = vmatprep.subr.mxu0 0.0
    %1341 = vmatpush1.msra.mxu0 0.0
    %1342 = vmatprep.subr.mxu0 0.0
    %1343 = vmatpush1.msra.mxu0 0.0
    %1344 = vmatprep.subr.mxu0 0.0
    %1345 = vmatpush1.msra.mxu0 0.0
    %1346 = vmatprep.subr.mxu0 0.0
    %1347 = vmatpush1.msra.mxu0 0.0
    %1348 = vmatprep.subr.mxu0 0.0
    %1349 = vmatpush1.msra.mxu0 0.0
    %1350 = vmatprep.subr.mxu0 0.0
    %1351 = vmatpush1.msra.mxu0 0.0
    %1352 = vmatprep.subr.mxu0 0.0
    %1353 = vmatpush1.msra.mxu0 0.0
    %1354 = vmatprep.subr.mxu0 0.0
    %1355 = vmatpush1.msra.mxu0 0.0
    %1356 = vmatprep.subr.mxu0 0.0
    %1357 = vmatpush1.msra.mxu0 0.0
    %1358 = vmatprep.subr.mxu0 0.0
    %1359 = vmatpush1.msra.mxu0 0.0
    %1360 = vmatprep.mubr.f32.mxu0 0.0
    %1361 = vmatmul.mubr.f32.gmra.mrb[0].mxu0 %v1215
    %v1362 = vpop.f32.mrb[0].mxu0
    %v1363 = vadd.f32 0.0, %v1362
    %v1364 = vpop.f32.mrb[0].mxu0
    %v1365 = vadd.f32 0.0, %v1364
    %1366 = vdwg.mxu0
    %v1367 = vadd.f32 %v1221, %v1292
    %v1368 = vadd.f32 %v1222, %v1294
    %v1369 = vadd.f32 %v1223, %v1363
    %v1370 = vadd.f32 %v1224, %v1365
    %v1371 = vxor.u32 %v1367, 2147483648
    %v1372 = vmul.f32 %v1371, 1.442695
    %v1373 = vpow.pop %v1372
    %v1374 = vadd.f32 %v1373, 1.0
    %v1375 = vrcp.pop %v1374
    %v1376 = vmul.f32 1.0, %v1375
    %v1377 = vxor.u32 %v1368, 2147483648
    %v1378 = vmul.f32 %v1377, 1.442695
    %v1379 = vpow.pop %v1378
    %v1380 = vadd.f32 %v1379, 1.0
    %v1381 = vrcp.pop %v1380
    %v1382 = vmul.f32 1.0, %v1381
    %v1383 = vtanh.pop %v1369
    %v1384 = vxor.u32 %v1370, 2147483648
    %v1385 = vmul.f32 %v1384, 1.442695
    %v1386 = vpow.pop %v1385
    %v1387 = vadd.f32 %v1386, 1.0
    %v1388 = vrcp.pop %v1387
    %v1389 = vmul.f32 1.0, %v1388
    %v1390 = vmul.f32 %v1382, %v1213
    %v1391 = vmul.f32 %v1376, %v1383
    %v1392 = vadd.f32 %v1390, %v1391
    %v1393 = vtanh.pop %v1392
    %v1394 = vmul.f32 %v1389, %v1393
    %s1395 = scalar_lea.vmem [#allocation5], 224
    %v1396 = vld [vmem:[%s1395] sm:$0xff]
    %v1397 = vld [vmem:[%s1395 + $0x8] sm:$0xff]
    %v1398 = vld [vmem:[%s1395 + $0x10] sm:$0xff]
    %v1399 = vld [vmem:[%s1395 + $0x18] sm:$0xff]
    %v1400 = vadd.f32 %v1396, %v130
    %v1401 = vadd.f32 %v1397, %v134
    %v1402 = vadd.f32 %v1398, %v138
    %v1403 = vadd.f32 %v1399, %v142
    %1404 = vmatprep.subr.mxu0 %v57
    %1405 = vmatpush1.msra.mxu0 %v56
    %1406 = vmatprep.subr.mxu0 %v61
    %1407 = vmatpush1.msra.mxu0 %v60
    %1408 = vmatprep.subr.mxu0 %v65
    %1409 = vmatpush1.msra.mxu0 %v64
    %1410 = vmatprep.subr.mxu0 %v69
    %1411 = vmatpush1.msra.mxu0 %v68
    %1412 = vmatprep.subr.mxu0 %v73
    %1413 = vmatpush1.msra.mxu0 %v72
    %1414 = vmatprep.subr.mxu0 %v77
    %1415 = vmatpush1.msra.mxu0 %v76
    %1416 = vmatprep.subr.mxu0 %v81
    %1417 = vmatpush1.msra.mxu0 %v80
    %1418 = vmatprep.subr.mxu0 %v85
    %1419 = vmatpush1.msra.mxu0 %v84
    %1420 = vmatprep.subr.mxu0 %v89
    %1421 = vmatpush1.msra.mxu0 %v88
    %1422 = vmatprep.subr.mxu0 %v93
    %1423 = vmatpush1.msra.mxu0 %v92
    %1424 = vmatprep.subr.mxu0 %v97
    %1425 = vmatpush1.msra.mxu0 %v96
    %1426 = vmatprep.subr.mxu0 %v101
    %1427 = vmatpush1.msra.mxu0 %v100
    %1428 = vmatprep.subr.mxu0 %v105
    %1429 = vmatpush1.msra.mxu0 %v104
    %1430 = vmatprep.subr.mxu0 %v109
    %1431 = vmatpush1.msra.mxu0 %v108
    %1432 = vmatprep.subr.mxu0 %v113
    %1433 = vmatpush1.msra.mxu0 %v112
    %1434 = vmatprep.subr.mxu0 %v117
    %1435 = vmatpush1.msra.mxu0 %v116
    %1436 = vmatprep.subr.mxu0 0.0
    %1437 = vmatpush1.msra.mxu0 0.0
    %1438 = vmatprep.subr.mxu0 0.0
    %1439 = vmatpush1.msra.mxu0 0.0
    %1440 = vmatprep.subr.mxu0 0.0
    %1441 = vmatpush1.msra.mxu0 0.0
    %1442 = vmatprep.subr.mxu0 0.0
    %1443 = vmatpush1.msra.mxu0 0.0
    %1444 = vmatprep.subr.mxu0 0.0
    %1445 = vmatpush1.msra.mxu0 0.0
    %1446 = vmatprep.subr.mxu0 0.0
    %1447 = vmatpush1.msra.mxu0 0.0
    %1448 = vmatprep.subr.mxu0 0.0
    %1449 = vmatpush1.msra.mxu0 0.0
    %1450 = vmatprep.subr.mxu0 0.0
    %1451 = vmatpush1.msra.mxu0 0.0
    %1452 = vmatprep.subr.mxu0 0.0
    %1453 = vmatpush1.msra.mxu0 0.0
    %1454 = vmatprep.subr.mxu0 0.0
    %1455 = vmatpush1.msra.mxu0 0.0
    %1456 = vmatprep.subr.mxu0 0.0
    %1457 = vmatpush1.msra.mxu0 0.0
    %1458 = vmatprep.subr.mxu0 0.0
    %1459 = vmatpush1.msra.mxu0 0.0
    %1460 = vmatprep.subr.mxu0 0.0
    %1461 = vmatpush1.msra.mxu0 0.0
    %1462 = vmatprep.subr.mxu0 0.0
    %1463 = vmatpush1.msra.mxu0 0.0
    %1464 = vmatprep.subr.mxu0 0.0
    %1465 = vmatpush1.msra.mxu0 0.0
    %1466 = vmatprep.subr.mxu0 0.0
    %1467 = vmatpush1.msra.mxu0 0.0
    %1468 = vmatprep.mubr.f32.mxu0 0.0
    %1469 = vmatmul.mubr.f32.gmra.mrb[0].mxu0 %v1394
    %v1470 = vpop.f32.mrb[0].mxu0
    %v1471 = vadd.f32 0.0, %v1470
    %v1472 = vpop.f32.mrb[0].mxu0
    %v1473 = vadd.f32 0.0, %v1472
    %1474 = vdwg.mxu0
    %1475 = vmatprep.subr.mxu0 %v59
    %1476 = vmatpush1.msra.mxu0 %v58
    %1477 = vmatprep.subr.mxu0 %v63
    %1478 = vmatpush1.msra.mxu0 %v62
    %1479 = vmatprep.subr.mxu0 %v67
    %1480 = vmatpush1.msra.mxu0 %v66
    %1481 = vmatprep.subr.mxu0 %v71
    %1482 = vmatpush1.msra.mxu0 %v70
    %1483 = vmatprep.subr.mxu0 %v75
    %1484 = vmatpush1.msra.mxu0 %v74
    %1485 = vmatprep.subr.mxu0 %v79
    %1486 = vmatpush1.msra.mxu0 %v78
    %1487 = vmatprep.subr.mxu0 %v83
    %1488 = vmatpush1.msra.mxu0 %v82
    %1489 = vmatprep.subr.mxu0 %v87
    %1490 = vmatpush1.msra.mxu0 %v86
    %1491 = vmatprep.subr.mxu0 %v91
    %1492 = vmatpush1.msra.mxu0 %v90
    %1493 = vmatprep.subr.mxu0 %v95
    %1494 = vmatpush1.msra.mxu0 %v94
    %1495 = vmatprep.subr.mxu0 %v99
    %1496 = vmatpush1.msra.mxu0 %v98
    %1497 = vmatprep.subr.mxu0 %v103
    %1498 = vmatpush1.msra.mxu0 %v102
    %1499 = vmatprep.subr.mxu0 %v107
    %1500 = vmatpush1.msra.mxu0 %v106
    %1501 = vmatprep.subr.mxu0 %v111
    %1502 = vmatpush1.msra.mxu0 %v110
    %1503 = vmatprep.subr.mxu0 %v115
    %1504 = vmatpush1.msra.mxu0 %v114
    %1505 = vmatprep.subr.mxu0 %v119
    %1506 = vmatpush1.msra.mxu0 %v118
    %1507 = vmatprep.subr.mxu0 0.0
    %1508 = vmatpush1.msra.mxu0 0.0
    %1509 = vmatprep.subr.mxu0 0.0
    %1510 = vmatpush1.msra.mxu0 0.0
    %1511 = vmatprep.subr.mxu0 0.0
    %1512 = vmatpush1.msra.mxu0 0.0
    %1513 = vmatprep.subr.mxu0 0.0
    %1514 = vmatpush1.msra.mxu0 0.0
    %1515 = vmatprep.subr.mxu0 0.0
    %1516 = vmatpush1.msra.mxu0 0.0
    %1517 = vmatprep.subr.mxu0 0.0
    %1518 = vmatpush1.msra.mxu0 0.0
    %1519 = vmatprep.subr.mxu0 0.0
    %1520 = vmatpush1.msra.mxu0 0.0
    %1521 = vmatprep.subr.mxu0 0.0
    %1522 = vmatpush1.msra.mxu0 0.0
    %1523 = vmatprep.subr.mxu0 0.0
    %1524 = vmatpush1.msra.mxu0 0.0
    %1525 = vmatprep.subr.mxu0 0.0
    %1526 = vmatpush1.msra.mxu0 0.0
    %1527 = vmatprep.subr.mxu0 0.0
    %1528 = vmatpush1.msra.mxu0 0.0
    %1529 = vmatprep.subr.mxu0 0.0
    %1530 = vmatpush1.msra.mxu0 0.0
    %1531 = vmatprep.subr.mxu0 0.0
    %1532 = vmatpush1.msra.mxu0 0.0
    %1533 = vmatprep.subr.mxu0 0.0
    %1534 = vmatpush1.msra.mxu0 0.0
    %1535 = vmatprep.subr.mxu0 0.0
    %1536 = vmatpush1.msra.mxu0 0.0
    %1537 = vmatprep.subr.mxu0 0.0
    %1538 = vmatpush1.msra.mxu0 0.0
    %1539 = vmatprep.mubr.f32.mxu0 0.0
    %1540 = vmatmul.mubr.f32.gmra.mrb[0].mxu0 %v1394
    %v1541 = vpop.f32.mrb[0].mxu0
    %v1542 = vadd.f32 0.0, %v1541
    %v1543 = vpop.f32.mrb[0].mxu0
    %v1544 = vadd.f32 0.0, %v1543
    %1545 = vdwg.mxu0
    %v1546 = vadd.f32 %v1400, %v1471
    %v1547 = vadd.f32 %v1401, %v1473
    %v1548 = vadd.f32 %v1402, %v1542
    %v1549 = vadd.f32 %v1403, %v1544
    %v1550 = vxor.u32 %v1546, 2147483648
    %v1551 = vmul.f32 %v1550, 1.442695
    %v1552 = vpow.pop %v1551
    %v1553 = vadd.f32 %v1552, 1.0
    %v1554 = vrcp.pop %v1553
    %v1555 = vmul.f32 1.0, %v1554
    %v1556 = vxor.u32 %v1547, 2147483648
    %v1557 = vmul.f32 %v1556, 1.442695
    %v1558 = vpow.pop %v1557
    %v1559 = vadd.f32 %v1558, 1.0
    %v1560 = vrcp.pop %v1559
    %v1561 = vmul.f32 1.0, %v1560
    %v1562 = vtanh.pop %v1548
    %v1563 = vxor.u32 %v1549, 2147483648
    %v1564 = vmul.f32 %v1563, 1.442695
    %v1565 = vpow.pop %v1564
    %v1566 = vadd.f32 %v1565, 1.0
    %v1567 = vrcp.pop %v1566
    %v1568 = vmul.f32 1.0, %v1567
    %v1569 = vmul.f32 %v1561, %v1392
    %v1570 = vmul.f32 %v1555, %v1562
    %v1571 = vadd.f32 %v1569, %v1570
    %v1572 = vtanh.pop %v1571
    %v1573 = vmul.f32 %v1568, %v1572
    %1574 = vst [vmem:[#allocation2] sm:$0xff] %v1573
    %1575 = vst [vmem:[#allocation3] sm:$0xff] %v1571
    // Predicated region
    $region34: #{tpu_custom_call.1} parent=1 // pred_check
      %p1576 = pneg %p49
    $region35: #{tpu_custom_call.1} parent=1 // pred_check_branch
      %1578 = sbr.rel (%p1576) target = $region37
    $region36: #{tpu_custom_call.1} parent=1 // pred_region
      %v1579 = vld [vmem:[%s3] sm:$0x1]
      %v1581 = vlaneseq
      %v1582 = vshrl.u32 %v1581, 7
      %v1583 = vsub.s32 0, %v1582
      %v1584 = vrot.slane %v1579, %v1583
      %v1586 = vmul.f32 %v1573, %v1584
      %1587 = vadd.xlane.f32.xlu0 %v1586
      %v1588 = vpop.xlane.xlu0 %1587
      %s1589 = sld [smem:[#allocation4]]
      %v1590 = vstv %s1589
      %v1591 = vadd.f32 %v1588, %v1590
      %v1592 = vxor.u32 %v1591, 2147483648
      %v1593 = vmul.f32 %v1592, 1.442695
      %v1594 = vpow.pop %v1593
      %v1595 = vadd.f32 %v1594, 1.0
      %v1596 = vrcp.pop %v1595
      %v1597 = vmul.f32 1.0, %v1596
      %vm1598 = vcmask 7168
      %1599 = vst.msk [vmem:[%s5] sm:$0xff] %vm1598, %v1597
    $region37: #{tpu_custom_call.1} parent=1 // pred_fallthru
      _
    // Predicated region
    $region38: #{tpu_custom_call.1} parent=1 // pred_check
      _
    $region39: #{tpu_custom_call.1} parent=1 // pred_check_branch
      %1601 = sbr.rel (0) target = $region41
    $region40: #{tpu_custom_call.1} parent=1 // pred_region
      _
    $region41: #{tpu_custom_call.1} parent=1 // pred_fallthru
      _
    // Predicated region
    $region42: #{tpu_custom_call.1} parent=1 // pred_check
      _
    $region43: #{tpu_custom_call.1} parent=1 // pred_check_branch
      %1603 = sbr.rel (0) target = $region45
    $region44: #{tpu_custom_call.1} parent=1 // pred_region
      _
    $region45: #{tpu_custom_call.1} parent=1 // pred_fallthru
      _
    %1604 = vsyncpa [#allocation6], 1
    %1605 = vsyncpa [#allocation8], 1

</llo_original>
